<compile_context>
chip_gen: v7x
topology: tpu7x:2x2x1
jax: 0.10.0
libtpu: 0.0.40
codegen_flags: <defaults>
</compile_context>

<pallas_src>
import jax
import jax.numpy as jnp
from jax import lax
from jax.experimental import pallas as pl
from jax.experimental.pallas import tpu as pltpu

BN_EPS = 1e-5
LN_EPS = 1e-5
BN_SCALE = float(1.0 / (1.0 + BN_EPS) ** 0.5)   # eval-mode BN with default stats

HEADS = 4      # assumption: 4 heads, dim_head = d_model // 4 (same as previous version)
PATCH = 2      # assumption: 2x2 patch unfolding (standard MobileViT)
NEG_INF = -1e30

# keys of the arrays actually handed to the kernel (conv weight stacks pre-concatenated)
_PRE_KEYS = ("w_exp", "w_dw", "w_pw", "emb_w", "emb_b", "w_local3c", "w_local1")
_TX_KEYS = ("ln1_g", "ln1_b", "w_qkv", "w_out", "b_out",
            "ln2_g", "ln2_b", "w_ff1", "b_ff1", "w_ff2", "b_ff2")
_POST_KEYS = ("w_fuse1", "b_fuse1", "w_fuse2c", "b_fuse2", "w_final", "b_final")
_OFFSETS = tuple((kh - 1, kw - 1) for kh in range(3) for kw in range(3))


# ----------------------------------------------------------------------------
# in-kernel helpers
# ----------------------------------------------------------------------------

def _silu(v):
    return v * jax.nn.sigmoid(v)


def _layer_norm_cf(x, gamma, beta):
    """LayerNorm over the channel axis of a channels-first [D, T] tile.

    The D-reduction is done with a ones-matmul (MXU) instead of a sublane reduce.
    """
    d = x.shape[0]
    ones = jnp.full((1, d), 1.0 / d, jnp.float32)
    mean = jnp.dot(ones, x, preferred_element_type=jnp.float32)          # [1, T]
    xc = x - mean
    var = jnp.dot(ones, xc * xc, preferred_element_type=jnp.float32)     # [1, T]
    xn = xc * lax.rsqrt(var + LN_EPS)
    return xn * gamma + beta                                             # [D,1] broadcasts


# ----------------------------------------------------------------------------
# the fused STAGE4 kernel
# ----------------------------------------------------------------------------

def _build_stage4_kernel(*, n_layers, heads, wo, t_cols):
    n_pre, n_tx, n_post = len(_PRE_KEYS), len(_TX_KEYS), len(_POST_KEYS)
    n_params = n_pre + n_layers * n_tx + n_post

    def kernel(x_taps_ref, emb_ref, bsel_ref, tapmask_ref, attn_bias_ref, *refs):
        assert len(refs) == n_params + 1
        o_ref = refs[-1]
        prefs = list(refs[:-1])
        pre = dict(zip(_PRE_KEYS, prefs[:n_pre]))
        tx = []
        off = n_pre
        for _ in range(n_layers):
            tx.append(dict(zip(_TX_KEYS, prefs[off:off + n_tx])))
            off += n_tx
        post = dict(zip(_POST_KEYS, prefs[off:off + n_post]))
        f32 = jnp.float32

        def tap(v, t):
            """t-th tap of a 3x3 / stride-1 / pad-1 conv for v:[C,T] in (b,y,x) order."""
            dy, dx = _OFFSETS[t]
            delta = dy * wo + dx
            if delta != 0:
                v = pltpu.roll(v, (-delta) % t_cols, 1)   # lane rotation (XLU)
            return v * tapmask_ref[t]                     # zero the out-of-bounds columns

        # ------------------- InvertedResidual (stride 2) -------------------
        # expand 1x1 + SiLU over all 9 pre-extracted stride-2 taps at once (one wide
        # matmul over 9*T lanes), then the depthwise stride-2 conv is a per-tap scale
        # + sum over lane-aligned 128-column slices of that result.
        w_exp = pre["w_exp"][...]                          # [hid, cin]  (BN folded)
        w_pw = pre["w_pw"][...]                            # [mc1, hid]  (BN folded)
        hw = _silu(jnp.dot(w_exp, x_taps_ref[...],
                           preferred_element_type=f32))    # [hid, 9*T]
        acc = jnp.zeros((w_exp.shape[0], t_cols), f32)
        for t in range(9):
            acc = acc + pre["w_dw"][t] * hw[:, t * t_cols:(t + 1) * t_cols]
        h1 = jnp.dot(w_pw, _silu(acc), preferred_element_type=f32)        # [mc1, T]
        # time embedding: SiLU(emb) -> Linear -> broadcast over spatial positions
        e = lax.dot_general(pre["emb_w"][...], _silu(emb_ref[...]),
                            (((1,), (1,)), ((), ())),
                            preferred_element_type=f32) + pre["emb_b"][...]   # [mc1, B]
        h1 = h1 + jnp.dot(e, bsel_ref[...], preferred_element_type=f32)       # [mc1, T]
        # stride=2 and in!=out channels -> no residual connection

        # ------------------- MobileViT: local representation -------------------
        # 3x3 conv = ONE matmul over the 9 shifted taps concatenated along sublanes.
        h1_taps = [tap(h1, t) for t in range(9)]           # 9 x [mc1, T], reused below
        loc = jnp.dot(pre["w_local3c"][...],                # [mc1, 9*mc1]
                      jnp.concatenate(h1_taps, axis=0),     # [9*mc1, T]
                      preferred_element_type=f32)
        loc = _silu(loc)
        tok = _silu(jnp.dot(pre["w_local1"][...], loc, preferred_element_type=f32))  # [d,T]
        d = tok.shape[0]

        # Patch unfold 'b d (h ph)(w pw) -> b (ph pw)(h w) d' == group tokens by
        # (batch, y%PATCH, x%PATCH); realised purely as the attention group mask below.
        attn_bias = attn_bias_ref[...]                     # [T, T]: 0 in-group / -1e30

        # ------------------- transformer layers -------------------
        for lp in tx:
            w_qkv = lp["w_qkv"][...]
            d_inner = w_qkv.shape[0] // 3
            dh = d_inner // heads
            scale = float(dh) ** -0.5
            xn = _layer_norm_cf(tok, lp["ln1_g"][...], lp["ln1_b"][...])
            qkv = jnp.dot(w_qkv, xn, preferred_element_type=f32)          # [3*di, T]
            q = qkv[0:d_inner]
            k = qkv[d_inner:2 * d_inner]
            v = qkv[2 * d_inner:3 * d_inner]
            w_out = lp["w_out"][...]
            proj = jnp.zeros((d, t_cols), f32)
            for h in range(heads):                         # all groups at once per head
                sl = slice(h * dh, (h + 1) * dh)
                s = lax.dot_general(q[sl], k[sl], (((0,), (0,)), ((), ())),
                                    preferred_element_type=f32) * scale   # [T, T]
                s = s + attn_bias
                s = s - jnp.max(s, axis=-1, keepdims=True)
                p = jnp.exp(s)
                p = p * pl.reciprocal(jnp.sum(p, axis=-1, keepdims=True), approx=True)
                oh = lax.dot_general(v[sl], p, (((1,), (1,)), ((), ())),
                                     preferred_element_type=f32)          # [dh, T]
                proj = proj + jnp.dot(w_out[:, sl], oh, preferred_element_type=f32)
            tok = tok + proj + lp["b_out"][...]
            # feed-forward (PreNorm)
            xn = _layer_norm_cf(tok, lp["ln2_g"][...], lp["ln2_b"][...])
            ff = jnp.dot(lp["w_ff1"][...], xn, preferred_element_type=f32) + lp["b_ff1"][...]
            ff = jax.nn.gelu(ff)   # TODO(synk): tanh-approx GELU (exact erf GELU in torch)
            ff = jnp.dot(lp["w_ff2"][...], ff, preferred_element_type=f32) + lp["b_ff2"][...]
            tok = tok + ff
        # patch fold-back is a no-op: the column ordering was never changed.

        # ------------------- fusion convs + final 1x1 -------------------
        f1 = (jnp.dot(post["w_fuse1"][...], tok, preferred_element_type=f32)
              + post["b_fuse1"][...])                                      # [mc1, T]
        # 3x3 conv over concat([h1, f1]): ONE matmul over 18 concatenated taps
        # (the 9 taps of h1 are reused from the local-rep conv above).
        f1_taps = [tap(f1, t) for t in range(9)]
        cat2 = jnp.concatenate(h1_taps + f1_taps, axis=0)                  # [18*mc1, T]
        out2 = (jnp.dot(post["w_fuse2c"][...], cat2, preferred_element_type=f32)
                + post["b_fuse2"][...])                                    # [mc2, T]
        y = (jnp.dot(post["w_final"][...], out2, preferred_element_type=f32)
             + post["b_final"][...])                                       # [outc, T]
        o_ref[...] = y.astype(o_ref.dtype)                                 # lane-dense store

    return kernel


# ----------------------------------------------------------------------------
# wrapper (thin trace-time glue feeding the single fused kernel)
# ----------------------------------------------------------------------------

def _kernel_param_list(params):
    """Flatten params for the kernel; pre-concatenate the 3x3 conv weight stacks."""
    mc1 = params["w_pw"].shape[0]
    mc2 = params["b_fuse2"].shape[0]
    # sum_t W[t] @ tap_t  ==  [W[0] | ... | W[8]] @ vstack(tap_t)
    w_local3c = jnp.transpose(params["w_local3"], (1, 0, 2)).reshape(mc1, 9 * mc1)
    w_fuse2c = jnp.concatenate(
        [jnp.transpose(params["w_fuse2x"], (1, 0, 2)).reshape(mc2, 9 * mc1),
         jnp.transpose(params["w_fuse2f"], (1, 0, 2)).reshape(mc2, 9 * mc1)], axis=1)
    flat = [params["w_exp"], params["w_dw"], params["w_pw"],
            params["emb_w"], params["emb_b"], w_local3c, params["w_local1"]]
    for lp in params["tx_layers"]:
        flat += [lp[k] for k in _TX_KEYS]
    flat += [params["w_fuse1"], params["b_fuse1"], w_fuse2c,
             params["b_fuse2"], params["w_final"], params["b_final"]]
    return flat


def stage4_forward(params, x_nchw, time_emb):
    B, cin, H, W = x_nchw.shape
    assert H % 2 == 0 and W % 2 == 0
    Ho, Wo = H // 2, W // 2
    assert Ho % PATCH == 0 and Wo % PATCH == 0
    T = B * Ho * Wo
    outc = params["w_final"].shape[0]
    n_layers = len(params["tx_layers"])

    # stride-2 depthwise taps of the raw input (extraction commutes with the pointwise
    # expand conv + SiLU); column order is (tap, b, y, x) -> one wide [cin, 9*T] slab so
    # the in-kernel expand conv is a single 9*T-lane matmul.
    xp = jnp.pad(x_nchw, ((0, 0), (0, 0), (1, 1), (1, 1)))
    taps = jnp.stack([xp[:, :, kh:kh + 2 * Ho - 1:2, kw:kw + 2 * Wo - 1:2]
                      for kh in range(3) for kw in range(3)], axis=0)      # [9,B,Cin,Ho,Wo]
    x_taps = taps.transpose(2, 0, 1, 3, 4).reshape(cin, 9 * T)             # [Cin, 9*T]

    col = jnp.arange(T, dtype=jnp.int32)
    bb = col // (Ho * Wo)
    yy = (col // Wo) % Ho
    xx = col % Wo
    # one-hot batch selector: broadcasts the per-batch time embedding over spatial cols
    bsel = (bb[None, :] == jnp.arange(B, dtype=jnp.int32)[:, None]).astype(jnp.float32)
    # validity masks for the 9 taps of a 3x3 / stride-1 / pad-1 conv
    tapmask = jnp.stack(
        [(((yy + dy) >= 0) & ((yy + dy) < Ho) & ((xx + dx) >= 0) & ((xx + dx) < Wo)
          ).astype(jnp.float32)[None, :]
         for (dy, dx) in _OFFSETS], axis=0)                                # [9, 1, T]
    # block attention bias: tokens attend only within the same (batch, patch-parity)
    # group -- this realises MobileViT's 'b d (h ph)(w pw) -> b (ph pw)(h w) d' unfold.
    gid = (bb * (PATCH * PATCH) + (yy % PATCH) * PATCH + (xx % PATCH)).astype(jnp.int32)
    attn_bias = jnp.where(gid[:, None] == gid[None, :], 0.0, NEG_INF).astype(jnp.float32)

    flat = _kernel_param_list(params)
    kernel = _build_stage4_kernel(n_layers=n_layers, heads=HEADS, wo=Wo, t_cols=T)
    n_inputs = 5 + len(flat)

    out = pl.pallas_call(
        kernel,
        out_shape=jax.ShapeDtypeStruct((outc, T), jnp.float32),
        in_specs=[pl.BlockSpec(memory_space=pltpu.MemorySpace.VMEM)] * n_inputs,
        out_specs=pl.BlockSpec(memory_space=pltpu.MemorySpace.VMEM),
        compiler_params=pltpu.CompilerParams(vmem_limit_bytes=32 * 1024 * 1024),
    )(x_taps, time_emb, bsel, tapmask, attn_bias, *flat)

    # [outc, B*Ho*Wo] -> NCHW
    return out.reshape(outc, B, Ho, Wo).transpose(1, 0, 2, 3)


# ----------------------------------------------------------------------------
# deterministic parameter init (channels-first layouts, BN folded)
# ----------------------------------------------------------------------------

def init_params(key, cfg):
    keys = iter(jax.random.split(key, 32 + 16 * cfg["layers"]))

    def nrm(shape, fan_in):
        return (jax.random.normal(next(keys), shape, jnp.float32)
                / jnp.sqrt(jnp.float32(fan_in)))

    cin = cfg["input_channels"]
    hid = int(round(cin * cfg["expand_ratio"]))
    mc1, mc2 = cfg["middle_channel1"], cfg["middle_channel2"]
    outc, embc = cfg["output_channels"], cfg["emb_channels"]
    d, layers = cfg["d_model"], cfg["layers"]
    mlp = 4 * d
    d_inner = d                      # heads * dim_head with dim_head = d // HEADS

    tx_layers = []
    for _ in range(layers):
        tx_layers.append(dict(
            ln1_g=jnp.ones((d, 1), jnp.float32), ln1_b=jnp.zeros((d, 1), jnp.float32),
            w_qkv=nrm((3 * d_inner, d), d),
            w_out=nrm((d, d_inner), d_inner), b_out=nrm((d, 1), d),
            ln2_g=jnp.ones((d, 1), jnp.float32), ln2_b=jnp.zeros((d, 1), jnp.float32),
            w_ff1=nrm((mlp, d), d), b_ff1=nrm((mlp, 1), mlp),
            w_ff2=nrm((d, mlp), mlp), b_ff2=nrm((d, 1), d),
        ))

    return dict(
        # InvertedResidual (BN folded as eval-mode 1/sqrt(1+eps) scale)
        w_exp=nrm((hid, cin), cin) * BN_SCALE,
        w_dw=nrm((9, hid, 1), 9) * BN_SCALE,
        w_pw=nrm((mc1, hid), hid) * BN_SCALE,
        emb_w=nrm((mc1, embc), embc), emb_b=nrm((mc1, 1), mc1),
        # MobileViT local representation
        w_local3=nrm((9, mc1, mc1), 9 * mc1) * BN_SCALE,
        w_local1=nrm((d, mc1), mc1) * BN_SCALE,
        tx_layers=tx_layers,
        # fusion convs (3x3 over concat([inv_out, fused]) split into two weight stacks)
        w_fuse1=nrm((mc1, d), d), b_fuse1=nrm((mc1, 1), mc1),
        w_fuse2x=nrm((9, mc2, mc1), 9 * 2 * mc1),
        w_fuse2f=nrm((9, mc2, mc1), 9 * 2 * mc1),
        b_fuse2=nrm((mc2, 1), mc2),
        # final 1x1 conv
        w_final=nrm((outc, mc2), mc2), b_final=nrm((outc, 1), outc),
    )


# ----------------------------------------------------------------------------
if __name__ == "__main__":
    cfg = dict(input_channels=4, middle_channel1=8, middle_channel2=8,
               output_channels=8, expand_ratio=2, emb_channels=8,
               d_model=16, layers=1)

    key = jax.random.PRNGKey(0)
    pkey, xkey, ekey = jax.random.split(key, 3)

    params = init_params(pkey, cfg)
    x = jax.random.normal(xkey, (2, cfg["input_channels"], 16, 16), jnp.float32)
    time_embed = jax.random.normal(ekey, (2, cfg["emb_channels"]), jnp.float32)

    fwd = jax.jit(stage4_forward)
    y = fwd(params, x, time_embed)
    jax.block_until_ready(y)

    assert y.shape == (2, cfg["output_channels"], 8, 8), y.shape
    assert bool(jnp.all(jnp.isfinite(y)))
    print("KERNEL_OK")
</pallas_src>

<mosaic_0001>
module attributes {stable_mosaic.version = 11 : i64} {
  func.func @kernel(%arg0: memref<4x1152xf32, #tpu.memory_space<vmem>>, %arg1: memref<2x8xf32, #tpu.memory_space<vmem>>, %arg2: memref<2x128xf32, #tpu.memory_space<vmem>>, %arg3: memref<9x1x128xf32, #tpu.memory_space<vmem>>, %arg4: memref<128x128xf32, #tpu.memory_space<vmem>>, %arg5: memref<8x4xf32, #tpu.memory_space<vmem>>, %arg6: memref<9x8x1xf32, #tpu.memory_space<vmem>>, %arg7: memref<8x8xf32, #tpu.memory_space<vmem>>, %arg8: memref<8x8xf32, #tpu.memory_space<vmem>>, %arg9: memref<8x1xf32, #tpu.memory_space<vmem>>, %arg10: memref<8x72xf32, #tpu.memory_space<vmem>>, %arg11: memref<16x8xf32, #tpu.memory_space<vmem>>, %arg12: memref<16x1xf32, #tpu.memory_space<vmem>>, %arg13: memref<16x1xf32, #tpu.memory_space<vmem>>, %arg14: memref<48x16xf32, #tpu.memory_space<vmem>>, %arg15: memref<16x16xf32, #tpu.memory_space<vmem>>, %arg16: memref<16x1xf32, #tpu.memory_space<vmem>>, %arg17: memref<16x1xf32, #tpu.memory_space<vmem>>, %arg18: memref<16x1xf32, #tpu.memory_space<vmem>>, %arg19: memref<64x16xf32, #tpu.memory_space<vmem>>, %arg20: memref<64x1xf32, #tpu.memory_space<vmem>>, %arg21: memref<16x64xf32, #tpu.memory_space<vmem>>, %arg22: memref<16x1xf32, #tpu.memory_space<vmem>>, %arg23: memref<8x16xf32, #tpu.memory_space<vmem>>, %arg24: memref<8x1xf32, #tpu.memory_space<vmem>>, %arg25: memref<8x144xf32, #tpu.memory_space<vmem>>, %arg26: memref<8x1xf32, #tpu.memory_space<vmem>>, %arg27: memref<8x8xf32, #tpu.memory_space<vmem>>, %arg28: memref<8x1xf32, #tpu.memory_space<vmem>>, %arg29: memref<8x128xf32, #tpu.memory_space<vmem>>) attributes {dimension_semantics = [], scalar_prefetch = 0 : i64, scratch_operands = 0 : i64, tpu.core_type = #tpu.core_type<tc>} {
    %c0 = arith.constant 0 : index
    %c0_0 = arith.constant 0 : index
    %0 = vector.load %arg5[%c0, %c0_0] : memref<8x4xf32, #tpu.memory_space<vmem>>, vector<8x4xf32>
    %c0_1 = arith.constant 0 : index
    %c0_2 = arith.constant 0 : index
    %1 = vector.load %arg7[%c0_1, %c0_2] : memref<8x8xf32, #tpu.memory_space<vmem>>, vector<8x8xf32>
    %c0_3 = arith.constant 0 : index
    %c0_4 = arith.constant 0 : index
    %2 = vector.load %arg0[%c0_3, %c0_4] : memref<4x1152xf32, #tpu.memory_space<vmem>>, vector<4x1152xf32>
    %cst = arith.constant dense<0.000000e+00> : vector<8x1152xf32>
    %3 = tpu.matmul %0, %2, %cst {dimension_numbers = #tpu.dot_dimension_numbers<[1], [0], [0], [1], [0, 0, 1, 1], [], []>} : vector<8x4xf32>, vector<4x1152xf32>, vector<8x1152xf32> -> vector<8x1152xf32>
    %4 = arith.negf %3 : vector<8x1152xf32>
    %5 = math.exp %4 : vector<8x1152xf32>
    %cst_5 = arith.constant 1.000000e+00 : f32
    %6 = vector.broadcast %cst_5 : f32 to vector<8x1152xf32>
    %7 = arith.addf %6, %5 : vector<8x1152xf32>
    %8 = arith.divf %6, %7 : vector<8x1152xf32>
    %9 = arith.mulf %3, %8 : vector<8x1152xf32>
    %cst_6 = arith.constant 0.000000e+00 : f32
    %10 = vector.broadcast %cst_6 : f32 to vector<8x128xf32>
    %c0_7 = arith.constant 0 : index
    %c0_8 = arith.constant 0 : index
    %c0_9 = arith.constant 0 : index
    %11 = vector.load %arg6[%c0_7, %c0_8, %c0_9] : memref<9x8x1xf32, #tpu.memory_space<vmem>>, vector<1x8x1xf32>
    %12 = vector.shape_cast %11 : vector<1x8x1xf32> to vector<8x1xf32>
    %13 = vector.extract_strided_slice %9 {offsets = [0, 0], sizes = [8, 128], strides = [1, 1]} : vector<8x1152xf32> to vector<8x128xf32>
    %14 = vector.broadcast %12 : vector<8x1xf32> to vector<8x128xf32>
    %15 = arith.mulf %14, %13 : vector<8x128xf32>
    %16 = arith.addf %10, %15 : vector<8x128xf32>
    %c1 = arith.constant 1 : index
    %c0_10 = arith.constant 0 : index
    %c0_11 = arith.constant 0 : index
    %17 = vector.load %arg6[%c1, %c0_10, %c0_11] : memref<9x8x1xf32, #tpu.memory_space<vmem>>, vector<1x8x1xf32>
    %18 = vector.shape_cast %17 : vector<1x8x1xf32> to vector<8x1xf32>
    %19 = vector.extract_strided_slice %9 {offsets = [0, 128], sizes = [8, 128], strides = [1, 1]} : vector<8x1152xf32> to vector<8x128xf32>
    %20 = vector.broadcast %18 : vector<8x1xf32> to vector<8x128xf32>
    %21 = arith.mulf %20, %19 : vector<8x128xf32>
    %22 = arith.addf %16, %21 : vector<8x128xf32>
    %c2 = arith.constant 2 : index
    %c0_12 = arith.constant 0 : index
    %c0_13 = arith.constant 0 : index
    %23 = vector.load %arg6[%c2, %c0_12, %c0_13] : memref<9x8x1xf32, #tpu.memory_space<vmem>>, vector<1x8x1xf32>
    %24 = vector.shape_cast %23 : vector<1x8x1xf32> to vector<8x1xf32>
    %25 = vector.extract_strided_slice %9 {offsets = [0, 256], sizes = [8, 128], strides = [1, 1]} : vector<8x1152xf32> to vector<8x128xf32>
    %26 = vector.broadcast %24 : vector<8x1xf32> to vector<8x128xf32>
    %27 = arith.mulf %26, %25 : vector<8x128xf32>
    %28 = arith.addf %22, %27 : vector<8x128xf32>
    %c3 = arith.constant 3 : index
    %c0_14 = arith.constant 0 : index
    %c0_15 = arith.constant 0 : index
    %29 = vector.load %arg6[%c3, %c0_14, %c0_15] : memref<9x8x1xf32, #tpu.memory_space<vmem>>, vector<1x8x1xf32>
    %30 = vector.shape_cast %29 : vector<1x8x1xf32> to vector<8x1xf32>
    %31 = vector.extract_strided_slice %9 {offsets = [0, 384], sizes = [8, 128], strides = [1, 1]} : vector<8x1152xf32> to vector<8x128xf32>
    %32 = vector.broadcast %30 : vector<8x1xf32> to vector<8x128xf32>
    %33 = arith.mulf %32, %31 : vector<8x128xf32>
    %34 = arith.addf %28, %33 : vector<8x128xf32>
    %c4 = arith.constant 4 : index
    %c0_16 = arith.constant 0 : index
    %c0_17 = arith.constant 0 : index
    %35 = vector.load %arg6[%c4, %c0_16, %c0_17] : memref<9x8x1xf32, #tpu.memory_space<vmem>>, vector<1x8x1xf32>
    %36 = vector.shape_cast %35 : vector<1x8x1xf32> to vector<8x1xf32>
    %37 = vector.extract_strided_slice %9 {offsets = [0, 512], sizes = [8, 128], strides = [1, 1]} : vector<8x1152xf32> to vector<8x128xf32>
    %38 = vector.broadcast %36 : vector<8x1xf32> to vector<8x128xf32>
    %39 = arith.mulf %38, %37 : vector<8x128xf32>
    %40 = arith.addf %34, %39 : vector<8x128xf32>
    %c5 = arith.constant 5 : index
    %c0_18 = arith.constant 0 : index
    %c0_19 = arith.constant 0 : index
    %41 = vector.load %arg6[%c5, %c0_18, %c0_19] : memref<9x8x1xf32, #tpu.memory_space<vmem>>, vector<1x8x1xf32>
    %42 = vector.shape_cast %41 : vector<1x8x1xf32> to vector<8x1xf32>
    %43 = vector.extract_strided_slice %9 {offsets = [0, 640], sizes = [8, 128], strides = [1, 1]} : vector<8x1152xf32> to vector<8x128xf32>
    %44 = vector.broadcast %42 : vector<8x1xf32> to vector<8x128xf32>
    %45 = arith.mulf %44, %43 : vector<8x128xf32>
    %46 = arith.addf %40, %45 : vector<8x128xf32>
    %c6 = arith.constant 6 : index
    %c0_20 = arith.constant 0 : index
    %c0_21 = arith.constant 0 : index
    %47 = vector.load %arg6[%c6, %c0_20, %c0_21] : memref<9x8x1xf32, #tpu.memory_space<vmem>>, vector<1x8x1xf32>
    %48 = vector.shape_cast %47 : vector<1x8x1xf32> to vector<8x1xf32>
    %49 = vector.extract_strided_slice %9 {offsets = [0, 768], sizes = [8, 128], strides = [1, 1]} : vector<8x1152xf32> to vector<8x128xf32>
    %50 = vector.broadcast %48 : vector<8x1xf32> to vector<8x128xf32>
    %51 = arith.mulf %50, %49 : vector<8x128xf32>
    %52 = arith.addf %46, %51 : vector<8x128xf32>
    %c7 = arith.constant 7 : index
    %c0_22 = arith.constant 0 : index
    %c0_23 = arith.constant 0 : index
    %53 = vector.load %arg6[%c7, %c0_22, %c0_23] : memref<9x8x1xf32, #tpu.memory_space<vmem>>, vector<1x8x1xf32>
    %54 = vector.shape_cast %53 : vector<1x8x1xf32> to vector<8x1xf32>
    %55 = vector.extract_strided_slice %9 {offsets = [0, 896], sizes = [8, 128], strides = [1, 1]} : vector<8x1152xf32> to vector<8x128xf32>
    %56 = vector.broadcast %54 : vector<8x1xf32> to vector<8x128xf32>
    %57 = arith.mulf %56, %55 : vector<8x128xf32>
    %58 = arith.addf %52, %57 : vector<8x128xf32>
    %c8 = arith.constant 8 : index
    %c0_24 = arith.constant 0 : index
    %c0_25 = arith.constant 0 : index
    %59 = vector.load %arg6[%c8, %c0_24, %c0_25] : memref<9x8x1xf32, #tpu.memory_space<vmem>>, vector<1x8x1xf32>
    %60 = vector.shape_cast %59 : vector<1x8x1xf32> to vector<8x1xf32>
    %61 = vector.extract_strided_slice %9 {offsets = [0, 1024], sizes = [8, 128], strides = [1, 1]} : vector<8x1152xf32> to vector<8x128xf32>
    %62 = vector.broadcast %60 : vector<8x1xf32> to vector<8x128xf32>
    %63 = arith.mulf %62, %61 : vector<8x128xf32>
    %64 = arith.addf %58, %63 : vector<8x128xf32>
    %65 = arith.negf %64 : vector<8x128xf32>
    %66 = math.exp %65 : vector<8x128xf32>
    %cst_26 = arith.constant 1.000000e+00 : f32
    %67 = vector.broadcast %cst_26 : f32 to vector<8x128xf32>
    %68 = arith.addf %67, %66 : vector<8x128xf32>
    %69 = arith.divf %67, %68 : vector<8x128xf32>
    %70 = arith.mulf %64, %69 : vector<8x128xf32>
    %cst_27 = arith.constant dense<0.000000e+00> : vector<8x128xf32>
    %71 = tpu.matmul %1, %70, %cst_27 {dimension_numbers = #tpu.dot_dimension_numbers<[1], [0], [0], [1], [0, 0, 1, 1], [], []>} : vector<8x8xf32>, vector<8x128xf32>, vector<8x128xf32> -> vector<8x128xf32>
    %c0_28 = arith.constant 0 : index
    %c0_29 = arith.constant 0 : index
    %72 = vector.load %arg8[%c0_28, %c0_29] : memref<8x8xf32, #tpu.memory_space<vmem>>, vector<8x8xf32>
    %c0_30 = arith.constant 0 : index
    %c0_31 = arith.constant 0 : index
    %73 = vector.load %arg1[%c0_30, %c0_31] : memref<2x8xf32, #tpu.memory_space<vmem>>, vector<2x8xf32>
    %74 = arith.negf %73 : vector<2x8xf32>
    %75 = math.exp %74 : vector<2x8xf32>
    %cst_32 = arith.constant 1.000000e+00 : f32
    %76 = vector.broadcast %cst_32 : f32 to vector<2x8xf32>
    %77 = arith.addf %76, %75 : vector<2x8xf32>
    %78 = arith.divf %76, %77 : vector<2x8xf32>
    %79 = arith.mulf %73, %78 : vector<2x8xf32>
    %cst_33 = arith.constant dense<0.000000e+00> : vector<8x2xf32>
    %80 = tpu.matmul %72, %79, %cst_33 {dimension_numbers = #tpu.dot_dimension_numbers<[1], [1], [0], [0], [0, 0, 1, 0], [], []>} : vector<8x8xf32>, vector<2x8xf32>, vector<8x2xf32> -> vector<8x2xf32>
    %c0_34 = arith.constant 0 : index
    %c0_35 = arith.constant 0 : index
    %81 = vector.load %arg9[%c0_34, %c0_35] : memref<8x1xf32, #tpu.memory_space<vmem>>, vector<8x1xf32>
    %82 = vector.broadcast %81 : vector<8x1xf32> to vector<8x2xf32>
    %83 = arith.addf %80, %82 : vector<8x2xf32>
    %c0_36 = arith.constant 0 : index
    %c0_37 = arith.constant 0 : index
    %84 = vector.load %arg2[%c0_36, %c0_37] : memref<2x128xf32, #tpu.memory_space<vmem>>, vector<2x128xf32>
    %cst_38 = arith.constant dense<0.000000e+00> : vector<8x128xf32>
    %85 = tpu.matmul %83, %84, %cst_38 {dimension_numbers = #tpu.dot_dimension_numbers<[1], [0], [0], [1], [0, 0, 1, 1], [], []>} : vector<8x2xf32>, vector<2x128xf32>, vector<8x128xf32> -> vector<8x128xf32>
    %86 = arith.addf %71, %85 : vector<8x128xf32>
    %c9_i32 = arith.constant 9 : i32
    %87 = tpu.dynamic_rotate %86 by %c9_i32 dim 1 : vector<8x128xf32>, i32 -> vector<8x128xf32>
    %c0_39 = arith.constant 0 : index
    %c0_40 = arith.constant 0 : index
    %c0_41 = arith.constant 0 : index
    %88 = vector.load %arg3[%c0_39, %c0_40, %c0_41] : memref<9x1x128xf32, #tpu.memory_space<vmem>>, vector<1x1x128xf32>
    %89 = vector.shape_cast %88 : vector<1x1x128xf32> to vector<1x128xf32>
    %90 = vector.broadcast %89 : vector<1x128xf32> to vector<8x128xf32>
    %91 = arith.mulf %87, %90 : vector<8x128xf32>
    %c8_i32 = arith.constant 8 : i32
    %92 = tpu.dynamic_rotate %86 by %c8_i32 dim 1 : vector<8x128xf32>, i32 -> vector<8x128xf32>
    %c1_42 = arith.constant 1 : index
    %c0_43 = arith.constant 0 : index
    %c0_44 = arith.constant 0 : index
    %93 = vector.load %arg3[%c1_42, %c0_43, %c0_44] : memref<9x1x128xf32, #tpu.memory_space<vmem>>, vector<1x1x128xf32>
    %94 = vector.shape_cast %93 : vector<1x1x128xf32> to vector<1x128xf32>
    %95 = vector.broadcast %94 : vector<1x128xf32> to vector<8x128xf32>
    %96 = arith.mulf %92, %95 : vector<8x128xf32>
    %c7_i32 = arith.constant 7 : i32
    %97 = tpu.dynamic_rotate %86 by %c7_i32 dim 1 : vector<8x128xf32>, i32 -> vector<8x128xf32>
    %c2_45 = arith.constant 2 : index
    %c0_46 = arith.constant 0 : index
    %c0_47 = arith.constant 0 : index
    %98 = vector.load %arg3[%c2_45, %c0_46, %c0_47] : memref<9x1x128xf32, #tpu.memory_space<vmem>>, vector<1x1x128xf32>
    %99 = vector.shape_cast %98 : vector<1x1x128xf32> to vector<1x128xf32>
    %100 = vector.broadcast %99 : vector<1x128xf32> to vector<8x128xf32>
    %101 = arith.mulf %97, %100 : vector<8x128xf32>
    %c1_i32 = arith.constant 1 : i32
    %102 = tpu.dynamic_rotate %86 by %c1_i32 dim 1 : vector<8x128xf32>, i32 -> vector<8x128xf32>
    %c3_48 = arith.constant 3 : index
    %c0_49 = arith.constant 0 : index
    %c0_50 = arith.constant 0 : index
    %103 = vector.load %arg3[%c3_48, %c0_49, %c0_50] : memref<9x1x128xf32, #tpu.memory_space<vmem>>, vector<1x1x128xf32>
    %104 = vector.shape_cast %103 : vector<1x1x128xf32> to vector<1x128xf32>
    %105 = vector.broadcast %104 : vector<1x128xf32> to vector<8x128xf32>
    %106 = arith.mulf %102, %105 : vector<8x128xf32>
    %c4_51 = arith.constant 4 : index
    %c0_52 = arith.constant 0 : index
    %c0_53 = arith.constant 0 : index
    %107 = vector.load %arg3[%c4_51, %c0_52, %c0_53] : memref<9x1x128xf32, #tpu.memory_space<vmem>>, vector<1x1x128xf32>
    %108 = vector.shape_cast %107 : vector<1x1x128xf32> to vector<1x128xf32>
    %109 = vector.broadcast %108 : vector<1x128xf32> to vector<8x128xf32>
    %110 = arith.mulf %86, %109 : vector<8x128xf32>
    %c127_i32 = arith.constant 127 : i32
    %111 = tpu.dynamic_rotate %86 by %c127_i32 dim 1 : vector<8x128xf32>, i32 -> vector<8x128xf32>
    %c5_54 = arith.constant 5 : index
    %c0_55 = arith.constant 0 : index
    %c0_56 = arith.constant 0 : index
    %112 = vector.load %arg3[%c5_54, %c0_55, %c0_56] : memref<9x1x128xf32, #tpu.memory_space<vmem>>, vector<1x1x128xf32>
    %113 = vector.shape_cast %112 : vector<1x1x128xf32> to vector<1x128xf32>
    %114 = vector.broadcast %113 : vector<1x128xf32> to vector<8x128xf32>
    %115 = arith.mulf %111, %114 : vector<8x128xf32>
    %c121_i32 = arith.constant 121 : i32
    %116 = tpu.dynamic_rotate %86 by %c121_i32 dim 1 : vector<8x128xf32>, i32 -> vector<8x128xf32>
    %c6_57 = arith.constant 6 : index
    %c0_58 = arith.constant 0 : index
    %c0_59 = arith.constant 0 : index
    %117 = vector.load %arg3[%c6_57, %c0_58, %c0_59] : memref<9x1x128xf32, #tpu.memory_space<vmem>>, vector<1x1x128xf32>
    %118 = vector.shape_cast %117 : vector<1x1x128xf32> to vector<1x128xf32>
    %119 = vector.broadcast %118 : vector<1x128xf32> to vector<8x128xf32>
    %120 = arith.mulf %116, %119 : vector<8x128xf32>
    %c120_i32 = arith.constant 120 : i32
    %121 = tpu.dynamic_rotate %86 by %c120_i32 dim 1 : vector<8x128xf32>, i32 -> vector<8x128xf32>
    %c7_60 = arith.constant 7 : index
    %c0_61 = arith.constant 0 : index
    %c0_62 = arith.constant 0 : index
    %122 = vector.load %arg3[%c7_60, %c0_61, %c0_62] : memref<9x1x128xf32, #tpu.memory_space<vmem>>, vector<1x1x128xf32>
    %123 = vector.shape_cast %122 : vector<1x1x128xf32> to vector<1x128xf32>
    %124 = vector.broadcast %123 : vector<1x128xf32> to vector<8x128xf32>
    %125 = arith.mulf %121, %124 : vector<8x128xf32>
    %c119_i32 = arith.constant 119 : i32
    %126 = tpu.dynamic_rotate %86 by %c119_i32 dim 1 : vector<8x128xf32>, i32 -> vector<8x128xf32>
    %c8_63 = arith.constant 8 : index
    %c0_64 = arith.constant 0 : index
    %c0_65 = arith.constant 0 : index
    %127 = vector.load %arg3[%c8_63, %c0_64, %c0_65] : memref<9x1x128xf32, #tpu.memory_space<vmem>>, vector<1x1x128xf32>
    %128 = vector.shape_cast %127 : vector<1x1x128xf32> to vector<1x128xf32>
    %129 = vector.broadcast %128 : vector<1x128xf32> to vector<8x128xf32>
    %130 = arith.mulf %126, %129 : vector<8x128xf32>
    %c0_66 = arith.constant 0 : index
    %c0_67 = arith.constant 0 : index
    %131 = vector.load %arg10[%c0_66, %c0_67] : memref<8x72xf32, #tpu.memory_space<vmem>>, vector<8x72xf32>
    %132 = tpu.concatenate %91, %96, %101, %106, %110, %115, %120, %125, %130 in 0 : vector<8x128xf32>, vector<8x128xf32>, vector<8x128xf32>, vector<8x128xf32>, vector<8x128xf32>, vector<8x128xf32>, vector<8x128xf32>, vector<8x128xf32>, vector<8x128xf32> -> vector<72x128xf32>
    %cst_68 = arith.constant dense<0.000000e+00> : vector<8x128xf32>
    %133 = tpu.matmul %131, %132, %cst_68 {dimension_numbers = #tpu.dot_dimension_numbers<[1], [0], [0], [1], [0, 0, 1, 1], [], []>} : vector<8x72xf32>, vector<72x128xf32>, vector<8x128xf32> -> vector<8x128xf32>
    %134 = arith.negf %133 : vector<8x128xf32>
    %135 = math.exp %134 : vector<8x128xf32>
    %cst_69 = arith.constant 1.000000e+00 : f32
    %136 = vector.broadcast %cst_69 : f32 to vector<8x128xf32>
    %137 = arith.addf %136, %135 : vector<8x128xf32>
    %138 = arith.divf %136, %137 : vector<8x128xf32>
    %139 = arith.mulf %133, %138 : vector<8x128xf32>
    %c0_70 = arith.constant 0 : index
    %c0_71 = arith.constant 0 : index
    %140 = vector.load %arg11[%c0_70, %c0_71] : memref<16x8xf32, #tpu.memory_space<vmem>>, vector<16x8xf32>
    %cst_72 = arith.constant dense<0.000000e+00> : vector<16x128xf32>
    %141 = tpu.matmul %140, %139, %cst_72 {dimension_numbers = #tpu.dot_dimension_numbers<[1], [0], [0], [1], [0, 0, 1, 1], [], []>} : vector<16x8xf32>, vector<8x128xf32>, vector<16x128xf32> -> vector<16x128xf32>
    %142 = arith.negf %141 : vector<16x128xf32>
    %143 = math.exp %142 : vector<16x128xf32>
    %cst_73 = arith.constant 1.000000e+00 : f32
    %144 = vector.broadcast %cst_73 : f32 to vector<16x128xf32>
    %145 = arith.addf %144, %143 : vector<16x128xf32>
    %146 = arith.divf %144, %145 : vector<16x128xf32>
    %147 = arith.mulf %141, %146 : vector<16x128xf32>
    %c0_74 = arith.constant 0 : index
    %c0_75 = arith.constant 0 : index
    %148 = vector.load %arg4[%c0_74, %c0_75] : memref<128x128xf32, #tpu.memory_space<vmem>>, vector<128x128xf32>
    %c0_76 = arith.constant 0 : index
    %c0_77 = arith.constant 0 : index
    %149 = vector.load %arg14[%c0_76, %c0_77] : memref<48x16xf32, #tpu.memory_space<vmem>>, vector<48x16xf32>
    %c0_78 = arith.constant 0 : index
    %c0_79 = arith.constant 0 : index
    %150 = vector.load %arg12[%c0_78, %c0_79] : memref<16x1xf32, #tpu.memory_space<vmem>>, vector<16x1xf32>
    %c0_80 = arith.constant 0 : index
    %c0_81 = arith.constant 0 : index
    %151 = vector.load %arg13[%c0_80, %c0_81] : memref<16x1xf32, #tpu.memory_space<vmem>>, vector<16x1xf32>
    %cst_82 = arith.constant 6.250000e-02 : f32
    %152 = vector.broadcast %cst_82 : f32 to vector<1x16xf32>
    %cst_83 = arith.constant dense<0.000000e+00> : vector<1x128xf32>
    %153 = tpu.matmul %152, %147, %cst_83 {dimension_numbers = #tpu.dot_dimension_numbers<[1], [0], [0], [1], [0, 0, 1, 1], [], []>} : vector<1x16xf32>, vector<16x128xf32>, vector<1x128xf32> -> vector<1x128xf32>
    %154 = vector.broadcast %153 : vector<1x128xf32> to vector<16x128xf32>
    %155 = arith.subf %147, %154 : vector<16x128xf32>
    %156 = arith.mulf %155, %155 : vector<16x128xf32>
    %cst_84 = arith.constant dense<0.000000e+00> : vector<1x128xf32>
    %157 = tpu.matmul %152, %156, %cst_84 {dimension_numbers = #tpu.dot_dimension_numbers<[1], [0], [0], [1], [0, 0, 1, 1], [], []>} : vector<1x16xf32>, vector<16x128xf32>, vector<1x128xf32> -> vector<1x128xf32>
    %cst_85 = arith.constant 9.99999974E-6 : f32
    %158 = vector.broadcast %cst_85 : f32 to vector<1x128xf32>
    %159 = arith.addf %157, %158 : vector<1x128xf32>
    %160 = math.rsqrt %159 : vector<1x128xf32>
    %161 = vector.broadcast %160 : vector<1x128xf32> to vector<16x128xf32>
    %162 = arith.mulf %155, %161 : vector<16x128xf32>
    %163 = vector.broadcast %150 : vector<16x1xf32> to vector<16x128xf32>
    %164 = arith.mulf %162, %163 : vector<16x128xf32>
    %165 = vector.broadcast %151 : vector<16x1xf32> to vector<16x128xf32>
    %166 = arith.addf %164, %165 : vector<16x128xf32>
    %cst_86 = arith.constant dense<0.000000e+00> : vector<48x128xf32>
    %167 = tpu.matmul %149, %166, %cst_86 {dimension_numbers = #tpu.dot_dimension_numbers<[1], [0], [0], [1], [0, 0, 1, 1], [], []>} : vector<48x16xf32>, vector<16x128xf32>, vector<48x128xf32> -> vector<48x128xf32>
    %168 = vector.extract_strided_slice %167 {offsets = [0, 0], sizes = [16, 128], strides = [1, 1]} : vector<48x128xf32> to vector<16x128xf32>
    %169 = vector.extract_strided_slice %167 {offsets = [16, 0], sizes = [16, 128], strides = [1, 1]} : vector<48x128xf32> to vector<16x128xf32>
    %170 = vector.extract_strided_slice %167 {offsets = [32, 0], sizes = [16, 128], strides = [1, 1]} : vector<48x128xf32> to vector<16x128xf32>
    %c0_87 = arith.constant 0 : index
    %c0_88 = arith.constant 0 : index
    %171 = vector.load %arg15[%c0_87, %c0_88] : memref<16x16xf32, #tpu.memory_space<vmem>>, vector<16x16xf32>
    %cst_89 = arith.constant 0.000000e+00 : f32
    %172 = vector.broadcast %cst_89 : f32 to vector<16x128xf32>
    %173 = vector.extract_strided_slice %168 {offsets = [0, 0], sizes = [4, 128], strides = [1, 1]} : vector<16x128xf32> to vector<4x128xf32>
    %174 = vector.extract_strided_slice %169 {offsets = [0, 0], sizes = [4, 128], strides = [1, 1]} : vector<16x128xf32> to vector<4x128xf32>
    %cst_90 = arith.constant dense<0.000000e+00> : vector<128x128xf32>
    %175 = tpu.matmul %173, %174, %cst_90 {dimension_numbers = #tpu.dot_dimension_numbers<[0], [0], [1], [1], [0, 1, 1, 1], [], []>} : vector<4x128xf32>, vector<4x128xf32>, vector<128x128xf32> -> vector<128x128xf32>
    %cst_91 = arith.constant 5.000000e-01 : f32
    %176 = vector.broadcast %cst_91 : f32 to vector<128x128xf32>
    %177 = arith.mulf %175, %176 : vector<128x128xf32>
    %178 = arith.addf %177, %148 : vector<128x128xf32>
    %cst_92 = arith.constant dense<0xFF800000> : vector<128xf32>
    %179 = vector.multi_reduction <maximumf>, %178, %cst_92 [1] : vector<128x128xf32> to vector<128xf32>
    %180 = vector.shape_cast %179 : vector<128xf32> to vector<128x1xf32>
    %181 = vector.broadcast %180 : vector<128x1xf32> to vector<128x128xf32>
    %182 = arith.subf %178, %181 : vector<128x128xf32>
    %183 = math.exp %182 : vector<128x128xf32>
    %cst_93 = arith.constant dense<0.000000e+00> : vector<128xf32>
    %184 = vector.multi_reduction <add>, %183, %cst_93 [1] : vector<128x128xf32> to vector<128xf32>
    %185 = vector.shape_cast %184 : vector<128xf32> to vector<128x1xf32>
    %186 = tpu.reciprocal %185 {approx = true} : vector<128x1xf32> -> vector<128x1xf32>
    %187 = vector.broadcast %186 : vector<128x1xf32> to vector<128x128xf32>
    %188 = arith.mulf %183, %187 : vector<128x128xf32>
    %189 = vector.extract_strided_slice %170 {offsets = [0, 0], sizes = [4, 128], strides = [1, 1]} : vector<16x128xf32> to vector<4x128xf32>
    %cst_94 = arith.constant dense<0.000000e+00> : vector<4x128xf32>
    %190 = tpu.matmul %189, %188, %cst_94 {dimension_numbers = #tpu.dot_dimension_numbers<[1], [1], [0], [0], [0, 0, 1, 0], [], []>} : vector<4x128xf32>, vector<128x128xf32>, vector<4x128xf32> -> vector<4x128xf32>
    %191 = vector.extract_strided_slice %171 {offsets = [0, 0], sizes = [16, 4], strides = [1, 1]} : vector<16x16xf32> to vector<16x4xf32>
    %cst_95 = arith.constant dense<0.000000e+00> : vector<16x128xf32>
    %192 = tpu.matmul %191, %190, %cst_95 {dimension_numbers = #tpu.dot_dimension_numbers<[1], [0], [0], [1], [0, 0, 1, 1], [], []>} : vector<16x4xf32>, vector<4x128xf32>, vector<16x128xf32> -> vector<16x128xf32>
    %193 = arith.addf %172, %192 : vector<16x128xf32>
    %194 = vector.extract_strided_slice %168 {offsets = [4, 0], sizes = [4, 128], strides = [1, 1]} : vector<16x128xf32> to vector<4x128xf32>
    %195 = vector.extract_strided_slice %169 {offsets = [4, 0], sizes = [4, 128], strides = [1, 1]} : vector<16x128xf32> to vector<4x128xf32>
    %cst_96 = arith.constant dense<0.000000e+00> : vector<128x128xf32>
    %196 = tpu.matmul %194, %195, %cst_96 {dimension_numbers = #tpu.dot_dimension_numbers<[0], [0], [1], [1], [0, 1, 1, 1], [], []>} : vector<4x128xf32>, vector<4x128xf32>, vector<128x128xf32> -> vector<128x128xf32>
    %cst_97 = arith.constant 5.000000e-01 : f32
    %197 = vector.broadcast %cst_97 : f32 to vector<128x128xf32>
    %198 = arith.mulf %196, %197 : vector<128x128xf32>
    %199 = arith.addf %198, %148 : vector<128x128xf32>
    %cst_98 = arith.constant dense<0xFF800000> : vector<128xf32>
    %200 = vector.multi_reduction <maximumf>, %199, %cst_98 [1] : vector<128x128xf32> to vector<128xf32>
    %201 = vector.shape_cast %200 : vector<128xf32> to vector<128x1xf32>
    %202 = vector.broadcast %201 : vector<128x1xf32> to vector<128x128xf32>
    %203 = arith.subf %199, %202 : vector<128x128xf32>
    %204 = math.exp %203 : vector<128x128xf32>
    %cst_99 = arith.constant dense<0.000000e+00> : vector<128xf32>
    %205 = vector.multi_reduction <add>, %204, %cst_99 [1] : vector<128x128xf32> to vector<128xf32>
    %206 = vector.shape_cast %205 : vector<128xf32> to vector<128x1xf32>
    %207 = tpu.reciprocal %206 {approx = true} : vector<128x1xf32> -> vector<128x1xf32>
    %208 = vector.broadcast %207 : vector<128x1xf32> to vector<128x128xf32>
    %209 = arith.mulf %204, %208 : vector<128x128xf32>
    %210 = vector.extract_strided_slice %170 {offsets = [4, 0], sizes = [4, 128], strides = [1, 1]} : vector<16x128xf32> to vector<4x128xf32>
    %cst_100 = arith.constant dense<0.000000e+00> : vector<4x128xf32>
    %211 = tpu.matmul %210, %209, %cst_100 {dimension_numbers = #tpu.dot_dimension_numbers<[1], [1], [0], [0], [0, 0, 1, 0], [], []>} : vector<4x128xf32>, vector<128x128xf32>, vector<4x128xf32> -> vector<4x128xf32>
    %212 = vector.extract_strided_slice %171 {offsets = [0, 4], sizes = [16, 4], strides = [1, 1]} : vector<16x16xf32> to vector<16x4xf32>
    %cst_101 = arith.constant dense<0.000000e+00> : vector<16x128xf32>
    %213 = tpu.matmul %212, %211, %cst_101 {dimension_numbers = #tpu.dot_dimension_numbers<[1], [0], [0], [1], [0, 0, 1, 1], [], []>} : vector<16x4xf32>, vector<4x128xf32>, vector<16x128xf32> -> vector<16x128xf32>
    %214 = arith.addf %193, %213 : vector<16x128xf32>
    %215 = vector.extract_strided_slice %168 {offsets = [8, 0], sizes = [4, 128], strides = [1, 1]} : vector<16x128xf32> to vector<4x128xf32>
    %216 = vector.extract_strided_slice %169 {offsets = [8, 0], sizes = [4, 128], strides = [1, 1]} : vector<16x128xf32> to vector<4x128xf32>
    %cst_102 = arith.constant dense<0.000000e+00> : vector<128x128xf32>
    %217 = tpu.matmul %215, %216, %cst_102 {dimension_numbers = #tpu.dot_dimension_numbers<[0], [0], [1], [1], [0, 1, 1, 1], [], []>} : vector<4x128xf32>, vector<4x128xf32>, vector<128x128xf32> -> vector<128x128xf32>
    %cst_103 = arith.constant 5.000000e-01 : f32
    %218 = vector.broadcast %cst_103 : f32 to vector<128x128xf32>
    %219 = arith.mulf %217, %218 : vector<128x128xf32>
    %220 = arith.addf %219, %148 : vector<128x128xf32>
    %cst_104 = arith.constant dense<0xFF800000> : vector<128xf32>
    %221 = vector.multi_reduction <maximumf>, %220, %cst_104 [1] : vector<128x128xf32> to vector<128xf32>
    %222 = vector.shape_cast %221 : vector<128xf32> to vector<128x1xf32>
    %223 = vector.broadcast %222 : vector<128x1xf32> to vector<128x128xf32>
    %224 = arith.subf %220, %223 : vector<128x128xf32>
    %225 = math.exp %224 : vector<128x128xf32>
    %cst_105 = arith.constant dense<0.000000e+00> : vector<128xf32>
    %226 = vector.multi_reduction <add>, %225, %cst_105 [1] : vector<128x128xf32> to vector<128xf32>
    %227 = vector.shape_cast %226 : vector<128xf32> to vector<128x1xf32>
    %228 = tpu.reciprocal %227 {approx = true} : vector<128x1xf32> -> vector<128x1xf32>
    %229 = vector.broadcast %228 : vector<128x1xf32> to vector<128x128xf32>
    %230 = arith.mulf %225, %229 : vector<128x128xf32>
    %231 = vector.extract_strided_slice %170 {offsets = [8, 0], sizes = [4, 128], strides = [1, 1]} : vector<16x128xf32> to vector<4x128xf32>
    %cst_106 = arith.constant dense<0.000000e+00> : vector<4x128xf32>
    %232 = tpu.matmul %231, %230, %cst_106 {dimension_numbers = #tpu.dot_dimension_numbers<[1], [1], [0], [0], [0, 0, 1, 0], [], []>} : vector<4x128xf32>, vector<128x128xf32>, vector<4x128xf32> -> vector<4x128xf32>
    %233 = vector.extract_strided_slice %171 {offsets = [0, 8], sizes = [16, 4], strides = [1, 1]} : vector<16x16xf32> to vector<16x4xf32>
    %cst_107 = arith.constant dense<0.000000e+00> : vector<16x128xf32>
    %234 = tpu.matmul %233, %232, %cst_107 {dimension_numbers = #tpu.dot_dimension_numbers<[1], [0], [0], [1], [0, 0, 1, 1], [], []>} : vector<16x4xf32>, vector<4x128xf32>, vector<16x128xf32> -> vector<16x128xf32>
    %235 = arith.addf %214, %234 : vector<16x128xf32>
    %236 = vector.extract_strided_slice %168 {offsets = [12, 0], sizes = [4, 128], strides = [1, 1]} : vector<16x128xf32> to vector<4x128xf32>
    %237 = vector.extract_strided_slice %169 {offsets = [12, 0], sizes = [4, 128], strides = [1, 1]} : vector<16x128xf32> to vector<4x128xf32>
    %cst_108 = arith.constant dense<0.000000e+00> : vector<128x128xf32>
    %238 = tpu.matmul %236, %237, %cst_108 {dimension_numbers = #tpu.dot_dimension_numbers<[0], [0], [1], [1], [0, 1, 1, 1], [], []>} : vector<4x128xf32>, vector<4x128xf32>, vector<128x128xf32> -> vector<128x128xf32>
    %cst_109 = arith.constant 5.000000e-01 : f32
    %239 = vector.broadcast %cst_109 : f32 to vector<128x128xf32>
    %240 = arith.mulf %238, %239 : vector<128x128xf32>
    %241 = arith.addf %240, %148 : vector<128x128xf32>
    %cst_110 = arith.constant dense<0xFF800000> : vector<128xf32>
    %242 = vector.multi_reduction <maximumf>, %241, %cst_110 [1] : vector<128x128xf32> to vector<128xf32>
    %243 = vector.shape_cast %242 : vector<128xf32> to vector<128x1xf32>
    %244 = vector.broadcast %243 : vector<128x1xf32> to vector<128x128xf32>
    %245 = arith.subf %241, %244 : vector<128x128xf32>
    %246 = math.exp %245 : vector<128x128xf32>
    %cst_111 = arith.constant dense<0.000000e+00> : vector<128xf32>
    %247 = vector.multi_reduction <add>, %246, %cst_111 [1] : vector<128x128xf32> to vector<128xf32>
    %248 = vector.shape_cast %247 : vector<128xf32> to vector<128x1xf32>
    %249 = tpu.reciprocal %248 {approx = true} : vector<128x1xf32> -> vector<128x1xf32>
    %250 = vector.broadcast %249 : vector<128x1xf32> to vector<128x128xf32>
    %251 = arith.mulf %246, %250 : vector<128x128xf32>
    %252 = vector.extract_strided_slice %170 {offsets = [12, 0], sizes = [4, 128], strides = [1, 1]} : vector<16x128xf32> to vector<4x128xf32>
    %cst_112 = arith.constant dense<0.000000e+00> : vector<4x128xf32>
    %253 = tpu.matmul %252, %251, %cst_112 {dimension_numbers = #tpu.dot_dimension_numbers<[1], [1], [0], [0], [0, 0, 1, 0], [], []>} : vector<4x128xf32>, vector<128x128xf32>, vector<4x128xf32> -> vector<4x128xf32>
    %254 = vector.extract_strided_slice %171 {offsets = [0, 12], sizes = [16, 4], strides = [1, 1]} : vector<16x16xf32> to vector<16x4xf32>
    %cst_113 = arith.constant dense<0.000000e+00> : vector<16x128xf32>
    %255 = tpu.matmul %254, %253, %cst_113 {dimension_numbers = #tpu.dot_dimension_numbers<[1], [0], [0], [1], [0, 0, 1, 1], [], []>} : vector<16x4xf32>, vector<4x128xf32>, vector<16x128xf32> -> vector<16x128xf32>
    %256 = arith.addf %235, %255 : vector<16x128xf32>
    %257 = arith.addf %147, %256 : vector<16x128xf32>
    %c0_114 = arith.constant 0 : index
    %c0_115 = arith.constant 0 : index
    %258 = vector.load %arg16[%c0_114, %c0_115] : memref<16x1xf32, #tpu.memory_space<vmem>>, vector<16x1xf32>
    %259 = vector.broadcast %258 : vector<16x1xf32> to vector<16x128xf32>
    %260 = arith.addf %257, %259 : vector<16x128xf32>
    %c0_116 = arith.constant 0 : index
    %c0_117 = arith.constant 0 : index
    %261 = vector.load %arg17[%c0_116, %c0_117] : memref<16x1xf32, #tpu.memory_space<vmem>>, vector<16x1xf32>
    %c0_118 = arith.constant 0 : index
    %c0_119 = arith.constant 0 : index
    %262 = vector.load %arg18[%c0_118, %c0_119] : memref<16x1xf32, #tpu.memory_space<vmem>>, vector<16x1xf32>
    %cst_120 = arith.constant 6.250000e-02 : f32
    %263 = vector.broadcast %cst_120 : f32 to vector<1x16xf32>
    %cst_121 = arith.constant dense<0.000000e+00> : vector<1x128xf32>
    %264 = tpu.matmul %263, %260, %cst_121 {dimension_numbers = #tpu.dot_dimension_numbers<[1], [0], [0], [1], [0, 0, 1, 1], [], []>} : vector<1x16xf32>, vector<16x128xf32>, vector<1x128xf32> -> vector<1x128xf32>
    %265 = vector.broadcast %264 : vector<1x128xf32> to vector<16x128xf32>
    %266 = arith.subf %260, %265 : vector<16x128xf32>
    %267 = arith.mulf %266, %266 : vector<16x128xf32>
    %cst_122 = arith.constant dense<0.000000e+00> : vector<1x128xf32>
    %268 = tpu.matmul %263, %267, %cst_122 {dimension_numbers = #tpu.dot_dimension_numbers<[1], [0], [0], [1], [0, 0, 1, 1], [], []>} : vector<1x16xf32>, vector<16x128xf32>, vector<1x128xf32> -> vector<1x128xf32>
    %cst_123 = arith.constant 9.99999974E-6 : f32
    %269 = vector.broadcast %cst_123 : f32 to vector<1x128xf32>
    %270 = arith.addf %268, %269 : vector<1x128xf32>
    %271 = math.rsqrt %270 : vector<1x128xf32>
    %272 = vector.broadcast %271 : vector<1x128xf32> to vector<16x128xf32>
    %273 = arith.mulf %266, %272 : vector<16x128xf32>
    %274 = vector.broadcast %261 : vector<16x1xf32> to vector<16x128xf32>
    %275 = arith.mulf %273, %274 : vector<16x128xf32>
    %276 = vector.broadcast %262 : vector<16x1xf32> to vector<16x128xf32>
    %277 = arith.addf %275, %276 : vector<16x128xf32>
    %c0_124 = arith.constant 0 : index
    %c0_125 = arith.constant 0 : index
    %278 = vector.load %arg19[%c0_124, %c0_125] : memref<64x16xf32, #tpu.memory_space<vmem>>, vector<64x16xf32>
    %cst_126 = arith.constant dense<0.000000e+00> : vector<64x128xf32>
    %279 = tpu.matmul %278, %277, %cst_126 {dimension_numbers = #tpu.dot_dimension_numbers<[1], [0], [0], [1], [0, 0, 1, 1], [], []>} : vector<64x16xf32>, vector<16x128xf32>, vector<64x128xf32> -> vector<64x128xf32>
    %c0_127 = arith.constant 0 : index
    %c0_128 = arith.constant 0 : index
    %280 = vector.load %arg20[%c0_127, %c0_128] : memref<64x1xf32, #tpu.memory_space<vmem>>, vector<64x1xf32>
    %281 = vector.broadcast %280 : vector<64x1xf32> to vector<64x128xf32>
    %282 = arith.addf %279, %281 : vector<64x128xf32>
    %283 = arith.mulf %282, %282 : vector<64x128xf32>
    %284 = arith.mulf %282, %283 : vector<64x128xf32>
    %cst_129 = arith.constant 4.471500e-02 : f32
    %285 = vector.broadcast %cst_129 : f32 to vector<64x128xf32>
    %286 = arith.mulf %285, %284 : vector<64x128xf32>
    %287 = arith.addf %282, %286 : vector<64x128xf32>
    %cst_130 = arith.constant 0.797884583 : f32
    %288 = vector.broadcast %cst_130 : f32 to vector<64x128xf32>
    %289 = arith.mulf %288, %287 : vector<64x128xf32>
    %290 = math.tanh %289 : vector<64x128xf32>
    %cst_131 = arith.constant 1.000000e+00 : f32
    %291 = vector.broadcast %cst_131 : f32 to vector<64x128xf32>
    %292 = arith.addf %291, %290 : vector<64x128xf32>
    %cst_132 = arith.constant 5.000000e-01 : f32
    %293 = vector.broadcast %cst_132 : f32 to vector<64x128xf32>
    %294 = arith.mulf %293, %292 : vector<64x128xf32>
    %295 = arith.mulf %282, %294 : vector<64x128xf32>
    %c0_133 = arith.constant 0 : index
    %c0_134 = arith.constant 0 : index
    %296 = vector.load %arg21[%c0_133, %c0_134] : memref<16x64xf32, #tpu.memory_space<vmem>>, vector<16x64xf32>
    %cst_135 = arith.constant dense<0.000000e+00> : vector<16x128xf32>
    %297 = tpu.matmul %296, %295, %cst_135 {dimension_numbers = #tpu.dot_dimension_numbers<[1], [0], [0], [1], [0, 0, 1, 1], [], []>} : vector<16x64xf32>, vector<64x128xf32>, vector<16x128xf32> -> vector<16x128xf32>
    %c0_136 = arith.constant 0 : index
    %c0_137 = arith.constant 0 : index
    %298 = vector.load %arg22[%c0_136, %c0_137] : memref<16x1xf32, #tpu.memory_space<vmem>>, vector<16x1xf32>
    %299 = vector.broadcast %298 : vector<16x1xf32> to vector<16x128xf32>
    %300 = arith.addf %297, %299 : vector<16x128xf32>
    %301 = arith.addf %260, %300 : vector<16x128xf32>
    %c0_138 = arith.constant 0 : index
    %c0_139 = arith.constant 0 : index
    %302 = vector.load %arg23[%c0_138, %c0_139] : memref<8x16xf32, #tpu.memory_space<vmem>>, vector<8x16xf32>
    %cst_140 = arith.constant dense<0.000000e+00> : vector<8x128xf32>
    %303 = tpu.matmul %302, %301, %cst_140 {dimension_numbers = #tpu.dot_dimension_numbers<[1], [0], [0], [1], [0, 0, 1, 1], [], []>} : vector<8x16xf32>, vector<16x128xf32>, vector<8x128xf32> -> vector<8x128xf32>
    %c0_141 = arith.constant 0 : index
    %c0_142 = arith.constant 0 : index
    %304 = vector.load %arg24[%c0_141, %c0_142] : memref<8x1xf32, #tpu.memory_space<vmem>>, vector<8x1xf32>
    %305 = vector.broadcast %304 : vector<8x1xf32> to vector<8x128xf32>
    %306 = arith.addf %303, %305 : vector<8x128xf32>
    %c9_i32_143 = arith.constant 9 : i32
    %307 = tpu.dynamic_rotate %306 by %c9_i32_143 dim 1 : vector<8x128xf32>, i32 -> vector<8x128xf32>
    %c0_144 = arith.constant 0 : index
    %c0_145 = arith.constant 0 : index
    %c0_146 = arith.constant 0 : index
    %308 = vector.load %arg3[%c0_144, %c0_145, %c0_146] : memref<9x1x128xf32, #tpu.memory_space<vmem>>, vector<1x1x128xf32>
    %309 = vector.shape_cast %308 : vector<1x1x128xf32> to vector<1x128xf32>
    %310 = vector.broadcast %309 : vector<1x128xf32> to vector<8x128xf32>
    %311 = arith.mulf %307, %310 : vector<8x128xf32>
    %c8_i32_147 = arith.constant 8 : i32
    %312 = tpu.dynamic_rotate %306 by %c8_i32_147 dim 1 : vector<8x128xf32>, i32 -> vector<8x128xf32>
    %c1_148 = arith.constant 1 : index
    %c0_149 = arith.constant 0 : index
    %c0_150 = arith.constant 0 : index
    %313 = vector.load %arg3[%c1_148, %c0_149, %c0_150] : memref<9x1x128xf32, #tpu.memory_space<vmem>>, vector<1x1x128xf32>
    %314 = vector.shape_cast %313 : vector<1x1x128xf32> to vector<1x128xf32>
    %315 = vector.broadcast %314 : vector<1x128xf32> to vector<8x128xf32>
    %316 = arith.mulf %312, %315 : vector<8x128xf32>
    %c7_i32_151 = arith.constant 7 : i32
    %317 = tpu.dynamic_rotate %306 by %c7_i32_151 dim 1 : vector<8x128xf32>, i32 -> vector<8x128xf32>
    %c2_152 = arith.constant 2 : index
    %c0_153 = arith.constant 0 : index
    %c0_154 = arith.constant 0 : index
    %318 = vector.load %arg3[%c2_152, %c0_153, %c0_154] : memref<9x1x128xf32, #tpu.memory_space<vmem>>, vector<1x1x128xf32>
    %319 = vector.shape_cast %318 : vector<1x1x128xf32> to vector<1x128xf32>
    %320 = vector.broadcast %319 : vector<1x128xf32> to vector<8x128xf32>
    %321 = arith.mulf %317, %320 : vector<8x128xf32>
    %c1_i32_155 = arith.constant 1 : i32
    %322 = tpu.dynamic_rotate %306 by %c1_i32_155 dim 1 : vector<8x128xf32>, i32 -> vector<8x128xf32>
    %c3_156 = arith.constant 3 : index
    %c0_157 = arith.constant 0 : index
    %c0_158 = arith.constant 0 : index
    %323 = vector.load %arg3[%c3_156, %c0_157, %c0_158] : memref<9x1x128xf32, #tpu.memory_space<vmem>>, vector<1x1x128xf32>
    %324 = vector.shape_cast %323 : vector<1x1x128xf32> to vector<1x128xf32>
    %325 = vector.broadcast %324 : vector<1x128xf32> to vector<8x128xf32>
    %326 = arith.mulf %322, %325 : vector<8x128xf32>
    %c4_159 = arith.constant 4 : index
    %c0_160 = arith.constant 0 : index
    %c0_161 = arith.constant 0 : index
    %327 = vector.load %arg3[%c4_159, %c0_160, %c0_161] : memref<9x1x128xf32, #tpu.memory_space<vmem>>, vector<1x1x128xf32>
    %328 = vector.shape_cast %327 : vector<1x1x128xf32> to vector<1x128xf32>
    %329 = vector.broadcast %328 : vector<1x128xf32> to vector<8x128xf32>
    %330 = arith.mulf %306, %329 : vector<8x128xf32>
    %c127_i32_162 = arith.constant 127 : i32
    %331 = tpu.dynamic_rotate %306 by %c127_i32_162 dim 1 : vector<8x128xf32>, i32 -> vector<8x128xf32>
    %c5_163 = arith.constant 5 : index
    %c0_164 = arith.constant 0 : index
    %c0_165 = arith.constant 0 : index
    %332 = vector.load %arg3[%c5_163, %c0_164, %c0_165] : memref<9x1x128xf32, #tpu.memory_space<vmem>>, vector<1x1x128xf32>
    %333 = vector.shape_cast %332 : vector<1x1x128xf32> to vector<1x128xf32>
    %334 = vector.broadcast %333 : vector<1x128xf32> to vector<8x128xf32>
    %335 = arith.mulf %331, %334 : vector<8x128xf32>
    %c121_i32_166 = arith.constant 121 : i32
    %336 = tpu.dynamic_rotate %306 by %c121_i32_166 dim 1 : vector<8x128xf32>, i32 -> vector<8x128xf32>
    %c6_167 = arith.constant 6 : index
    %c0_168 = arith.constant 0 : index
    %c0_169 = arith.constant 0 : index
    %337 = vector.load %arg3[%c6_167, %c0_168, %c0_169] : memref<9x1x128xf32, #tpu.memory_space<vmem>>, vector<1x1x128xf32>
    %338 = vector.shape_cast %337 : vector<1x1x128xf32> to vector<1x128xf32>
    %339 = vector.broadcast %338 : vector<1x128xf32> to vector<8x128xf32>
    %340 = arith.mulf %336, %339 : vector<8x128xf32>
    %c120_i32_170 = arith.constant 120 : i32
    %341 = tpu.dynamic_rotate %306 by %c120_i32_170 dim 1 : vector<8x128xf32>, i32 -> vector<8x128xf32>
    %c7_171 = arith.constant 7 : index
    %c0_172 = arith.constant 0 : index
    %c0_173 = arith.constant 0 : index
    %342 = vector.load %arg3[%c7_171, %c0_172, %c0_173] : memref<9x1x128xf32, #tpu.memory_space<vmem>>, vector<1x1x128xf32>
    %343 = vector.shape_cast %342 : vector<1x1x128xf32> to vector<1x128xf32>
    %344 = vector.broadcast %343 : vector<1x128xf32> to vector<8x128xf32>
    %345 = arith.mulf %341, %344 : vector<8x128xf32>
    %c119_i32_174 = arith.constant 119 : i32
    %346 = tpu.dynamic_rotate %306 by %c119_i32_174 dim 1 : vector<8x128xf32>, i32 -> vector<8x128xf32>
    %c8_175 = arith.constant 8 : index
    %c0_176 = arith.constant 0 : index
    %c0_177 = arith.constant 0 : index
    %347 = vector.load %arg3[%c8_175, %c0_176, %c0_177] : memref<9x1x128xf32, #tpu.memory_space<vmem>>, vector<1x1x128xf32>
    %348 = vector.shape_cast %347 : vector<1x1x128xf32> to vector<1x128xf32>
    %349 = vector.broadcast %348 : vector<1x128xf32> to vector<8x128xf32>
    %350 = arith.mulf %346, %349 : vector<8x128xf32>
    %351 = tpu.concatenate %91, %96, %101, %106, %110, %115, %120, %125, %130, %311, %316, %321, %326, %330, %335, %340 in 0 : vector<8x128xf32>, vector<8x128xf32>, vector<8x128xf32>, vector<8x128xf32>, vector<8x128xf32>, vector<8x128xf32>, vector<8x128xf32>, vector<8x128xf32>, vector<8x128xf32>, vector<8x128xf32>, vector<8x128xf32>, vector<8x128xf32>, vector<8x128xf32>, vector<8x128xf32>, vector<8x128xf32>, vector<8x128xf32> -> vector<128x128xf32>
    %352 = tpu.concatenate %345, %350 in 0 : vector<8x128xf32>, vector<8x128xf32> -> vector<16x128xf32>
    %353 = tpu.concatenate %351, %352 in 0 : vector<128x128xf32>, vector<16x128xf32> -> vector<144x128xf32>
    %c0_178 = arith.constant 0 : index
    %c0_179 = arith.constant 0 : index
    %354 = vector.load %arg25[%c0_178, %c0_179] : memref<8x144xf32, #tpu.memory_space<vmem>>, vector<8x144xf32>
    %cst_180 = arith.constant dense<0.000000e+00> : vector<8x128xf32>
    %355 = tpu.matmul %354, %353, %cst_180 {dimension_numbers = #tpu.dot_dimension_numbers<[1], [0], [0], [1], [0, 0, 1, 1], [], []>} : vector<8x144xf32>, vector<144x128xf32>, vector<8x128xf32> -> vector<8x128xf32>
    %c0_181 = arith.constant 0 : index
    %c0_182 = arith.constant 0 : index
    %356 = vector.load %arg26[%c0_181, %c0_182] : memref<8x1xf32, #tpu.memory_space<vmem>>, vector<8x1xf32>
    %357 = vector.broadcast %356 : vector<8x1xf32> to vector<8x128xf32>
    %358 = arith.addf %355, %357 : vector<8x128xf32>
    %c0_183 = arith.constant 0 : index
    %c0_184 = arith.constant 0 : index
    %359 = vector.load %arg27[%c0_183, %c0_184] : memref<8x8xf32, #tpu.memory_space<vmem>>, vector<8x8xf32>
    %cst_185 = arith.constant dense<0.000000e+00> : vector<8x128xf32>
    %360 = tpu.matmul %359, %358, %cst_185 {dimension_numbers = #tpu.dot_dimension_numbers<[1], [0], [0], [1], [0, 0, 1, 1], [], []>} : vector<8x8xf32>, vector<8x128xf32>, vector<8x128xf32> -> vector<8x128xf32>
    %c0_186 = arith.constant 0 : index
    %c0_187 = arith.constant 0 : index
    %361 = vector.load %arg28[%c0_186, %c0_187] : memref<8x1xf32, #tpu.memory_space<vmem>>, vector<8x1xf32>
    %362 = vector.broadcast %361 : vector<8x1xf32> to vector<8x128xf32>
    %363 = arith.addf %360, %362 : vector<8x128xf32>
    %c0_188 = arith.constant 0 : index
    %c0_189 = arith.constant 0 : index
    %364 = vector.load %arg29[%c0_188, %c0_189] : memref<8x128xf32, #tpu.memory_space<vmem>>, vector<8x128xf32>
    tpu.vector_store %arg29[%c0_188, %c0_189], %363 {strides = array<i32>} : memref<8x128xf32, #tpu.memory_space<vmem>>, vector<8x128xf32>,
    return
  }
}

</mosaic_0001>

<llo_original>
// kernel: stage4_forward.1
$region0: #{stage4_forward.1}
  #allocation0 [shape = 'u32[]', space=smem, size = 0x4, offset = 0x4, fixed_abs, tag = 'smem constant byte address 0x4 - core index']
  #allocation1 [shape = 'u32[144,128]{1,0:T(1,128)}', space=vmem, size = 0x12000, scoped, tag = 'internal scratch']
  %s0 = inlined_call_operand.smem [shape: u32[30], index: -1, kind: input, shape index: {}]
  %s1 = sld [smem:[%s0]]
  %s2 = scalar_lea.smem %s0, 1
  %s3 = sld [smem:[%s2]]
  %s4 = scalar_lea.smem %s0, 2
  %s5 = sld [smem:[%s4]]
  %s6 = scalar_lea.smem %s0, 3
  %s7 = sld [smem:[%s6]]
  %s8 = scalar_lea.smem %s0, 4
  %s9 = sld [smem:[%s8]]
  %s10 = scalar_lea.smem %s0, 5
  %s11 = sld [smem:[%s10]]
  %s12 = scalar_lea.smem %s0, 6
  %s13 = sld [smem:[%s12]]
  %s14 = scalar_lea.smem %s0, 7
  %s15 = sld [smem:[%s14]]
  %s16 = scalar_lea.smem %s0, 8
  %s17 = sld [smem:[%s16]]
  %s18 = scalar_lea.smem %s0, 9
  %s19 = sld [smem:[%s18]]
  %s20 = scalar_lea.smem %s0, 10
  %s21 = sld [smem:[%s20]]
  %s22 = scalar_lea.smem %s0, 11
  %s23 = sld [smem:[%s22]]
  %s24 = scalar_lea.smem %s0, 12
  %s25 = sld [smem:[%s24]]
  %s26 = scalar_lea.smem %s0, 13
  %s27 = sld [smem:[%s26]]
  %s28 = scalar_lea.smem %s0, 14
  %s29 = sld [smem:[%s28]]
  %s30 = scalar_lea.smem %s0, 15
  %s31 = sld [smem:[%s30]]
  %s32 = scalar_lea.smem %s0, 16
  %s33 = sld [smem:[%s32]]
  %s34 = scalar_lea.smem %s0, 17
  %s35 = sld [smem:[%s34]]
  %s36 = scalar_lea.smem %s0, 18
  %s37 = sld [smem:[%s36]]
  %s38 = scalar_lea.smem %s0, 19
  %s39 = sld [smem:[%s38]]
  %s40 = scalar_lea.smem %s0, 20
  %s41 = sld [smem:[%s40]]
  %s42 = scalar_lea.smem %s0, 21
  %s43 = sld [smem:[%s42]]
  %s44 = scalar_lea.smem %s0, 22
  %s45 = sld [smem:[%s44]]
  %s46 = scalar_lea.smem %s0, 23
  %s47 = sld [smem:[%s46]]
  %s48 = scalar_lea.smem %s0, 24
  %s49 = sld [smem:[%s48]]
  %s50 = scalar_lea.smem %s0, 25
  %s51 = sld [smem:[%s50]]
  %s52 = scalar_lea.smem %s0, 26
  %s53 = sld [smem:[%s52]]
  %s54 = scalar_lea.smem %s0, 27
  %s55 = sld [smem:[%s54]]
  %s56 = scalar_lea.smem %s0, 28
  %s57 = sld [smem:[%s56]]
  %s58 = scalar_lea.smem %s0, 29
  %s59 = sld [smem:[%s58]]
  %s60 = sld [smem:[#allocation0]]
  $region126: #{stage4_forward.1} parent=0
    _
  %s62 = ssub.s32 1, %s60
  %s63 = scalar_select 0, %s62, %s60
  // Predicated region
  $region2: #{stage4_forward.1} parent=0 // pred_check
    _
  $region3: #{stage4_forward.1} parent=0 // pred_check_branch
    %65 = sbr.rel (0) target = $region5
  $region4: #{stage4_forward.1} parent=0 // pred_region
    _
  $region5: #{stage4_forward.1} parent=0 // pred_fallthru
    _
  // Predicated region
  $region6: #{stage4_forward.1} parent=0 // pred_check
    _
  $region7: #{stage4_forward.1} parent=0 // pred_check_branch
    %67 = sbr.rel (0) target = $region9
  $region8: #{stage4_forward.1} parent=0 // pred_region
    _
  $region9: #{stage4_forward.1} parent=0 // pred_fallthru
    _
  // Predicated region
  $region10: #{stage4_forward.1} parent=0 // pred_check
    _
  $region11: #{stage4_forward.1} parent=0 // pred_check_branch
    %69 = sbr.rel (0) target = $region13
  $region12: #{stage4_forward.1} parent=0 // pred_region
    _
  $region13: #{stage4_forward.1} parent=0 // pred_fallthru
    _
  // Predicated region
  $region14: #{stage4_forward.1} parent=0 // pred_check
    _
  $region15: #{stage4_forward.1} parent=0 // pred_check_branch
    %71 = sbr.rel (0) target = $region17
  $region16: #{stage4_forward.1} parent=0 // pred_region
    _
  $region17: #{stage4_forward.1} parent=0 // pred_fallthru
    _
  // Predicated region
  $region18: #{stage4_forward.1} parent=0 // pred_check
    _
  $region19: #{stage4_forward.1} parent=0 // pred_check_branch
    %73 = sbr.rel (0) target = $region21
  $region20: #{stage4_forward.1} parent=0 // pred_region
    _
  $region21: #{stage4_forward.1} parent=0 // pred_fallthru
    _
  // Predicated region
  $region22: #{stage4_forward.1} parent=0 // pred_check
    _
  $region23: #{stage4_forward.1} parent=0 // pred_check_branch
    %75 = sbr.rel (0) target = $region25
  $region24: #{stage4_forward.1} parent=0 // pred_region
    _
  $region25: #{stage4_forward.1} parent=0 // pred_fallthru
    _
  // Predicated region
  $region26: #{stage4_forward.1} parent=0 // pred_check
    _
  $region27: #{stage4_forward.1} parent=0 // pred_check_branch
    %77 = sbr.rel (0) target = $region29
  $region28: #{stage4_forward.1} parent=0 // pred_region
    _
  $region29: #{stage4_forward.1} parent=0 // pred_fallthru
    _
  // Predicated region
  $region30: #{stage4_forward.1} parent=0 // pred_check
    _
  $region31: #{stage4_forward.1} parent=0 // pred_check_branch
    %79 = sbr.rel (0) target = $region33
  $region32: #{stage4_forward.1} parent=0 // pred_region
    _
  $region33: #{stage4_forward.1} parent=0 // pred_fallthru
    _
  // Predicated region
  $region34: #{stage4_forward.1} parent=0 // pred_check
    _
  $region35: #{stage4_forward.1} parent=0 // pred_check_branch
    %81 = sbr.rel (0) target = $region37
  $region36: #{stage4_forward.1} parent=0 // pred_region
    _
  $region37: #{stage4_forward.1} parent=0 // pred_fallthru
    _
  // Predicated region
  $region38: #{stage4_forward.1} parent=0 // pred_check
    _
  $region39: #{stage4_forward.1} parent=0 // pred_check_branch
    %83 = sbr.rel (0) target = $region41
  $region40: #{stage4_forward.1} parent=0 // pred_region
    _
  $region41: #{stage4_forward.1} parent=0 // pred_fallthru
    _
  // Predicated region
  $region42: #{stage4_forward.1} parent=0 // pred_check
    _
  $region43: #{stage4_forward.1} parent=0 // pred_check_branch
    %85 = sbr.rel (0) target = $region45
  $region44: #{stage4_forward.1} parent=0 // pred_region
    _
  $region45: #{stage4_forward.1} parent=0 // pred_fallthru
    _
  // Predicated region
  $region46: #{stage4_forward.1} parent=0 // pred_check
    _
  $region47: #{stage4_forward.1} parent=0 // pred_check_branch
    %87 = sbr.rel (0) target = $region49
  $region48: #{stage4_forward.1} parent=0 // pred_region
    _
  $region49: #{stage4_forward.1} parent=0 // pred_fallthru
    _
  // Predicated region
  $region50: #{stage4_forward.1} parent=0 // pred_check
    _
  $region51: #{stage4_forward.1} parent=0 // pred_check_branch
    %89 = sbr.rel (0) target = $region53
  $region52: #{stage4_forward.1} parent=0 // pred_region
    _
  $region53: #{stage4_forward.1} parent=0 // pred_fallthru
    _
  // Predicated region
  $region54: #{stage4_forward.1} parent=0 // pred_check
    _
  $region55: #{stage4_forward.1} parent=0 // pred_check_branch
    %91 = sbr.rel (0) target = $region57
  $region56: #{stage4_forward.1} parent=0 // pred_region
    _
  $region57: #{stage4_forward.1} parent=0 // pred_fallthru
    _
  // Predicated region
  $region58: #{stage4_forward.1} parent=0 // pred_check
    _
  $region59: #{stage4_forward.1} parent=0 // pred_check_branch
    %93 = sbr.rel (0) target = $region61
  $region60: #{stage4_forward.1} parent=0 // pred_region
    _
  $region61: #{stage4_forward.1} parent=0 // pred_fallthru
    _
  // Predicated region
  $region62: #{stage4_forward.1} parent=0 // pred_check
    _
  $region63: #{stage4_forward.1} parent=0 // pred_check_branch
    %95 = sbr.rel (0) target = $region65
  $region64: #{stage4_forward.1} parent=0 // pred_region
    _
  $region65: #{stage4_forward.1} parent=0 // pred_fallthru
    _
  // Predicated region
  $region66: #{stage4_forward.1} parent=0 // pred_check
    _
  $region67: #{stage4_forward.1} parent=0 // pred_check_branch
    %97 = sbr.rel (0) target = $region69
  $region68: #{stage4_forward.1} parent=0 // pred_region
    _
  $region69: #{stage4_forward.1} parent=0 // pred_fallthru
    _
  // Predicated region
  $region70: #{stage4_forward.1} parent=0 // pred_check
    _
  $region71: #{stage4_forward.1} parent=0 // pred_check_branch
    %99 = sbr.rel (0) target = $region73
  $region72: #{stage4_forward.1} parent=0 // pred_region
    _
  $region73: #{stage4_forward.1} parent=0 // pred_fallthru
    _
  // Predicated region
  $region74: #{stage4_forward.1} parent=0 // pred_check
    _
  $region75: #{stage4_forward.1} parent=0 // pred_check_branch
    %101 = sbr.rel (0) target = $region77
  $region76: #{stage4_forward.1} parent=0 // pred_region
    _
  $region77: #{stage4_forward.1} parent=0 // pred_fallthru
    _
  // Predicated region
  $region78: #{stage4_forward.1} parent=0 // pred_check
    _
  $region79: #{stage4_forward.1} parent=0 // pred_check_branch
    %103 = sbr.rel (0) target = $region81
  $region80: #{stage4_forward.1} parent=0 // pred_region
    _
  $region81: #{stage4_forward.1} parent=0 // pred_fallthru
    _
  // Predicated region
  $region82: #{stage4_forward.1} parent=0 // pred_check
    _
  $region83: #{stage4_forward.1} parent=0 // pred_check_branch
    %105 = sbr.rel (0) target = $region85
  $region84: #{stage4_forward.1} parent=0 // pred_region
    _
  $region85: #{stage4_forward.1} parent=0 // pred_fallthru
    _
  // Predicated region
  $region86: #{stage4_forward.1} parent=0 // pred_check
    _
  $region87: #{stage4_forward.1} parent=0 // pred_check_branch
    %107 = sbr.rel (0) target = $region89
  $region88: #{stage4_forward.1} parent=0 // pred_region
    _
  $region89: #{stage4_forward.1} parent=0 // pred_fallthru
    _
  // Predicated region
  $region90: #{stage4_forward.1} parent=0 // pred_check
    _
  $region91: #{stage4_forward.1} parent=0 // pred_check_branch
    %109 = sbr.rel (0) target = $region93
  $region92: #{stage4_forward.1} parent=0 // pred_region
    _
  $region93: #{stage4_forward.1} parent=0 // pred_fallthru
    _
  // Predicated region
  $region94: #{stage4_forward.1} parent=0 // pred_check
    _
  $region95: #{stage4_forward.1} parent=0 // pred_check_branch
    %111 = sbr.rel (0) target = $region97
  $region96: #{stage4_forward.1} parent=0 // pred_region
    _
  $region97: #{stage4_forward.1} parent=0 // pred_fallthru
    _
  // Predicated region
  $region98: #{stage4_forward.1} parent=0 // pred_check
    _
  $region99: #{stage4_forward.1} parent=0 // pred_check_branch
    %113 = sbr.rel (0) target = $region101
  $region100: #{stage4_forward.1} parent=0 // pred_region
    _
  $region101: #{stage4_forward.1} parent=0 // pred_fallthru
    _
  // Predicated region
  $region102: #{stage4_forward.1} parent=0 // pred_check
    _
  $region103: #{stage4_forward.1} parent=0 // pred_check_branch
    %115 = sbr.rel (0) target = $region105
  $region104: #{stage4_forward.1} parent=0 // pred_region
    _
  $region105: #{stage4_forward.1} parent=0 // pred_fallthru
    _
  // Predicated region
  $region106: #{stage4_forward.1} parent=0 // pred_check
    _
  $region107: #{stage4_forward.1} parent=0 // pred_check_branch
    %117 = sbr.rel (0) target = $region109
  $region108: #{stage4_forward.1} parent=0 // pred_region
    _
  $region109: #{stage4_forward.1} parent=0 // pred_fallthru
    _
  // Predicated region
  $region110: #{stage4_forward.1} parent=0 // pred_check
    _
  $region111: #{stage4_forward.1} parent=0 // pred_check_branch
    %119 = sbr.rel (0) target = $region113
  $region112: #{stage4_forward.1} parent=0 // pred_region
    _
  $region113: #{stage4_forward.1} parent=0 // pred_fallthru
    _
  // Predicated region
  $region114: #{stage4_forward.1} parent=0 // pred_check
    _
  $region115: #{stage4_forward.1} parent=0 // pred_check_branch
    %121 = sbr.rel (0) target = $region117
  $region116: #{stage4_forward.1} parent=0 // pred_region
    _
  $region117: #{stage4_forward.1} parent=0 // pred_fallthru
    _
  %v122 = vld [vmem:[%s11] sm:$0xff]
  %v123 = vld [vmem:[%s15] sm:$0xff]
  %v124 = vld [vmem:[%s1] sm:$0xff]
  %v125 = vld [vmem:[%s1 + $0x8] sm:$0xff]
  %v126 = vld [vmem:[%s1 + $0x10] sm:$0xff]
  %v127 = vld [vmem:[%s1 + $0x18] sm:$0xff]
  %v128 = vld [vmem:[%s1 + $0x20] sm:$0xf]
  %v134 = vcombine.high %v124, %v124
  %v135 = vcombine.high %v125, %v125
  %v136 = vcombine.high %v126, %v126
  %v137 = vcombine.high %v127, %v127
  %vm138 = vcmask 31744
  %v140 = vsel %vm138, %v122, 0
  %vm142 = vcmask 1043456
  %v143 = vsel %vm142, %v124, 0
  %v145 = vsel %vm142, %v134, 0
  %v147 = vsel %vm142, %v125, 0
  %v149 = vsel %vm142, %v135, 0
  %v151 = vsel %vm142, %v126, 0
  %v153 = vsel %vm142, %v136, 0
  %v155 = vsel %vm142, %v127, 0
  %v157 = vsel %vm142, %v137, 0
  %v159 = vsel %vm142, %v128, 0
  %161 = vmatprep.subr.mxu0 %v145
  %162 = vmatpush1.msra.mxu0 %v143
  %163 = vmatprep.subr.mxu0 0.0
  %164 = vmatpush1.msra.mxu0 0.0
  %165 = vmatprep.subr.mxu0 0.0
  %166 = vmatpush1.msra.mxu0 0.0
  %167 = vmatprep.subr.mxu0 0.0
  %168 = vmatpush1.msra.mxu0 0.0
  %169 = vmatprep.subr.mxu0 0.0
  %170 = vmatpush1.msra.mxu0 0.0
  %171 = vmatprep.subr.mxu0 0.0
  %172 = vmatpush1.msra.mxu0 0.0
  %173 = vmatprep.subr.mxu0 0.0
  %174 = vmatpush1.msra.mxu0 0.0
  %175 = vmatprep.subr.mxu0 0.0
  %176 = vmatpush1.msra.mxu0 0.0
  %177 = vmatprep.subr.mxu0 0.0
  %178 = vmatpush1.msra.mxu0 0.0
  %179 = vmatprep.subr.mxu0 0.0
  %180 = vmatpush1.msra.mxu0 0.0
  %181 = vmatprep.subr.mxu0 0.0
  %182 = vmatpush1.msra.mxu0 0.0
  %183 = vmatprep.subr.mxu0 0.0
  %184 = vmatpush1.msra.mxu0 0.0
  %185 = vmatprep.subr.mxu0 0.0
  %186 = vmatpush1.msra.mxu0 0.0
  %187 = vmatprep.subr.mxu0 0.0
  %188 = vmatpush1.msra.mxu0 0.0
  %189 = vmatprep.subr.mxu0 0.0
  %190 = vmatpush1.msra.mxu0 0.0
  %191 = vmatprep.subr.mxu0 0.0
  %192 = vmatpush1.msra.mxu0 0.0
  %193 = vmatprep.subr.mxu0 0.0
  %194 = vmatpush1.msra.mxu0 0.0
  %195 = vmatprep.subr.mxu0 0.0
  %196 = vmatpush1.msra.mxu0 0.0
  %197 = vmatprep.subr.mxu0 0.0
  %198 = vmatpush1.msra.mxu0 0.0
  %199 = vmatprep.subr.mxu0 0.0
  %200 = vmatpush1.msra.mxu0 0.0
  %201 = vmatprep.subr.mxu0 0.0
  %202 = vmatpush1.msra.mxu0 0.0
  %203 = vmatprep.subr.mxu0 0.0
  %204 = vmatpush1.msra.mxu0 0.0
  %205 = vmatprep.subr.mxu0 0.0
  %206 = vmatpush1.msra.mxu0 0.0
  %207 = vmatprep.subr.mxu0 0.0
  %208 = vmatpush1.msra.mxu0 0.0
  %209 = vmatprep.subr.mxu0 0.0
  %210 = vmatpush1.msra.mxu0 0.0
  %211 = vmatprep.subr.mxu0 0.0
  %212 = vmatpush1.msra.mxu0 0.0
  %213 = vmatprep.subr.mxu0 0.0
  %214 = vmatpush1.msra.mxu0 0.0
  %215 = vmatprep.subr.mxu0 0.0
  %216 = vmatpush1.msra.mxu0 0.0
  %217 = vmatprep.subr.mxu0 0.0
  %218 = vmatpush1.msra.mxu0 0.0
  %219 = vmatprep.subr.mxu0 0.0
  %220 = vmatpush1.msra.mxu0 0.0
  %221 = vmatprep.subr.mxu0 0.0
  %222 = vmatpush1.msra.mxu0 0.0
  %223 = vmatprep.subr.mxu0 0.0
  %224 = vmatpush1.msra.mxu0 0.0
  %225 = vmatprep.mubr.f32.mxu0 0.0
  %226 = vmatmul.mubr.f32.gmra.mrb[0].mxu0 %v140
  %v227 = vpop.f32.mrb[0].mxu0
  %v228 = vadd.f32 0.0, %v227
  %v229 = vpop.f32.mrb[0].mxu0
  %v230 = vadd.f32 0.0, %v229
  %231 = vdwg.mxu0
  %232 = vmatprep.subr.mxu0 %v149
  %233 = vmatpush1.msra.mxu0 %v147
  %234 = vmatprep.subr.mxu0 0.0
  %235 = vmatpush1.msra.mxu0 0.0
  %236 = vmatprep.subr.mxu0 0.0
  %237 = vmatpush1.msra.mxu0 0.0
  %238 = vmatprep.subr.mxu0 0.0
  %239 = vmatpush1.msra.mxu0 0.0
  %240 = vmatprep.subr.mxu0 0.0
  %241 = vmatpush1.msra.mxu0 0.0
  %242 = vmatprep.subr.mxu0 0.0
  %243 = vmatpush1.msra.mxu0 0.0
  %244 = vmatprep.subr.mxu0 0.0
  %245 = vmatpush1.msra.mxu0 0.0
  %246 = vmatprep.subr.mxu0 0.0
  %247 = vmatpush1.msra.mxu0 0.0
  %248 = vmatprep.subr.mxu0 0.0
  %249 = vmatpush1.msra.mxu0 0.0
  %250 = vmatprep.subr.mxu0 0.0
  %251 = vmatpush1.msra.mxu0 0.0
  %252 = vmatprep.subr.mxu0 0.0
  %253 = vmatpush1.msra.mxu0 0.0
  %254 = vmatprep.subr.mxu0 0.0
  %255 = vmatpush1.msra.mxu0 0.0
  %256 = vmatprep.subr.mxu0 0.0
  %257 = vmatpush1.msra.mxu0 0.0
  %258 = vmatprep.subr.mxu0 0.0
  %259 = vmatpush1.msra.mxu0 0.0
  %260 = vmatprep.subr.mxu0 0.0
  %261 = vmatpush1.msra.mxu0 0.0
  %262 = vmatprep.subr.mxu0 0.0
  %263 = vmatpush1.msra.mxu0 0.0
  %264 = vmatprep.subr.mxu0 0.0
  %265 = vmatpush1.msra.mxu0 0.0
  %266 = vmatprep.subr.mxu0 0.0
  %267 = vmatpush1.msra.mxu0 0.0
  %268 = vmatprep.subr.mxu0 0.0
  %269 = vmatpush1.msra.mxu0 0.0
  %270 = vmatprep.subr.mxu0 0.0
  %271 = vmatpush1.msra.mxu0 0.0
  %272 = vmatprep.subr.mxu0 0.0
  %273 = vmatpush1.msra.mxu0 0.0
  %274 = vmatprep.subr.mxu0 0.0
  %275 = vmatpush1.msra.mxu0 0.0
  %276 = vmatprep.subr.mxu0 0.0
  %277 = vmatpush1.msra.mxu0 0.0
  %278 = vmatprep.subr.mxu0 0.0
  %279 = vmatpush1.msra.mxu0 0.0
  %280 = vmatprep.subr.mxu0 0.0
  %281 = vmatpush1.msra.mxu0 0.0
  %282 = vmatprep.subr.mxu0 0.0
  %283 = vmatpush1.msra.mxu0 0.0
  %284 = vmatprep.subr.mxu0 0.0
  %285 = vmatpush1.msra.mxu0 0.0
  %286 = vmatprep.subr.mxu0 0.0
  %287 = vmatpush1.msra.mxu0 0.0
  %288 = vmatprep.subr.mxu0 0.0
  %289 = vmatpush1.msra.mxu0 0.0
  %290 = vmatprep.subr.mxu0 0.0
  %291 = vmatpush1.msra.mxu0 0.0
  %292 = vmatprep.subr.mxu0 0.0
  %293 = vmatpush1.msra.mxu0 0.0
  %294 = vmatprep.subr.mxu0 0.0
  %295 = vmatpush1.msra.mxu0 0.0
  %296 = vmatprep.mubr.f32.mxu0 0.0
  %297 = vmatmul.mubr.f32.gmra.mrb[0].mxu0 %v140
  %v298 = vpop.f32.mrb[0].mxu0
  %v299 = vadd.f32 0.0, %v298
  %v300 = vpop.f32.mrb[0].mxu0
  %v301 = vadd.f32 0.0, %v300
  %302 = vdwg.mxu0
  %303 = vmatprep.subr.mxu0 %v153
  %304 = vmatpush1.msra.mxu0 %v151
  %305 = vmatprep.subr.mxu0 0.0
  %306 = vmatpush1.msra.mxu0 0.0
  %307 = vmatprep.subr.mxu0 0.0
  %308 = vmatpush1.msra.mxu0 0.0
  %309 = vmatprep.subr.mxu0 0.0
  %310 = vmatpush1.msra.mxu0 0.0
  %311 = vmatprep.subr.mxu0 0.0
  %312 = vmatpush1.msra.mxu0 0.0
  %313 = vmatprep.subr.mxu0 0.0
  %314 = vmatpush1.msra.mxu0 0.0
  %315 = vmatprep.subr.mxu0 0.0
  %316 = vmatpush1.msra.mxu0 0.0
  %317 = vmatprep.subr.mxu0 0.0
  %318 = vmatpush1.msra.mxu0 0.0
  %319 = vmatprep.subr.mxu0 0.0
  %320 = vmatpush1.msra.mxu0 0.0
  %321 = vmatprep.subr.mxu0 0.0
  %322 = vmatpush1.msra.mxu0 0.0
  %323 = vmatprep.subr.mxu0 0.0
  %324 = vmatpush1.msra.mxu0 0.0
  %325 = vmatprep.subr.mxu0 0.0
  %326 = vmatpush1.msra.mxu0 0.0
  %327 = vmatprep.subr.mxu0 0.0
  %328 = vmatpush1.msra.mxu0 0.0
  %329 = vmatprep.subr.mxu0 0.0
  %330 = vmatpush1.msra.mxu0 0.0
  %331 = vmatprep.subr.mxu0 0.0
  %332 = vmatpush1.msra.mxu0 0.0
  %333 = vmatprep.subr.mxu0 0.0
  %334 = vmatpush1.msra.mxu0 0.0
  %335 = vmatprep.subr.mxu0 0.0
  %336 = vmatpush1.msra.mxu0 0.0
  %337 = vmatprep.subr.mxu0 0.0
  %338 = vmatpush1.msra.mxu0 0.0
  %339 = vmatprep.subr.mxu0 0.0
  %340 = vmatpush1.msra.mxu0 0.0
  %341 = vmatprep.subr.mxu0 0.0
  %342 = vmatpush1.msra.mxu0 0.0
  %343 = vmatprep.subr.mxu0 0.0
  %344 = vmatpush1.msra.mxu0 0.0
  %345 = vmatprep.subr.mxu0 0.0
  %346 = vmatpush1.msra.mxu0 0.0
  %347 = vmatprep.subr.mxu0 0.0
  %348 = vmatpush1.msra.mxu0 0.0
  %349 = vmatprep.subr.mxu0 0.0
  %350 = vmatpush1.msra.mxu0 0.0
  %351 = vmatprep.subr.mxu0 0.0
  %352 = vmatpush1.msra.mxu0 0.0
  %353 = vmatprep.subr.mxu0 0.0
  %354 = vmatpush1.msra.mxu0 0.0
  %355 = vmatprep.subr.mxu0 0.0
  %356 = vmatpush1.msra.mxu0 0.0
  %357 = vmatprep.subr.mxu0 0.0
  %358 = vmatpush1.msra.mxu0 0.0
  %359 = vmatprep.subr.mxu0 0.0
  %360 = vmatpush1.msra.mxu0 0.0
  %361 = vmatprep.subr.mxu0 0.0
  %362 = vmatpush1.msra.mxu0 0.0
  %363 = vmatprep.subr.mxu0 0.0
  %364 = vmatpush1.msra.mxu0 0.0
  %365 = vmatprep.subr.mxu0 0.0
  %366 = vmatpush1.msra.mxu0 0.0
  %367 = vmatprep.mubr.f32.mxu0 0.0
  %368 = vmatmul.mubr.f32.gmra.mrb[0].mxu0 %v140
  %v369 = vpop.f32.mrb[0].mxu0
  %v370 = vadd.f32 0.0, %v369
  %v371 = vpop.f32.mrb[0].mxu0
  %v372 = vadd.f32 0.0, %v371
  %373 = vdwg.mxu0
  %374 = vmatprep.subr.mxu0 %v157
  %375 = vmatpush1.msra.mxu0 %v155
  %376 = vmatprep.subr.mxu0 0.0
  %377 = vmatpush1.msra.mxu0 0.0
  %378 = vmatprep.subr.mxu0 0.0
  %379 = vmatpush1.msra.mxu0 0.0
  %380 = vmatprep.subr.mxu0 0.0
  %381 = vmatpush1.msra.mxu0 0.0
  %382 = vmatprep.subr.mxu0 0.0
  %383 = vmatpush1.msra.mxu0 0.0
  %384 = vmatprep.subr.mxu0 0.0
  %385 = vmatpush1.msra.mxu0 0.0
  %386 = vmatprep.subr.mxu0 0.0
  %387 = vmatpush1.msra.mxu0 0.0
  %388 = vmatprep.subr.mxu0 0.0
  %389 = vmatpush1.msra.mxu0 0.0
  %390 = vmatprep.subr.mxu0 0.0
  %391 = vmatpush1.msra.mxu0 0.0
  %392 = vmatprep.subr.mxu0 0.0
  %393 = vmatpush1.msra.mxu0 0.0
  %394 = vmatprep.subr.mxu0 0.0
  %395 = vmatpush1.msra.mxu0 0.0
  %396 = vmatprep.subr.mxu0 0.0
  %397 = vmatpush1.msra.mxu0 0.0
  %398 = vmatprep.subr.mxu0 0.0
  %399 = vmatpush1.msra.mxu0 0.0
  %400 = vmatprep.subr.mxu0 0.0
  %401 = vmatpush1.msra.mxu0 0.0
  %402 = vmatprep.subr.mxu0 0.0
  %403 = vmatpush1.msra.mxu0 0.0
  %404 = vmatprep.subr.mxu0 0.0
  %405 = vmatpush1.msra.mxu0 0.0
  %406 = vmatprep.subr.mxu0 0.0
  %407 = vmatpush1.msra.mxu0 0.0
  %408 = vmatprep.subr.mxu0 0.0
  %409 = vmatpush1.msra.mxu0 0.0
  %410 = vmatprep.subr.mxu0 0.0
  %411 = vmatpush1.msra.mxu0 0.0
  %412 = vmatprep.subr.mxu0 0.0
  %413 = vmatpush1.msra.mxu0 0.0
  %414 = vmatprep.subr.mxu0 0.0
  %415 = vmatpush1.msra.mxu0 0.0
  %416 = vmatprep.subr.mxu0 0.0
  %417 = vmatpush1.msra.mxu0 0.0
  %418 = vmatprep.subr.mxu0 0.0
  %419 = vmatpush1.msra.mxu0 0.0
  %420 = vmatprep.subr.mxu0 0.0
  %421 = vmatpush1.msra.mxu0 0.0
  %422 = vmatprep.subr.mxu0 0.0
  %423 = vmatpush1.msra.mxu0 0.0
  %424 = vmatprep.subr.mxu0 0.0
  %425 = vmatpush1.msra.mxu0 0.0
  %426 = vmatprep.subr.mxu0 0.0
  %427 = vmatpush1.msra.mxu0 0.0
  %428 = vmatprep.subr.mxu0 0.0
  %429 = vmatpush1.msra.mxu0 0.0
  %430 = vmatprep.subr.mxu0 0.0
  %431 = vmatpush1.msra.mxu0 0.0
  %432 = vmatprep.subr.mxu0 0.0
  %433 = vmatpush1.msra.mxu0 0.0
  %434 = vmatprep.subr.mxu0 0.0
  %435 = vmatpush1.msra.mxu0 0.0
  %436 = vmatprep.subr.mxu0 0.0
  %437 = vmatpush1.msra.mxu0 0.0
  %438 = vmatprep.mubr.f32.mxu0 0.0
  %439 = vmatmul.mubr.f32.gmra.mrb[0].mxu0 %v140
  %v440 = vpop.f32.mrb[0].mxu0
  %v441 = vadd.f32 0.0, %v440
  %v442 = vpop.f32.mrb[0].mxu0
  %v443 = vadd.f32 0.0, %v442
  %444 = vdwg.mxu0
  %445 = vmatprep.subr.mxu0 0.0
  %446 = vmatpush1.msra.mxu0 %v159
  %447 = vmatprep.subr.mxu0 0.0
  %448 = vmatpush1.msra.mxu0 0.0
  %449 = vmatprep.subr.mxu0 0.0
  %450 = vmatpush1.msra.mxu0 0.0
  %451 = vmatprep.subr.mxu0 0.0
  %452 = vmatpush1.msra.mxu0 0.0
  %453 = vmatprep.subr.mxu0 0.0
  %454 = vmatpush1.msra.mxu0 0.0
  %455 = vmatprep.subr.mxu0 0.0
  %456 = vmatpush1.msra.mxu0 0.0
  %457 = vmatprep.subr.mxu0 0.0
  %458 = vmatpush1.msra.mxu0 0.0
  %459 = vmatprep.subr.mxu0 0.0
  %460 = vmatpush1.msra.mxu0 0.0
  %461 = vmatprep.subr.mxu0 0.0
  %462 = vmatpush1.msra.mxu0 0.0
  %463 = vmatprep.subr.mxu0 0.0
  %464 = vmatpush1.msra.mxu0 0.0
  %465 = vmatprep.subr.mxu0 0.0
  %466 = vmatpush1.msra.mxu0 0.0
  %467 = vmatprep.subr.mxu0 0.0
  %468 = vmatpush1.msra.mxu0 0.0
  %469 = vmatprep.subr.mxu0 0.0
  %470 = vmatpush1.msra.mxu0 0.0
  %471 = vmatprep.subr.mxu0 0.0
  %472 = vmatpush1.msra.mxu0 0.0
  %473 = vmatprep.subr.mxu0 0.0
  %474 = vmatpush1.msra.mxu0 0.0
  %475 = vmatprep.subr.mxu0 0.0
  %476 = vmatpush1.msra.mxu0 0.0
  %477 = vmatprep.subr.mxu0 0.0
  %478 = vmatpush1.msra.mxu0 0.0
  %479 = vmatprep.subr.mxu0 0.0
  %480 = vmatpush1.msra.mxu0 0.0
  %481 = vmatprep.subr.mxu0 0.0
  %482 = vmatpush1.msra.mxu0 0.0
  %483 = vmatprep.subr.mxu0 0.0
  %484 = vmatpush1.msra.mxu0 0.0
  %485 = vmatprep.subr.mxu0 0.0
  %486 = vmatpush1.msra.mxu0 0.0
  %487 = vmatprep.subr.mxu0 0.0
  %488 = vmatpush1.msra.mxu0 0.0
  %489 = vmatprep.subr.mxu0 0.0
  %490 = vmatpush1.msra.mxu0 0.0
  %491 = vmatprep.subr.mxu0 0.0
  %492 = vmatpush1.msra.mxu0 0.0
  %493 = vmatprep.subr.mxu0 0.0
  %494 = vmatpush1.msra.mxu0 0.0
  %495 = vmatprep.subr.mxu0 0.0
  %496 = vmatpush1.msra.mxu0 0.0
  %497 = vmatprep.subr.mxu0 0.0
  %498 = vmatpush1.msra.mxu0 0.0
  %499 = vmatprep.subr.mxu0 0.0
  %500 = vmatpush1.msra.mxu0 0.0
  %501 = vmatprep.subr.mxu0 0.0
  %502 = vmatpush1.msra.mxu0 0.0
  %503 = vmatprep.subr.mxu0 0.0
  %504 = vmatpush1.msra.mxu0 0.0
  %505 = vmatprep.subr.mxu0 0.0
  %506 = vmatpush1.msra.mxu0 0.0
  %507 = vmatprep.subr.mxu0 0.0
  %508 = vmatpush1.msra.mxu0 0.0
  %509 = vmatprep.mubr.f32.mxu0 0.0
  %510 = vmatmul.mubr.f32.gmra.mrb[0].mxu0 %v140
  %v511 = vpop.f32.mrb[0].mxu0
  %v512 = vadd.f32 0.0, %v511
  %v513 = vpop.f32.mrb[0].mxu0
  %514 = vdwg.mxu0
  %v515 = vxor.u32 %v228, 2147483648
  %v516 = vxor.u32 %v230, 2147483648
  %v517 = vxor.u32 %v299, 2147483648
  %v518 = vxor.u32 %v301, 2147483648
  %v519 = vxor.u32 %v370, 2147483648
  %v520 = vxor.u32 %v372, 2147483648
  %v521 = vxor.u32 %v441, 2147483648
  %v522 = vxor.u32 %v443, 2147483648
  %v523 = vxor.u32 %v512, 2147483648
  %v524 = vmul.f32 %v515, 1.442695
  %v525 = vpow.pop %v524
  %v526 = vmul.f32 %v516, 1.442695
  %v527 = vpow.pop %v526
  %v528 = vmul.f32 %v517, 1.442695
  %v529 = vpow.pop %v528
  %v530 = vmul.f32 %v518, 1.442695
  %v531 = vpow.pop %v530
  %v532 = vmul.f32 %v519, 1.442695
  %v533 = vpow.pop %v532
  %v534 = vmul.f32 %v520, 1.442695
  %v535 = vpow.pop %v534
  %v536 = vmul.f32 %v521, 1.442695
  %v537 = vpow.pop %v536
  %v538 = vmul.f32 %v522, 1.442695
  %v539 = vpow.pop %v538
  %v540 = vmul.f32 %v523, 1.442695
  %v541 = vpow.pop %v540
  %v542 = vadd.f32 %v525, 1.0
  %v543 = vadd.f32 %v527, 1.0
  %v544 = vadd.f32 %v529, 1.0
  %v545 = vadd.f32 %v531, 1.0
  %v546 = vadd.f32 %v533, 1.0
  %v547 = vadd.f32 %v535, 1.0
  %v548 = vadd.f32 %v537, 1.0
  %v549 = vadd.f32 %v539, 1.0
  %v550 = vadd.f32 %v541, 1.0
  %v551 = vrcp.pop %v542
  %v552 = vmul.f32 1.0, %v551
  %v553 = vrcp.pop %v543
  %v554 = vmul.f32 1.0, %v553
  %v555 = vrcp.pop %v544
  %v556 = vmul.f32 1.0, %v555
  %v557 = vrcp.pop %v545
  %v558 = vmul.f32 1.0, %v557
  %v559 = vrcp.pop %v546
  %v560 = vmul.f32 1.0, %v559
  %v561 = vrcp.pop %v547
  %v562 = vmul.f32 1.0, %v561
  %v563 = vrcp.pop %v548
  %v564 = vmul.f32 1.0, %v563
  %v565 = vrcp.pop %v549
  %v566 = vmul.f32 1.0, %v565
  %v567 = vrcp.pop %v550
  %v568 = vmul.f32 1.0, %v567
  %v569 = vmul.f32 %v228, %v552
  %v570 = vmul.f32 %v230, %v554
  %v571 = vmul.f32 %v299, %v556
  %v572 = vmul.f32 %v301, %v558
  %v573 = vmul.f32 %v370, %v560
  %v574 = vmul.f32 %v372, %v562
  %v575 = vmul.f32 %v441, %v564
  %v576 = vmul.f32 %v443, %v566
  %v577 = vmul.f32 %v512, %v568
  %v578 = vld [vmem:[%s13] sm:$0xff]
  %580 = vset.pattern.permute.xlu0 0
  %581 = vperm.xlu0 %580, %v578
  %v582 = vpop.permute.xlu0 %581
  %v584 = vmul.f32 %v582, %v569
  %v585 = vadd.f32 %v584, 0.0
  %s586 = scalar_lea.vmem %s13, 8
  %v587 = vld [vmem:[%s586] sm:$0xff]
  %589 = vset.pattern.permute.xlu0 0
  %590 = vperm.xlu0 %589, %v587
  %v591 = vpop.permute.xlu0 %590
  %v593 = vmul.f32 %v591, %v570
  %v594 = vadd.f32 %v585, %v593
  %s595 = scalar_lea.vmem %s13, 16
  %v596 = vld [vmem:[%s595] sm:$0xff]
  %598 = vset.pattern.permute.xlu0 0
  %599 = vperm.xlu0 %598, %v596
  %v600 = vpop.permute.xlu0 %599
  %v602 = vmul.f32 %v600, %v571
  %v603 = vadd.f32 %v594, %v602
  %s604 = scalar_lea.vmem %s13, 24
  %v605 = vld [vmem:[%s604] sm:$0xff]
  %607 = vset.pattern.permute.xlu0 0
  %608 = vperm.xlu0 %607, %v605
  %v609 = vpop.permute.xlu0 %608
  %v611 = vmul.f32 %v609, %v572
  %v612 = vadd.f32 %v603, %v611
  %s613 = scalar_lea.vmem %s13, 32
  %v614 = vld [vmem:[%s613] sm:$0xff]
  %616 = vset.pattern.permute.xlu0 0
  %617 = vperm.xlu0 %616, %v614
  %v618 = vpop.permute.xlu0 %617
  %v620 = vmul.f32 %v618, %v573
  %v621 = vadd.f32 %v612, %v620
  %s622 = scalar_lea.vmem %s13, 40
  %v623 = vld [vmem:[%s622] sm:$0xff]
  %625 = vset.pattern.permute.xlu0 0
  %626 = vperm.xlu0 %625, %v623
  %v627 = vpop.permute.xlu0 %626
  %v629 = vmul.f32 %v627, %v574
  %v630 = vadd.f32 %v621, %v629
  %s631 = scalar_lea.vmem %s13, 48
  %v632 = vld [vmem:[%s631] sm:$0xff]
  %634 = vset.pattern.permute.xlu0 0
  %635 = vperm.xlu0 %634, %v632
  %v636 = vpop.permute.xlu0 %635
  %v638 = vmul.f32 %v636, %v575
  %v639 = vadd.f32 %v630, %v638
  %s640 = scalar_lea.vmem %s13, 56
  %v641 = vld [vmem:[%s640] sm:$0xff]
  %643 = vset.pattern.permute.xlu0 0
  %644 = vperm.xlu0 %643, %v641
  %v645 = vpop.permute.xlu0 %644
  %v647 = vmul.f32 %v645, %v576
  %v648 = vadd.f32 %v639, %v647
  %s649 = scalar_lea.vmem %s13, 64
  %v650 = vld [vmem:[%s649] sm:$0xff]
  %652 = vset.pattern.permute.xlu0 0
  %653 = vperm.xlu0 %652, %v650
  %v654 = vpop.permute.xlu0 %653
  %v656 = vmul.f32 %v654, %v577
  %v657 = vadd.f32 %v648, %v656
  %v658 = vxor.u32 %v657, 2147483648
  %v659 = vmul.f32 %v658, 1.442695
  %v660 = vpow.pop %v659
  %v661 = vadd.f32 %v660, 1.0
  %v662 = vrcp.pop %v661
  %v663 = vmul.f32 1.0, %v662
  %v664 = vmul.f32 %v657, %v663
  %v665 = vld [vmem:[%s17] sm:$0xff]
  %v666 = vld [vmem:[%s3] sm:$0x3]
  %v667 = vxor.u32 %v666, 2147483648
  %v668 = vmul.f32 %v667, 1.442695
  %v669 = vpow.pop %v668
  %v670 = vadd.f32 %v669, 1.0
  %v671 = vrcp.pop %v670
  %v672 = vmul.f32 1.0, %v671
  %v673 = vmul.f32 %v666, %v672
  %v674 = vld [vmem:[%s19] sm:$0xff]
  %676 = vset.pattern.permute.xlu0 0
  %677 = vperm.xlu0 %676, %v674
  %v678 = vpop.permute.xlu0 %677
  %vm680 = vcmask 64512
  %v682 = vsel %vm680, %v665, 0
  %v685 = vsel %vm680, %v673, 0
  %687 = vmatprep.subr.mxu0 0.0
  %688 = vmatpush1.xpose.msra.mxu0 %v685
  %689 = vmatprep.subr.mxu0 0.0
  %690 = vmatpush1.xpose.msra.mxu0 0.0
  %691 = vmatprep.subr.mxu0 0.0
  %692 = vmatpush1.xpose.msra.mxu0 0.0
  %693 = vmatprep.subr.mxu0 0.0
  %694 = vmatpush1.xpose.msra.mxu0 0.0
  %695 = vmatprep.subr.mxu0 0.0
  %696 = vmatpush1.xpose.msra.mxu0 0.0
  %697 = vmatprep.subr.mxu0 0.0
  %698 = vmatpush1.xpose.msra.mxu0 0.0
  %699 = vmatprep.subr.mxu0 0.0
  %700 = vmatpush1.xpose.msra.mxu0 0.0
  %701 = vmatprep.subr.mxu0 0.0
  %702 = vmatpush1.xpose.msra.mxu0 0.0
  %703 = vmatprep.subr.mxu0 0.0
  %704 = vmatpush1.xpose.msra.mxu0 0.0
  %705 = vmatprep.subr.mxu0 0.0
  %706 = vmatpush1.xpose.msra.mxu0 0.0
  %707 = vmatprep.subr.mxu0 0.0
  %708 = vmatpush1.xpose.msra.mxu0 0.0
  %709 = vmatprep.subr.mxu0 0.0
  %710 = vmatpush1.xpose.msra.mxu0 0.0
  %711 = vmatprep.subr.mxu0 0.0
  %712 = vmatpush1.xpose.msra.mxu0 0.0
  %713 = vmatprep.subr.mxu0 0.0
  %714 = vmatpush1.xpose.msra.mxu0 0.0
  %715 = vmatprep.subr.mxu0 0.0
  %716 = vmatpush1.xpose.msra.mxu0 0.0
  %717 = vmatprep.subr.mxu0 0.0
  %718 = vmatpush1.xpose.msra.mxu0 0.0
  %719 = vmatprep.subr.mxu0 0.0
  %720 = vmatpush1.xpose.msra.mxu0 0.0
  %721 = vmatprep.subr.mxu0 0.0
  %722 = vmatpush1.xpose.msra.mxu0 0.0
  %723 = vmatprep.subr.mxu0 0.0
  %724 = vmatpush1.xpose.msra.mxu0 0.0
  %725 = vmatprep.subr.mxu0 0.0
  %726 = vmatpush1.xpose.msra.mxu0 0.0
  %727 = vmatprep.subr.mxu0 0.0
  %728 = vmatpush1.xpose.msra.mxu0 0.0
  %729 = vmatprep.subr.mxu0 0.0
  %730 = vmatpush1.xpose.msra.mxu0 0.0
  %731 = vmatprep.subr.mxu0 0.0
  %732 = vmatpush1.xpose.msra.mxu0 0.0
  %733 = vmatprep.subr.mxu0 0.0
  %734 = vmatpush1.xpose.msra.mxu0 0.0
  %735 = vmatprep.subr.mxu0 0.0
  %736 = vmatpush1.xpose.msra.mxu0 0.0
  %737 = vmatprep.subr.mxu0 0.0
  %738 = vmatpush1.xpose.msra.mxu0 0.0
  %739 = vmatprep.subr.mxu0 0.0
  %740 = vmatpush1.xpose.msra.mxu0 0.0
  %741 = vmatprep.subr.mxu0 0.0
  %742 = vmatpush1.xpose.msra.mxu0 0.0
  %743 = vmatprep.subr.mxu0 0.0
  %744 = vmatpush1.xpose.msra.mxu0 0.0
  %745 = vmatprep.subr.mxu0 0.0
  %746 = vmatpush1.xpose.msra.mxu0 0.0
  %747 = vmatprep.subr.mxu0 0.0
  %748 = vmatpush1.xpose.msra.mxu0 0.0
  %749 = vmatprep.subr.mxu0 0.0
  %750 = vmatpush1.xpose.msra.mxu0 0.0
  %751 = vmatprep.mubr.f32.mxu0 0.0
  %752 = vmatmul.mubr.f32.gmra.mrb[0].mxu0 %v682
  %v753 = vpop.f32.mrb[0].mxu0
  %v754 = vadd.f32 %v678, %v753
  %v755 = vpop.f32.mrb[0].mxu0
  %756 = vdwg.mxu0
  %v757 = vld [vmem:[%s5] sm:$0x3]
  %vm758 = vcmask 15360
  %v760 = vsel %vm758, %v754, 0
  %vm762 = vcmask 1041408
  %v764 = vsel %vm762, %v757, 0
  %766 = vmatprep.subr.mxu0 0.0
  %767 = vmatpush1.msra.mxu0 %v764
  %768 = vmatprep.subr.mxu0 0.0
  %769 = vmatpush1.msra.mxu0 0.0
  %770 = vmatprep.subr.mxu0 0.0
  %771 = vmatpush1.msra.mxu0 0.0
  %772 = vmatprep.subr.mxu0 0.0
  %773 = vmatpush1.msra.mxu0 0.0
  %774 = vmatprep.subr.mxu0 0.0
  %775 = vmatpush1.msra.mxu0 0.0
  %776 = vmatprep.subr.mxu0 0.0
  %777 = vmatpush1.msra.mxu0 0.0
  %778 = vmatprep.subr.mxu0 0.0
  %779 = vmatpush1.msra.mxu0 0.0
  %780 = vmatprep.subr.mxu0 0.0
  %781 = vmatpush1.msra.mxu0 0.0
  %782 = vmatprep.subr.mxu0 0.0
  %783 = vmatpush1.msra.mxu0 0.0
  %784 = vmatprep.subr.mxu0 0.0
  %785 = vmatpush1.msra.mxu0 0.0
  %786 = vmatprep.subr.mxu0 0.0
  %787 = vmatpush1.msra.mxu0 0.0
  %788 = vmatprep.subr.mxu0 0.0
  %789 = vmatpush1.msra.mxu0 0.0
  %790 = vmatprep.subr.mxu0 0.0
  %791 = vmatpush1.msra.mxu0 0.0
  %792 = vmatprep.subr.mxu0 0.0
  %793 = vmatpush1.msra.mxu0 0.0
  %794 = vmatprep.subr.mxu0 0.0
  %795 = vmatpush1.msra.mxu0 0.0
  %796 = vmatprep.subr.mxu0 0.0
  %797 = vmatpush1.msra.mxu0 0.0
  %798 = vmatprep.subr.mxu0 0.0
  %799 = vmatpush1.msra.mxu0 0.0
  %800 = vmatprep.subr.mxu0 0.0
  %801 = vmatpush1.msra.mxu0 0.0
  %802 = vmatprep.subr.mxu0 0.0
  %803 = vmatpush1.msra.mxu0 0.0
  %804 = vmatprep.subr.mxu0 0.0
  %805 = vmatpush1.msra.mxu0 0.0
  %806 = vmatprep.subr.mxu0 0.0
  %807 = vmatpush1.msra.mxu0 0.0
  %808 = vmatprep.subr.mxu0 0.0
  %809 = vmatpush1.msra.mxu0 0.0
  %810 = vmatprep.subr.mxu0 0.0
  %811 = vmatpush1.msra.mxu0 0.0
  %812 = vmatprep.subr.mxu0 0.0
  %813 = vmatpush1.msra.mxu0 0.0
  %814 = vmatprep.subr.mxu0 0.0
  %815 = vmatpush1.msra.mxu0 0.0
  %816 = vmatprep.subr.mxu0 0.0
  %817 = vmatpush1.msra.mxu0 0.0
  %818 = vmatprep.subr.mxu0 0.0
  %819 = vmatpush1.msra.mxu0 0.0
  %820 = vmatprep.subr.mxu0 0.0
  %821 = vmatpush1.msra.mxu0 0.0
  %822 = vmatprep.subr.mxu0 0.0
  %823 = vmatpush1.msra.mxu0 0.0
  %824 = vmatprep.subr.mxu0 0.0
  %825 = vmatpush1.msra.mxu0 0.0
  %826 = vmatprep.subr.mxu0 0.0
  %827 = vmatpush1.msra.mxu0 0.0
  %828 = vmatprep.subr.mxu0 0.0
  %829 = vmatpush1.msra.mxu0 0.0
  %830 = vmatprep.mubr.f32.mxu0 0.0
  %831 = vmatmul.mubr.f32.gmra.mrb[0].mxu0 %v760
  %v832 = vpop.f32.mrb[0].mxu0
  %v833 = vadd.f32 0.0, %v832
  %v834 = vpop.f32.mrb[0].mxu0
  %835 = vdwg.mxu0
  %v837 = vsel %vm680, %v123, 0
  %839 = vmatprep.subr.mxu0 0.0
  %840 = vmatpush1.msra.mxu0 %v664
  %841 = vmatprep.subr.mxu0 0.0
  %842 = vmatpush1.msra.mxu0 0.0
  %843 = vmatprep.subr.mxu0 0.0
  %844 = vmatpush1.msra.mxu0 0.0
  %845 = vmatprep.subr.mxu0 0.0
  %846 = vmatpush1.msra.mxu0 0.0
  %847 = vmatprep.subr.mxu0 0.0
  %848 = vmatpush1.msra.mxu0 0.0
  %849 = vmatprep.subr.mxu0 0.0
  %850 = vmatpush1.msra.mxu0 0.0
  %851 = vmatprep.subr.mxu0 0.0
  %852 = vmatpush1.msra.mxu0 0.0
  %853 = vmatprep.subr.mxu0 0.0
  %854 = vmatpush1.msra.mxu0 0.0
  %855 = vmatprep.subr.mxu0 0.0
  %856 = vmatpush1.msra.mxu0 0.0
  %857 = vmatprep.subr.mxu0 0.0
  %858 = vmatpush1.msra.mxu0 0.0
  %859 = vmatprep.subr.mxu0 0.0
  %860 = vmatpush1.msra.mxu0 0.0
  %861 = vmatprep.subr.mxu0 0.0
  %862 = vmatpush1.msra.mxu0 0.0
  %863 = vmatprep.subr.mxu0 0.0
  %864 = vmatpush1.msra.mxu0 0.0
  %865 = vmatprep.subr.mxu0 0.0
  %866 = vmatpush1.msra.mxu0 0.0
  %867 = vmatprep.subr.mxu0 0.0
  %868 = vmatpush1.msra.mxu0 0.0
  %869 = vmatprep.subr.mxu0 0.0
  %870 = vmatpush1.msra.mxu0 0.0
  %871 = vmatprep.subr.mxu0 0.0
  %872 = vmatpush1.msra.mxu0 0.0
  %873 = vmatprep.subr.mxu0 0.0
  %874 = vmatpush1.msra.mxu0 0.0
  %875 = vmatprep.subr.mxu0 0.0
  %876 = vmatpush1.msra.mxu0 0.0
  %877 = vmatprep.subr.mxu0 0.0
  %878 = vmatpush1.msra.mxu0 0.0
  %879 = vmatprep.subr.mxu0 0.0
  %880 = vmatpush1.msra.mxu0 0.0
  %881 = vmatprep.subr.mxu0 0.0
  %882 = vmatpush1.msra.mxu0 0.0
  %883 = vmatprep.subr.mxu0 0.0
  %884 = vmatpush1.msra.mxu0 0.0
  %885 = vmatprep.subr.mxu0 0.0
  %886 = vmatpush1.msra.mxu0 0.0
  %887 = vmatprep.subr.mxu0 0.0
  %888 = vmatpush1.msra.mxu0 0.0
  %889 = vmatprep.subr.mxu0 0.0
  %890 = vmatpush1.msra.mxu0 0.0
  %891 = vmatprep.subr.mxu0 0.0
  %892 = vmatpush1.msra.mxu0 0.0
  %893 = vmatprep.subr.mxu0 0.0
  %894 = vmatpush1.msra.mxu0 0.0
  %895 = vmatprep.subr.mxu0 0.0
  %896 = vmatpush1.msra.mxu0 0.0
  %897 = vmatprep.subr.mxu0 0.0
  %898 = vmatpush1.msra.mxu0 0.0
  %899 = vmatprep.subr.mxu0 0.0
  %900 = vmatpush1.msra.mxu0 0.0
  %901 = vmatprep.subr.mxu0 0.0
  %902 = vmatpush1.msra.mxu0 0.0
  %903 = vmatprep.mubr.f32.mxu0 0.0
  %904 = vmatmul.mubr.f32.gmra.mrb[0].mxu0 %v837
  %v905 = vpop.f32.mrb[0].mxu0
  %v906 = vadd.f32 %v833, %v905
  %v907 = vpop.f32.mrb[0].mxu0
  %908 = vdwg.mxu0
  %909 = vrot.lane.b32.xlu0 %v906, 9
  %v910 = vpop.permute.xlu0 %909
  %v911 = vld [vmem:[%s7] sm:$0x1]
  %v913 = vlaneseq
  %v914 = vshrl.u32 %v913, 7
  %v915 = vsub.s32 0, %v914
  %v916 = vrot.slane %v911, %v915
  %v918 = vmul.f32 %v910, %v916
  %919 = vrot.lane.b32.xlu0 %v906, 8
  %v920 = vpop.permute.xlu0 %919
  %s921 = scalar_lea.vmem %s7, 1
  %v922 = vld [vmem:[%s921] sm:$0x1]
  %v924 = vlaneseq
  %v925 = vshrl.u32 %v924, 7
  %v926 = vsub.s32 0, %v925
  %v927 = vrot.slane %v922, %v926
  %v929 = vmul.f32 %v920, %v927
  %930 = vrot.lane.b32.xlu0 %v906, 7
  %v931 = vpop.permute.xlu0 %930
  %s932 = scalar_lea.vmem %s7, 2
  %v933 = vld [vmem:[%s932] sm:$0x1]
  %v935 = vlaneseq
  %v936 = vshrl.u32 %v935, 7
  %v937 = vsub.s32 0, %v936
  %v938 = vrot.slane %v933, %v937
  %v940 = vmul.f32 %v931, %v938
  %941 = vrot.lane.b32.xlu0 %v906, 1
  %v942 = vpop.permute.xlu0 %941
  %s943 = scalar_lea.vmem %s7, 3
  %v944 = vld [vmem:[%s943] sm:$0x1]
  %v946 = vlaneseq
  %v947 = vshrl.u32 %v946, 7
  %v948 = vsub.s32 0, %v947
  %v949 = vrot.slane %v944, %v948
  %v951 = vmul.f32 %v942, %v949
  %s952 = scalar_lea.vmem %s7, 4
  %v953 = vld [vmem:[%s952] sm:$0x1]
  %v955 = vlaneseq
  %v956 = vshrl.u32 %v955, 7
  %v957 = vsub.s32 0, %v956
  %v958 = vrot.slane %v953, %v957
  %v960 = vmul.f32 %v906, %v958
  %961 = vrot.lane.b32.xlu0 %v906, 127
  %v962 = vpop.permute.xlu0 %961
  %s963 = scalar_lea.vmem %s7, 5
  %v964 = vld [vmem:[%s963] sm:$0x1]
  %v966 = vlaneseq
  %v967 = vshrl.u32 %v966, 7
  %v968 = vsub.s32 0, %v967
  %v969 = vrot.slane %v964, %v968
  %v971 = vmul.f32 %v962, %v969
  %972 = vrot.lane.b32.xlu0 %v906, 121
  %v973 = vpop.permute.xlu0 %972
  %s974 = scalar_lea.vmem %s7, 6
  %v975 = vld [vmem:[%s974] sm:$0x1]
  %v977 = vlaneseq
  %v978 = vshrl.u32 %v977, 7
  %v979 = vsub.s32 0, %v978
  %v980 = vrot.slane %v975, %v979
  %v982 = vmul.f32 %v973, %v980
  %983 = vrot.lane.b32.xlu0 %v906, 120
  %v984 = vpop.permute.xlu0 %983
  %s985 = scalar_lea.vmem %s7, 7
  %v986 = vld [vmem:[%s985] sm:$0x1]
  %v988 = vlaneseq
  %v989 = vshrl.u32 %v988, 7
  %v990 = vsub.s32 0, %v989
  %v991 = vrot.slane %v986, %v990
  %v993 = vmul.f32 %v984, %v991
  %994 = vrot.lane.b32.xlu0 %v906, 119
  %v995 = vpop.permute.xlu0 %994
  %s996 = scalar_lea.vmem %s7, 8
  %v997 = vld [vmem:[%s996] sm:$0x1]
  %v999 = vlaneseq
  %v1000 = vshrl.u32 %v999, 7
  %v1001 = vsub.s32 0, %v1000
  %v1002 = vrot.slane %v997, %v1001
  %v1004 = vmul.f32 %v995, %v1002
  %v1005 = vld [vmem:[%s21] sm:$0xff]
  %vm1006 = vcmask 588800
  %v1008 = vsel %vm1006, %v1005, 0
  %1010 = vmatprep.subr.mxu0 0.0
  %1011 = vmatpush1.msra.mxu0 %v918
  %1012 = vmatprep.subr.mxu0 0.0
  %1013 = vmatpush1.msra.mxu0 %v929
  %1014 = vmatprep.subr.mxu0 0.0
  %1015 = vmatpush1.msra.mxu0 %v940
  %1016 = vmatprep.subr.mxu0 0.0
  %1017 = vmatpush1.msra.mxu0 %v951
  %1018 = vmatprep.subr.mxu0 0.0
  %1019 = vmatpush1.msra.mxu0 %v960
  %1020 = vmatprep.subr.mxu0 0.0
  %1021 = vmatpush1.msra.mxu0 %v971
  %1022 = vmatprep.subr.mxu0 0.0
  %1023 = vmatpush1.msra.mxu0 %v982
  %1024 = vmatprep.subr.mxu0 0.0
  %1025 = vmatpush1.msra.mxu0 %v993
  %1026 = vmatprep.subr.mxu0 0.0
  %1027 = vmatpush1.msra.mxu0 %v1004
  %1028 = vmatprep.subr.mxu0 0.0
  %1029 = vmatpush1.msra.mxu0 0.0
  %1030 = vmatprep.subr.mxu0 0.0
  %1031 = vmatpush1.msra.mxu0 0.0
  %1032 = vmatprep.subr.mxu0 0.0
  %1033 = vmatpush1.msra.mxu0 0.0
  %1034 = vmatprep.subr.mxu0 0.0
  %1035 = vmatpush1.msra.mxu0 0.0
  %1036 = vmatprep.subr.mxu0 0.0
  %1037 = vmatpush1.msra.mxu0 0.0
  %1038 = vmatprep.subr.mxu0 0.0
  %1039 = vmatpush1.msra.mxu0 0.0
  %1040 = vmatprep.subr.mxu0 0.0
  %1041 = vmatpush1.msra.mxu0 0.0
  %1042 = vmatprep.subr.mxu0 0.0
  %1043 = vmatpush1.msra.mxu0 0.0
  %1044 = vmatprep.subr.mxu0 0.0
  %1045 = vmatpush1.msra.mxu0 0.0
  %1046 = vmatprep.subr.mxu0 0.0
  %1047 = vmatpush1.msra.mxu0 0.0
  %1048 = vmatprep.subr.mxu0 0.0
  %1049 = vmatpush1.msra.mxu0 0.0
  %1050 = vmatprep.subr.mxu0 0.0
  %1051 = vmatpush1.msra.mxu0 0.0
  %1052 = vmatprep.subr.mxu0 0.0
  %1053 = vmatpush1.msra.mxu0 0.0
  %1054 = vmatprep.subr.mxu0 0.0
  %1055 = vmatpush1.msra.mxu0 0.0
  %1056 = vmatprep.subr.mxu0 0.0
  %1057 = vmatpush1.msra.mxu0 0.0
  %1058 = vmatprep.subr.mxu0 0.0
  %1059 = vmatpush1.msra.mxu0 0.0
  %1060 = vmatprep.subr.mxu0 0.0
  %1061 = vmatpush1.msra.mxu0 0.0
  %1062 = vmatprep.subr.mxu0 0.0
  %1063 = vmatpush1.msra.mxu0 0.0
  %1064 = vmatprep.subr.mxu0 0.0
  %1065 = vmatpush1.msra.mxu0 0.0
  %1066 = vmatprep.subr.mxu0 0.0
  %1067 = vmatpush1.msra.mxu0 0.0
  %1068 = vmatprep.subr.mxu0 0.0
  %1069 = vmatpush1.msra.mxu0 0.0
  %1070 = vmatprep.subr.mxu0 0.0
  %1071 = vmatpush1.msra.mxu0 0.0
  %1072 = vmatprep.subr.mxu0 0.0
  %1073 = vmatpush1.msra.mxu0 0.0
  %1074 = vmatprep.mubr.f32.mxu0 0.0
  %1075 = vmatmul.mubr.f32.gmra.mrb[0].mxu0 %v1008
  %v1076 = vpop.f32.mrb[0].mxu0
  %v1077 = vadd.f32 0.0, %v1076
  %v1078 = vpop.f32.mrb[0].mxu0
  %1079 = vdwg.mxu0
  %v1080 = vxor.u32 %v1077, 2147483648
  %v1081 = vmul.f32 %v1080, 1.442695
  %v1082 = vpow.pop %v1081
  %v1083 = vadd.f32 %v1082, 1.0
  %v1084 = vrcp.pop %v1083
  %v1085 = vmul.f32 1.0, %v1084
  %v1086 = vmul.f32 %v1077, %v1085
  %v1087 = vld [vmem:[%s23] sm:$0xff]
  %v1088 = vld [vmem:[%s23 + $0x8] sm:$0xff]
  %v1090 = vsel %vm680, %v1087, 0
  %v1093 = vsel %vm680, %v1088, 0
  %1095 = vmatprep.subr.mxu0 0.0
  %1096 = vmatpush1.msra.mxu0 %v1086
  %1097 = vmatprep.subr.mxu0 0.0
  %1098 = vmatpush1.msra.mxu0 0.0
  %1099 = vmatprep.subr.mxu0 0.0
  %1100 = vmatpush1.msra.mxu0 0.0
  %1101 = vmatprep.subr.mxu0 0.0
  %1102 = vmatpush1.msra.mxu0 0.0
  %1103 = vmatprep.subr.mxu0 0.0
  %1104 = vmatpush1.msra.mxu0 0.0
  %1105 = vmatprep.subr.mxu0 0.0
  %1106 = vmatpush1.msra.mxu0 0.0
  %1107 = vmatprep.subr.mxu0 0.0
  %1108 = vmatpush1.msra.mxu0 0.0
  %1109 = vmatprep.subr.mxu0 0.0
  %1110 = vmatpush1.msra.mxu0 0.0
  %1111 = vmatprep.subr.mxu0 0.0
  %1112 = vmatpush1.msra.mxu0 0.0
  %1113 = vmatprep.subr.mxu0 0.0
  %1114 = vmatpush1.msra.mxu0 0.0
  %1115 = vmatprep.subr.mxu0 0.0
  %1116 = vmatpush1.msra.mxu0 0.0
  %1117 = vmatprep.subr.mxu0 0.0
  %1118 = vmatpush1.msra.mxu0 0.0
  %1119 = vmatprep.subr.mxu0 0.0
  %1120 = vmatpush1.msra.mxu0 0.0
  %1121 = vmatprep.subr.mxu0 0.0
  %1122 = vmatpush1.msra.mxu0 0.0
  %1123 = vmatprep.subr.mxu0 0.0
  %1124 = vmatpush1.msra.mxu0 0.0
  %1125 = vmatprep.subr.mxu0 0.0
  %1126 = vmatpush1.msra.mxu0 0.0
  %1127 = vmatprep.subr.mxu0 0.0
  %1128 = vmatpush1.msra.mxu0 0.0
  %1129 = vmatprep.subr.mxu0 0.0
  %1130 = vmatpush1.msra.mxu0 0.0
  %1131 = vmatprep.subr.mxu0 0.0
  %1132 = vmatpush1.msra.mxu0 0.0
  %1133 = vmatprep.subr.mxu0 0.0
  %1134 = vmatpush1.msra.mxu0 0.0
  %1135 = vmatprep.subr.mxu0 0.0
  %1136 = vmatpush1.msra.mxu0 0.0
  %1137 = vmatprep.subr.mxu0 0.0
  %1138 = vmatpush1.msra.mxu0 0.0
  %1139 = vmatprep.subr.mxu0 0.0
  %1140 = vmatpush1.msra.mxu0 0.0
  %1141 = vmatprep.subr.mxu0 0.0
  %1142 = vmatpush1.msra.mxu0 0.0
  %1143 = vmatprep.subr.mxu0 0.0
  %1144 = vmatpush1.msra.mxu0 0.0
  %1145 = vmatprep.subr.mxu0 0.0
  %1146 = vmatpush1.msra.mxu0 0.0
  %1147 = vmatprep.subr.mxu0 0.0
  %1148 = vmatpush1.msra.mxu0 0.0
  %1149 = vmatprep.subr.mxu0 0.0
  %1150 = vmatpush1.msra.mxu0 0.0
  %1151 = vmatprep.subr.mxu0 0.0
  %1152 = vmatpush1.msra.mxu0 0.0
  %1153 = vmatprep.subr.mxu0 0.0
  %1154 = vmatpush1.msra.mxu0 0.0
  %1155 = vmatprep.subr.mxu0 0.0
  %1156 = vmatpush1.msra.mxu0 0.0
  %1157 = vmatprep.subr.mxu0 0.0
  %1158 = vmatpush1.msra.mxu0 0.0
  %1159 = vmatprep.mubr.f32.mxu0 0.0
  %1160 = vmatmul.mubr.f32.gmra.mrb[0].mxu0 %v1090
  %v1161 = vpop.f32.mrb[0].mxu0
  %v1162 = vadd.f32 0.0, %v1161
  %v1163 = vpop.f32.mrb[0].mxu0
  %1164 = vmatprep.mubr.f32.mxu0 0.0
  %1165 = vmatmul.mubr.f32.gmra.mrb[0].mxu0 %v1093
  %v1166 = vpop.f32.mrb[0].mxu0
  %v1167 = vadd.f32 0.0, %v1166
  %v1168 = vpop.f32.mrb[0].mxu0
  %1169 = vdwg.mxu0
  %v1170 = vxor.u32 %v1162, 2147483648
  %v1171 = vxor.u32 %v1167, 2147483648
  %v1172 = vmul.f32 %v1170, 1.442695
  %v1173 = vpow.pop %v1172
  %v1174 = vmul.f32 %v1171, 1.442695
  %v1175 = vpow.pop %v1174
  %v1176 = vadd.f32 %v1173, 1.0
  %v1177 = vadd.f32 %v1175, 1.0
  %v1178 = vrcp.pop %v1176
  %v1179 = vmul.f32 1.0, %v1178
  %v1180 = vrcp.pop %v1177
  %v1181 = vmul.f32 1.0, %v1180
  %v1182 = vmul.f32 %v1162, %v1179
  %v1183 = vmul.f32 %v1167, %v1181
  %v1184 = vld [vmem:[%s9] sm:$0xff]
  %v1185 = vld [vmem:[%s9 + $0x8] sm:$0xff]
  %v1186 = vld [vmem:[%s9 + $0x10] sm:$0xff]
  %v1187 = vld [vmem:[%s9 + $0x18] sm:$0xff]
  %v1188 = vld [vmem:[%s9 + $0x20] sm:$0xff]
  %v1189 = vld [vmem:[%s9 + $0x28] sm:$0xff]
  %v1190 = vld [vmem:[%s9 + $0x30] sm:$0xff]
  %v1191 = vld [vmem:[%s9 + $0x38] sm:$0xff]
  %v1192 = vld [vmem:[%s9 + $0x40] sm:$0xff]
  %v1193 = vld [vmem:[%s9 + $0x48] sm:$0xff]
  %v1194 = vld [vmem:[%s9 + $0x50] sm:$0xff]
  %v1195 = vld [vmem:[%s9 + $0x58] sm:$0xff]
  %v1196 = vld [vmem:[%s9 + $0x60] sm:$0xff]
  %v1197 = vld [vmem:[%s9 + $0x68] sm:$0xff]
  %v1198 = vld [vmem:[%s9 + $0x70] sm:$0xff]
  %v1199 = vld [vmem:[%s9 + $0x78] sm:$0xff]
  %v1200 = vld [vmem:[%s29] sm:$0xff]
  %v1201 = vld [vmem:[%s29 + $0x8] sm:$0xff]
  %v1202 = vld [vmem:[%s29 + $0x10] sm:$0xff]
  %v1203 = vld [vmem:[%s29 + $0x18] sm:$0xff]
  %v1204 = vld [vmem:[%s29 + $0x20] sm:$0xff]
  %v1205 = vld [vmem:[%s29 + $0x28] sm:$0xff]
  %v1206 = vld [vmem:[%s25] sm:$0xff]
  %v1207 = vld [vmem:[%s25 + $0x8] sm:$0xff]
  %v1208 = vld [vmem:[%s27] sm:$0xff]
  %v1209 = vld [vmem:[%s27 + $0x8] sm:$0xff]
  %vm1210 = vcmask 130048
  %v1212 = vsel %vm1210, 0.0625, 0
  %1214 = vmatprep.subr.mxu0 0.0
  %1215 = vmatpush1.msra.mxu0 %v1182
  %1216 = vmatprep.subr.mxu0 0.0
  %1217 = vmatpush1.msra.mxu0 %v1183
  %1218 = vmatprep.subr.mxu0 0.0
  %1219 = vmatpush1.msra.mxu0 0.0
  %1220 = vmatprep.subr.mxu0 0.0
  %1221 = vmatpush1.msra.mxu0 0.0
  %1222 = vmatprep.subr.mxu0 0.0
  %1223 = vmatpush1.msra.mxu0 0.0
  %1224 = vmatprep.subr.mxu0 0.0
  %1225 = vmatpush1.msra.mxu0 0.0
  %1226 = vmatprep.subr.mxu0 0.0
  %1227 = vmatpush1.msra.mxu0 0.0
  %1228 = vmatprep.subr.mxu0 0.0
  %1229 = vmatpush1.msra.mxu0 0.0
  %1230 = vmatprep.subr.mxu0 0.0
  %1231 = vmatpush1.msra.mxu0 0.0
  %1232 = vmatprep.subr.mxu0 0.0
  %1233 = vmatpush1.msra.mxu0 0.0
  %1234 = vmatprep.subr.mxu0 0.0
  %1235 = vmatpush1.msra.mxu0 0.0
  %1236 = vmatprep.subr.mxu0 0.0
  %1237 = vmatpush1.msra.mxu0 0.0
  %1238 = vmatprep.subr.mxu0 0.0
  %1239 = vmatpush1.msra.mxu0 0.0
  %1240 = vmatprep.subr.mxu0 0.0
  %1241 = vmatpush1.msra.mxu0 0.0
  %1242 = vmatprep.subr.mxu0 0.0
  %1243 = vmatpush1.msra.mxu0 0.0
  %1244 = vmatprep.subr.mxu0 0.0
  %1245 = vmatpush1.msra.mxu0 0.0
  %1246 = vmatprep.subr.mxu0 0.0
  %1247 = vmatpush1.msra.mxu0 0.0
  %1248 = vmatprep.subr.mxu0 0.0
  %1249 = vmatpush1.msra.mxu0 0.0
  %1250 = vmatprep.subr.mxu0 0.0
  %1251 = vmatpush1.msra.mxu0 0.0
  %1252 = vmatprep.subr.mxu0 0.0
  %1253 = vmatpush1.msra.mxu0 0.0
  %1254 = vmatprep.subr.mxu0 0.0
  %1255 = vmatpush1.msra.mxu0 0.0
  %1256 = vmatprep.subr.mxu0 0.0
  %1257 = vmatpush1.msra.mxu0 0.0
  %1258 = vmatprep.subr.mxu0 0.0
  %1259 = vmatpush1.msra.mxu0 0.0
  %1260 = vmatprep.subr.mxu0 0.0
  %1261 = vmatpush1.msra.mxu0 0.0
  %1262 = vmatprep.subr.mxu0 0.0
  %1263 = vmatpush1.msra.mxu0 0.0
  %1264 = vmatprep.subr.mxu0 0.0
  %1265 = vmatpush1.msra.mxu0 0.0
  %1266 = vmatprep.subr.mxu0 0.0
  %1267 = vmatpush1.msra.mxu0 0.0
  %1268 = vmatprep.subr.mxu0 0.0
  %1269 = vmatpush1.msra.mxu0 0.0
  %1270 = vmatprep.subr.mxu0 0.0
  %1271 = vmatpush1.msra.mxu0 0.0
  %1272 = vmatprep.subr.mxu0 0.0
  %1273 = vmatpush1.msra.mxu0 0.0
  %1274 = vmatprep.subr.mxu0 0.0
  %1275 = vmatpush1.msra.mxu0 0.0
  %1276 = vmatprep.subr.mxu0 0.0
  %1277 = vmatpush1.msra.mxu0 0.0
  %1278 = vmatprep.mubr.f32.mxu0 0.0
  %1279 = vmatmul.mubr.f32.gmra.mrb[0].mxu0 %v1212
  %v1280 = vpop.f32.mrb[0].mxu0
  %v1281 = vadd.f32 0.0, %v1280
  %v1282 = vpop.f32.mrb[0].mxu0
  %1283 = vdwg.mxu0
  %v1284 = vlaneseq
  %v1285 = vshrl.u32 %v1284, 7
  %v1286 = vsub.s32 0, %v1285
  %v1287 = vrot.slane %v1281, %v1286
  %v1288 = vsub.f32 %v1182, %v1287
  %v1289 = vsub.f32 %v1183, %v1287
  %v1290 = vmul.f32 %v1288, %v1288
  %v1291 = vmul.f32 %v1289, %v1289
  %1292 = vmatprep.subr.mxu0 0.0
  %1293 = vmatpush1.msra.mxu0 %v1290
  %1294 = vmatprep.subr.mxu0 0.0
  %1295 = vmatpush1.msra.mxu0 %v1291
  %1296 = vmatprep.subr.mxu0 0.0
  %1297 = vmatpush1.msra.mxu0 0.0
  %1298 = vmatprep.subr.mxu0 0.0
  %1299 = vmatpush1.msra.mxu0 0.0
  %1300 = vmatprep.subr.mxu0 0.0
  %1301 = vmatpush1.msra.mxu0 0.0
  %1302 = vmatprep.subr.mxu0 0.0
  %1303 = vmatpush1.msra.mxu0 0.0
  %1304 = vmatprep.subr.mxu0 0.0
  %1305 = vmatpush1.msra.mxu0 0.0
  %1306 = vmatprep.subr.mxu0 0.0
  %1307 = vmatpush1.msra.mxu0 0.0
  %1308 = vmatprep.subr.mxu0 0.0
  %1309 = vmatpush1.msra.mxu0 0.0
  %1310 = vmatprep.subr.mxu0 0.0
  %1311 = vmatpush1.msra.mxu0 0.0
  %1312 = vmatprep.subr.mxu0 0.0
  %1313 = vmatpush1.msra.mxu0 0.0
  %1314 = vmatprep.subr.mxu0 0.0
  %1315 = vmatpush1.msra.mxu0 0.0
  %1316 = vmatprep.subr.mxu0 0.0
  %1317 = vmatpush1.msra.mxu0 0.0
  %1318 = vmatprep.subr.mxu0 0.0
  %1319 = vmatpush1.msra.mxu0 0.0
  %1320 = vmatprep.subr.mxu0 0.0
  %1321 = vmatpush1.msra.mxu0 0.0
  %1322 = vmatprep.subr.mxu0 0.0
  %1323 = vmatpush1.msra.mxu0 0.0
  %1324 = vmatprep.subr.mxu0 0.0
  %1325 = vmatpush1.msra.mxu0 0.0
  %1326 = vmatprep.subr.mxu0 0.0
  %1327 = vmatpush1.msra.mxu0 0.0
  %1328 = vmatprep.subr.mxu0 0.0
  %1329 = vmatpush1.msra.mxu0 0.0
  %1330 = vmatprep.subr.mxu0 0.0
  %1331 = vmatpush1.msra.mxu0 0.0
  %1332 = vmatprep.subr.mxu0 0.0
  %1333 = vmatpush1.msra.mxu0 0.0
  %1334 = vmatprep.subr.mxu0 0.0
  %1335 = vmatpush1.msra.mxu0 0.0
  %1336 = vmatprep.subr.mxu0 0.0
  %1337 = vmatpush1.msra.mxu0 0.0
  %1338 = vmatprep.subr.mxu0 0.0
  %1339 = vmatpush1.msra.mxu0 0.0
  %1340 = vmatprep.subr.mxu0 0.0
  %1341 = vmatpush1.msra.mxu0 0.0
  %1342 = vmatprep.subr.mxu0 0.0
  %1343 = vmatpush1.msra.mxu0 0.0
  %1344 = vmatprep.subr.mxu0 0.0
  %1345 = vmatpush1.msra.mxu0 0.0
  %1346 = vmatprep.subr.mxu0 0.0
  %1347 = vmatpush1.msra.mxu0 0.0
  %1348 = vmatprep.subr.mxu0 0.0
  %1349 = vmatpush1.msra.mxu0 0.0
  %1350 = vmatprep.subr.mxu0 0.0
  %1351 = vmatpush1.msra.mxu0 0.0
  %1352 = vmatprep.subr.mxu0 0.0
  %1353 = vmatpush1.msra.mxu0 0.0
  %1354 = vmatprep.subr.mxu0 0.0
  %1355 = vmatpush1.msra.mxu0 0.0
  %1356 = vmatprep.mubr.f32.mxu0 0.0
  %1357 = vmatmul.mubr.f32.gmra.mrb[0].mxu0 %v1212
  %v1358 = vpop.f32.mrb[0].mxu0
  %v1359 = vadd.f32 1e-05, %v1358
  %v1360 = vpop.f32.mrb[0].mxu0
  %1361 = vdwg.mxu0
  %v1362 = vrsqrt.pop %v1359
  %v1363 = vlaneseq
  %v1364 = vshrl.u32 %v1363, 7
  %v1365 = vsub.s32 0, %v1364
  %v1366 = vrot.slane %v1362, %v1365
  %v1367 = vmul.f32 %v1288, %v1366
  %v1368 = vmul.f32 %v1289, %v1366
  %1370 = vset.pattern.permute.xlu0 0
  %1371 = vperm.xlu0 %1370, %v1206
  %v1372 = vpop.permute.xlu0 %1371
  %1375 = vset.pattern.permute.xlu0 0
  %1376 = vperm.xlu0 %1375, %v1207
  %v1377 = vpop.permute.xlu0 %1376
  %v1379 = vmul.f32 %v1367, %v1372
  %v1380 = vmul.f32 %v1368, %v1377
  %1382 = vset.pattern.permute.xlu0 0
  %1383 = vperm.xlu0 %1382, %v1208
  %v1384 = vpop.permute.xlu0 %1383
  %1387 = vset.pattern.permute.xlu0 0
  %1388 = vperm.xlu0 %1387, %v1209
  %v1389 = vpop.permute.xlu0 %1388
  %v1391 = vadd.f32 %v1379, %v1384
  %v1392 = vadd.f32 %v1380, %v1389
  %v1394 = vsel %vm1210, %v1200, 0
  %v1397 = vsel %vm1210, %v1201, 0
  %v1400 = vsel %vm1210, %v1202, 0
  %v1403 = vsel %vm1210, %v1203, 0
  %v1406 = vsel %vm1210, %v1204, 0
  %v1409 = vsel %vm1210, %v1205, 0
  %1411 = vmatprep.subr.mxu0 0.0
  %1412 = vmatpush1.msra.mxu0 %v1391
  %1413 = vmatprep.subr.mxu0 0.0
  %1414 = vmatpush1.msra.mxu0 %v1392
  %1415 = vmatprep.subr.mxu0 0.0
  %1416 = vmatpush1.msra.mxu0 0.0
  %1417 = vmatprep.subr.mxu0 0.0
  %1418 = vmatpush1.msra.mxu0 0.0
  %1419 = vmatprep.subr.mxu0 0.0
  %1420 = vmatpush1.msra.mxu0 0.0
  %1421 = vmatprep.subr.mxu0 0.0
  %1422 = vmatpush1.msra.mxu0 0.0
  %1423 = vmatprep.subr.mxu0 0.0
  %1424 = vmatpush1.msra.mxu0 0.0
  %1425 = vmatprep.subr.mxu0 0.0
  %1426 = vmatpush1.msra.mxu0 0.0
  %1427 = vmatprep.subr.mxu0 0.0
  %1428 = vmatpush1.msra.mxu0 0.0
  %1429 = vmatprep.subr.mxu0 0.0
  %1430 = vmatpush1.msra.mxu0 0.0
  %1431 = vmatprep.subr.mxu0 0.0
  %1432 = vmatpush1.msra.mxu0 0.0
  %1433 = vmatprep.subr.mxu0 0.0
  %1434 = vmatpush1.msra.mxu0 0.0
  %1435 = vmatprep.subr.mxu0 0.0
  %1436 = vmatpush1.msra.mxu0 0.0
  %1437 = vmatprep.subr.mxu0 0.0
  %1438 = vmatpush1.msra.mxu0 0.0
  %1439 = vmatprep.subr.mxu0 0.0
  %1440 = vmatpush1.msra.mxu0 0.0
  %1441 = vmatprep.subr.mxu0 0.0
  %1442 = vmatpush1.msra.mxu0 0.0
  %1443 = vmatprep.subr.mxu0 0.0
  %1444 = vmatpush1.msra.mxu0 0.0
  %1445 = vmatprep.subr.mxu0 0.0
  %1446 = vmatpush1.msra.mxu0 0.0
  %1447 = vmatprep.subr.mxu0 0.0
  %1448 = vmatpush1.msra.mxu0 0.0
  %1449 = vmatprep.subr.mxu0 0.0
  %1450 = vmatpush1.msra.mxu0 0.0
  %1451 = vmatprep.subr.mxu0 0.0
  %1452 = vmatpush1.msra.mxu0 0.0
  %1453 = vmatprep.subr.mxu0 0.0
  %1454 = vmatpush1.msra.mxu0 0.0
  %1455 = vmatprep.subr.mxu0 0.0
  %1456 = vmatpush1.msra.mxu0 0.0
  %1457 = vmatprep.subr.mxu0 0.0
  %1458 = vmatpush1.msra.mxu0 0.0
  %1459 = vmatprep.subr.mxu0 0.0
  %1460 = vmatpush1.msra.mxu0 0.0
  %1461 = vmatprep.subr.mxu0 0.0
  %1462 = vmatpush1.msra.mxu0 0.0
  %1463 = vmatprep.subr.mxu0 0.0
  %1464 = vmatpush1.msra.mxu0 0.0
  %1465 = vmatprep.subr.mxu0 0.0
  %1466 = vmatpush1.msra.mxu0 0.0
  %1467 = vmatprep.subr.mxu0 0.0
  %1468 = vmatpush1.msra.mxu0 0.0
  %1469 = vmatprep.subr.mxu0 0.0
  %1470 = vmatpush1.msra.mxu0 0.0
  %1471 = vmatprep.subr.mxu0 0.0
  %1472 = vmatpush1.msra.mxu0 0.0
  %1473 = vmatprep.subr.mxu0 0.0
  %1474 = vmatpush1.msra.mxu0 0.0
  %1475 = vmatprep.mubr.f32.mxu0 0.0
  %1476 = vmatmul.mubr.f32.gmra.mrb[0].mxu0 %v1394
  %v1477 = vpop.f32.mrb[0].mxu0
  %v1478 = vadd.f32 0.0, %v1477
  %v1479 = vpop.f32.mrb[0].mxu0
  %1480 = vmatprep.mubr.f32.mxu0 0.0
  %1481 = vmatmul.mubr.f32.gmra.mrb[0].mxu0 %v1397
  %v1482 = vpop.f32.mrb[0].mxu0
  %v1483 = vadd.f32 0.0, %v1482
  %v1484 = vpop.f32.mrb[0].mxu0
  %1485 = vmatprep.mubr.f32.mxu0 0.0
  %1486 = vmatmul.mubr.f32.gmra.mrb[0].mxu0 %v1400
  %v1487 = vpop.f32.mrb[0].mxu0
  %v1488 = vadd.f32 0.0, %v1487
  %v1489 = vpop.f32.mrb[0].mxu0
  %1490 = vmatprep.mubr.f32.mxu0 0.0
  %1491 = vmatmul.mubr.f32.gmra.mrb[0].mxu0 %v1403
  %v1492 = vpop.f32.mrb[0].mxu0
  %v1493 = vadd.f32 0.0, %v1492
  %v1494 = vpop.f32.mrb[0].mxu0
  %1495 = vmatprep.mubr.f32.mxu0 0.0
  %1496 = vmatmul.mubr.f32.gmra.mrb[0].mxu0 %v1406
  %v1497 = vpop.f32.mrb[0].mxu0
  %v1498 = vadd.f32 0.0, %v1497
  %v1499 = vpop.f32.mrb[0].mxu0
  %1500 = vmatprep.mubr.f32.mxu0 0.0
  %1501 = vmatmul.mubr.f32.gmra.mrb[0].mxu0 %v1409
  %v1502 = vpop.f32.mrb[0].mxu0
  %v1503 = vadd.f32 0.0, %v1502
  %v1504 = vpop.f32.mrb[0].mxu0
  %1505 = vdwg.mxu0
  %v1506 = vld [vmem:[%s31] sm:$0xff]
  %v1507 = vld [vmem:[%s31 + $0x8] sm:$0xff]
  %1508 = vxpose.xlu0.b32.start [1/16] %v1478, 128
  %1509 = vxpose.xlu0.b32.cont [2/16] 0.0, 128
  %1510 = vxpose.xlu0.b32.cont [3/16] 0.0, 128
  %1511 = vxpose.xlu0.b32.cont [4/16] 0.0, 128
  %1512 = vxpose.xlu0.b32.cont [5/16] 0.0, 128
  %1513 = vxpose.xlu0.b32.cont [6/16] 0.0, 128
  %1514 = vxpose.xlu0.b32.cont [7/16] 0.0, 128
  %1515 = vxpose.xlu0.b32.cont [8/16] 0.0, 128
  %1516 = vxpose.xlu0.b32.cont [9/16] 0.0, 128
  %1517 = vxpose.xlu0.b32.cont [10/16] 0.0, 128
  %1518 = vxpose.xlu0.b32.cont [11/16] 0.0, 128
  %1519 = vxpose.xlu0.b32.cont [12/16] 0.0, 128
  %1520 = vxpose.xlu0.b32.cont [13/16] 0.0, 128
  %1521 = vxpose.xlu0.b32.cont [14/16] 0.0, 128
  %1522 = vxpose.xlu0.b32.cont [15/16] 0.0, 128
  %1523 = vxpose.xlu0.b32.end [16/16] 0.0, 128
  %v1524 = vpop.trf.xlu0
  %v1525 = vpop.trf.xlu0
  %v1526 = vpop.trf.xlu0
  %v1527 = vpop.trf.xlu0
  %v1528 = vpop.trf.xlu0
  %v1529 = vpop.trf.xlu0
  %v1530 = vpop.trf.xlu0
  %v1531 = vpop.trf.xlu0
  %v1532 = vpop.trf.xlu0
  %v1533 = vpop.trf.xlu0
  %v1534 = vpop.trf.xlu0
  %v1535 = vpop.trf.xlu0
  %v1536 = vpop.trf.xlu0
  %v1537 = vpop.trf.xlu0
  %v1538 = vpop.trf.xlu0
  %v1539 = vpop.trf.xlu0
  %v1541 = vsel %vm138, %v1524, 0
  %v1544 = vsel %vm138, %v1525, 0
  %v1547 = vsel %vm138, %v1526, 0
  %v1550 = vsel %vm138, %v1527, 0
  %v1553 = vsel %vm138, %v1528, 0
  %v1556 = vsel %vm138, %v1529, 0
  %v1559 = vsel %vm138, %v1530, 0
  %v1562 = vsel %vm138, %v1531, 0
  %v1565 = vsel %vm138, %v1532, 0
  %v1568 = vsel %vm138, %v1533, 0
  %v1571 = vsel %vm138, %v1534, 0
  %v1574 = vsel %vm138, %v1535, 0
  %v1577 = vsel %vm138, %v1536, 0
  %v1580 = vsel %vm138, %v1537, 0
  %v1583 = vsel %vm138, %v1538, 0
  %v1586 = vsel %vm138, %v1539, 0
  %v1589 = vsel %vm142, %v1488, 0
  %1591 = vmatprep.subr.mxu0 0.0
  %1592 = vmatpush1.msra.mxu0 %v1589
  %1593 = vmatprep.subr.mxu0 0.0
  %1594 = vmatpush1.msra.mxu0 0.0
  %1595 = vmatprep.subr.mxu0 0.0
  %1596 = vmatpush1.msra.mxu0 0.0
  %1597 = vmatprep.subr.mxu0 0.0
  %1598 = vmatpush1.msra.mxu0 0.0
  %1599 = vmatprep.subr.mxu0 0.0
  %1600 = vmatpush1.msra.mxu0 0.0
  %1601 = vmatprep.subr.mxu0 0.0
  %1602 = vmatpush1.msra.mxu0 0.0
  %1603 = vmatprep.subr.mxu0 0.0
  %1604 = vmatpush1.msra.mxu0 0.0
  %1605 = vmatprep.subr.mxu0 0.0
  %1606 = vmatpush1.msra.mxu0 0.0
  %1607 = vmatprep.subr.mxu0 0.0
  %1608 = vmatpush1.msra.mxu0 0.0
  %1609 = vmatprep.subr.mxu0 0.0
  %1610 = vmatpush1.msra.mxu0 0.0
  %1611 = vmatprep.subr.mxu0 0.0
  %1612 = vmatpush1.msra.mxu0 0.0
  %1613 = vmatprep.subr.mxu0 0.0
  %1614 = vmatpush1.msra.mxu0 0.0
  %1615 = vmatprep.subr.mxu0 0.0
  %1616 = vmatpush1.msra.mxu0 0.0
  %1617 = vmatprep.subr.mxu0 0.0
  %1618 = vmatpush1.msra.mxu0 0.0
  %1619 = vmatprep.subr.mxu0 0.0
  %1620 = vmatpush1.msra.mxu0 0.0
  %1621 = vmatprep.subr.mxu0 0.0
  %1622 = vmatpush1.msra.mxu0 0.0
  %1623 = vmatprep.subr.mxu0 0.0
  %1624 = vmatpush1.msra.mxu0 0.0
  %1625 = vmatprep.subr.mxu0 0.0
  %1626 = vmatpush1.msra.mxu0 0.0
  %1627 = vmatprep.subr.mxu0 0.0
  %1628 = vmatpush1.msra.mxu0 0.0
  %1629 = vmatprep.subr.mxu0 0.0
  %1630 = vmatpush1.msra.mxu0 0.0
  %1631 = vmatprep.subr.mxu0 0.0
  %1632 = vmatpush1.msra.mxu0 0.0
  %1633 = vmatprep.subr.mxu0 0.0
  %1634 = vmatpush1.msra.mxu0 0.0
  %1635 = vmatprep.subr.mxu0 0.0
  %1636 = vmatpush1.msra.mxu0 0.0
  %1637 = vmatprep.subr.mxu0 0.0
  %1638 = vmatpush1.msra.mxu0 0.0
  %1639 = vmatprep.subr.mxu0 0.0
  %1640 = vmatpush1.msra.mxu0 0.0
  %1641 = vmatprep.subr.mxu0 0.0
  %1642 = vmatpush1.msra.mxu0 0.0
  %1643 = vmatprep.subr.mxu0 0.0
  %1644 = vmatpush1.msra.mxu0 0.0
  %1645 = vmatprep.subr.mxu0 0.0
  %1646 = vmatpush1.msra.mxu0 0.0
  %1647 = vmatprep.subr.mxu0 0.0
  %1648 = vmatpush1.msra.mxu0 0.0
  %1649 = vmatprep.subr.mxu0 0.0
  %1650 = vmatpush1.msra.mxu0 0.0
  %1651 = vmatprep.subr.mxu0 0.0
  %1652 = vmatpush1.msra.mxu0 0.0
  %1653 = vmatprep.subr.mxu0 0.0
  %1654 = vmatpush1.msra.mxu0 0.0
  %1655 = vmatprep.mubr.f32.mxu0 0.0
  %1656 = vmatmul.mubr.f32.gmra.mrb[0].mxu0 %v1541
  %v1657 = vpop.f32.mrb[0].mxu0
  %v1658 = vadd.f32 0.0, %v1657
  %v1659 = vpop.f32.mrb[0].mxu0
  %1660 = vmatprep.mubr.f32.mxu0 0.0
  %1661 = vmatmul.mubr.f32.gmra.mrb[0].mxu0 %v1544
  %v1662 = vpop.f32.mrb[0].mxu0
  %v1663 = vadd.f32 0.0, %v1662
  %v1664 = vpop.f32.mrb[0].mxu0
  %1665 = vmatprep.mubr.f32.mxu0 0.0
  %1666 = vmatmul.mubr.f32.gmra.mrb[0].mxu0 %v1547
  %v1667 = vpop.f32.mrb[0].mxu0
  %v1668 = vadd.f32 0.0, %v1667
  %v1669 = vpop.f32.mrb[0].mxu0
  %1670 = vmatprep.mubr.f32.mxu0 0.0
  %1671 = vmatmul.mubr.f32.gmra.mrb[0].mxu0 %v1550
  %v1672 = vpop.f32.mrb[0].mxu0
  %v1673 = vadd.f32 0.0, %v1672
  %v1674 = vpop.f32.mrb[0].mxu0
  %1675 = vmatprep.mubr.f32.mxu0 0.0
  %1676 = vmatmul.mubr.f32.gmra.mrb[0].mxu0 %v1553
  %v1677 = vpop.f32.mrb[0].mxu0
  %v1678 = vadd.f32 0.0, %v1677
  %v1679 = vpop.f32.mrb[0].mxu0
  %1680 = vmatprep.mubr.f32.mxu0 0.0
  %1681 = vmatmul.mubr.f32.gmra.mrb[0].mxu0 %v1556
  %v1682 = vpop.f32.mrb[0].mxu0
  %v1683 = vadd.f32 0.0, %v1682
  %v1684 = vpop.f32.mrb[0].mxu0
  %1685 = vmatprep.mubr.f32.mxu0 0.0
  %1686 = vmatmul.mubr.f32.gmra.mrb[0].mxu0 %v1559
  %v1687 = vpop.f32.mrb[0].mxu0
  %v1688 = vadd.f32 0.0, %v1687
  %v1689 = vpop.f32.mrb[0].mxu0
  %1690 = vmatprep.mubr.f32.mxu0 0.0
  %1691 = vmatmul.mubr.f32.gmra.mrb[0].mxu0 %v1562
  %v1692 = vpop.f32.mrb[0].mxu0
  %v1693 = vadd.f32 0.0, %v1692
  %v1694 = vpop.f32.mrb[0].mxu0
  %1695 = vmatprep.mubr.f32.mxu0 0.0
  %1696 = vmatmul.mubr.f32.gmra.mrb[0].mxu0 %v1565
  %v1697 = vpop.f32.mrb[0].mxu0
  %v1698 = vadd.f32 0.0, %v1697
  %v1699 = vpop.f32.mrb[0].mxu0
  %1700 = vmatprep.mubr.f32.mxu0 0.0
  %1701 = vmatmul.mubr.f32.gmra.mrb[0].mxu0 %v1568
  %v1702 = vpop.f32.mrb[0].mxu0
  %v1703 = vadd.f32 0.0, %v1702
  %v1704 = vpop.f32.mrb[0].mxu0
  %1705 = vmatprep.mubr.f32.mxu0 0.0
  %1706 = vmatmul.mubr.f32.gmra.mrb[0].mxu0 %v1571
  %v1707 = vpop.f32.mrb[0].mxu0
  %v1708 = vadd.f32 0.0, %v1707
  %v1709 = vpop.f32.mrb[0].mxu0
  %1710 = vmatprep.mubr.f32.mxu0 0.0
  %1711 = vmatmul.mubr.f32.gmra.mrb[0].mxu0 %v1574
  %v1712 = vpop.f32.mrb[0].mxu0
  %v1713 = vadd.f32 0.0, %v1712
  %v1714 = vpop.f32.mrb[0].mxu0
  %1715 = vmatprep.mubr.f32.mxu0 0.0
  %1716 = vmatmul.mubr.f32.gmra.mrb[0].mxu0 %v1577
  %v1717 = vpop.f32.mrb[0].mxu0
  %v1718 = vadd.f32 0.0, %v1717
  %v1719 = vpop.f32.mrb[0].mxu0
  %1720 = vmatprep.mubr.f32.mxu0 0.0
  %1721 = vmatmul.mubr.f32.gmra.mrb[0].mxu0 %v1580
  %v1722 = vpop.f32.mrb[0].mxu0
  %v1723 = vadd.f32 0.0, %v1722
  %v1724 = vpop.f32.mrb[0].mxu0
  %1725 = vmatprep.mubr.f32.mxu0 0.0
  %1726 = vmatmul.mubr.f32.gmra.mrb[0].mxu0 %v1583
  %v1727 = vpop.f32.mrb[0].mxu0
  %v1728 = vadd.f32 0.0, %v1727
  %v1729 = vpop.f32.mrb[0].mxu0
  %1730 = vmatprep.mubr.f32.mxu0 0.0
  %1731 = vmatmul.mubr.f32.gmra.mrb[0].mxu0 %v1586
  %v1732 = vpop.f32.mrb[0].mxu0
  %v1733 = vadd.f32 0.0, %v1732
  %v1734 = vpop.f32.mrb[0].mxu0
  %1735 = vdwg.mxu0
  %v1736 = vmul.f32 %v1658, 0.5
  %v1737 = vmul.f32 %v1663, 0.5
  %v1738 = vmul.f32 %v1668, 0.5
  %v1739 = vmul.f32 %v1673, 0.5
  %v1740 = vmul.f32 %v1678, 0.5
  %v1741 = vmul.f32 %v1683, 0.5
  %v1742 = vmul.f32 %v1688, 0.5
  %v1743 = vmul.f32 %v1693, 0.5
  %v1744 = vmul.f32 %v1698, 0.5
  %v1745 = vmul.f32 %v1703, 0.5
  %v1746 = vmul.f32 %v1708, 0.5
  %v1747 = vmul.f32 %v1713, 0.5
  %v1748 = vmul.f32 %v1718, 0.5
  %v1749 = vmul.f32 %v1723, 0.5
  %v1750 = vmul.f32 %v1728, 0.5
  %v1751 = vmul.f32 %v1733, 0.5
  %v1752 = vadd.f32 %v1736, %v1184
  %v1753 = vadd.f32 %v1737, %v1185
  %v1754 = vadd.f32 %v1738, %v1186
  %v1755 = vadd.f32 %v1739, %v1187
  %v1756 = vadd.f32 %v1740, %v1188
  %v1757 = vadd.f32 %v1741, %v1189
  %v1758 = vadd.f32 %v1742, %v1190
  %v1759 = vadd.f32 %v1743, %v1191
  %v1760 = vadd.f32 %v1744, %v1192
  %v1761 = vadd.f32 %v1745, %v1193
  %v1762 = vadd.f32 %v1746, %v1194
  %v1763 = vadd.f32 %v1747, %v1195
  %v1764 = vadd.f32 %v1748, %v1196
  %v1765 = vadd.f32 %v1749, %v1197
  %v1766 = vadd.f32 %v1750, %v1198
  %v1767 = vadd.f32 %v1751, %v1199
  %1768 = vmax.xlane.f32.xlu0 %v1752
  %v1769 = vpop.xlane.xlu0 %1768
  %1770 = vmax.xlane.f32.xlu0 %v1753
  %v1771 = vpop.xlane.xlu0 %1770
  %1772 = vmax.xlane.f32.xlu0 %v1754
  %v1773 = vpop.xlane.xlu0 %1772
  %1774 = vmax.xlane.f32.xlu0 %v1755
  %v1775 = vpop.xlane.xlu0 %1774
  %1776 = vmax.xlane.f32.xlu0 %v1756
  %v1777 = vpop.xlane.xlu0 %1776
  %1778 = vmax.xlane.f32.xlu0 %v1757
  %v1779 = vpop.xlane.xlu0 %1778
  %1780 = vmax.xlane.f32.xlu0 %v1758
  %v1781 = vpop.xlane.xlu0 %1780
  %1782 = vmax.xlane.f32.xlu0 %v1759
  %v1783 = vpop.xlane.xlu0 %1782
  %1784 = vmax.xlane.f32.xlu0 %v1760
  %v1785 = vpop.xlane.xlu0 %1784
  %1786 = vmax.xlane.f32.xlu0 %v1761
  %v1787 = vpop.xlane.xlu0 %1786
  %1788 = vmax.xlane.f32.xlu0 %v1762
  %v1789 = vpop.xlane.xlu0 %1788
  %1790 = vmax.xlane.f32.xlu0 %v1763
  %v1791 = vpop.xlane.xlu0 %1790
  %1792 = vmax.xlane.f32.xlu0 %v1764
  %v1793 = vpop.xlane.xlu0 %1792
  %1794 = vmax.xlane.f32.xlu0 %v1765
  %v1795 = vpop.xlane.xlu0 %1794
  %1796 = vmax.xlane.f32.xlu0 %v1766
  %v1797 = vpop.xlane.xlu0 %1796
  %1798 = vmax.xlane.f32.xlu0 %v1767
  %v1799 = vpop.xlane.xlu0 %1798
  %v1800 = vsub.f32 %v1752, %v1769
  %v1801 = vsub.f32 %v1753, %v1771
  %v1802 = vsub.f32 %v1754, %v1773
  %v1803 = vsub.f32 %v1755, %v1775
  %v1804 = vsub.f32 %v1756, %v1777
  %v1805 = vsub.f32 %v1757, %v1779
  %v1806 = vsub.f32 %v1758, %v1781
  %v1807 = vsub.f32 %v1759, %v1783
  %v1808 = vsub.f32 %v1760, %v1785
  %v1809 = vsub.f32 %v1761, %v1787
  %v1810 = vsub.f32 %v1762, %v1789
  %v1811 = vsub.f32 %v1763, %v1791
  %v1812 = vsub.f32 %v1764, %v1793
  %v1813 = vsub.f32 %v1765, %v1795
  %v1814 = vsub.f32 %v1766, %v1797
  %v1815 = vsub.f32 %v1767, %v1799
  %v1816 = vmul.f32 %v1800, 1.442695
  %v1817 = vpow.pop %v1816
  %v1818 = vmul.f32 %v1801, 1.442695
  %v1819 = vpow.pop %v1818
  %v1820 = vmul.f32 %v1802, 1.442695
  %v1821 = vpow.pop %v1820
  %v1822 = vmul.f32 %v1803, 1.442695
  %v1823 = vpow.pop %v1822
  %v1824 = vmul.f32 %v1804, 1.442695
  %v1825 = vpow.pop %v1824
  %v1826 = vmul.f32 %v1805, 1.442695
  %v1827 = vpow.pop %v1826
  %v1828 = vmul.f32 %v1806, 1.442695
  %v1829 = vpow.pop %v1828
  %v1830 = vmul.f32 %v1807, 1.442695
  %v1831 = vpow.pop %v1830
  %v1832 = vmul.f32 %v1808, 1.442695
  %v1833 = vpow.pop %v1832
  %v1834 = vmul.f32 %v1809, 1.442695
  %v1835 = vpow.pop %v1834
  %v1836 = vmul.f32 %v1810, 1.442695
  %v1837 = vpow.pop %v1836
  %v1838 = vmul.f32 %v1811, 1.442695
  %v1839 = vpow.pop %v1838
  %v1840 = vmul.f32 %v1812, 1.442695
  %v1841 = vpow.pop %v1840
  %v1842 = vmul.f32 %v1813, 1.442695
  %v1843 = vpow.pop %v1842
  %v1844 = vmul.f32 %v1814, 1.442695
  %v1845 = vpow.pop %v1844
  %v1846 = vmul.f32 %v1815, 1.442695
  %v1847 = vpow.pop %v1846
  %1848 = vadd.xlane.f32.xlu0 %v1817
  %v1849 = vpop.xlane.xlu0 %1848
  %1850 = vadd.xlane.f32.xlu0 %v1819
  %v1851 = vpop.xlane.xlu0 %1850
  %1852 = vadd.xlane.f32.xlu0 %v1821
  %v1853 = vpop.xlane.xlu0 %1852
  %1854 = vadd.xlane.f32.xlu0 %v1823
  %v1855 = vpop.xlane.xlu0 %1854
  %1856 = vadd.xlane.f32.xlu0 %v1825
  %v1857 = vpop.xlane.xlu0 %1856
  %1858 = vadd.xlane.f32.xlu0 %v1827
  %v1859 = vpop.xlane.xlu0 %1858
  %1860 = vadd.xlane.f32.xlu0 %v1829
  %v1861 = vpop.xlane.xlu0 %1860
  %1862 = vadd.xlane.f32.xlu0 %v1831
  %v1863 = vpop.xlane.xlu0 %1862
  %1864 = vadd.xlane.f32.xlu0 %v1833
  %v1865 = vpop.xlane.xlu0 %1864
  %1866 = vadd.xlane.f32.xlu0 %v1835
  %v1867 = vpop.xlane.xlu0 %1866
  %1868 = vadd.xlane.f32.xlu0 %v1837
  %v1869 = vpop.xlane.xlu0 %1868
  %1870 = vadd.xlane.f32.xlu0 %v1839
  %v1871 = vpop.xlane.xlu0 %1870
  %1872 = vadd.xlane.f32.xlu0 %v1841
  %v1873 = vpop.xlane.xlu0 %1872
  %1874 = vadd.xlane.f32.xlu0 %v1843
  %v1875 = vpop.xlane.xlu0 %1874
  %1876 = vadd.xlane.f32.xlu0 %v1845
  %v1877 = vpop.xlane.xlu0 %1876
  %1878 = vadd.xlane.f32.xlu0 %v1847
  %v1879 = vpop.xlane.xlu0 %1878
  %v1880 = vrcp.pop %v1849
  %v1881 = vrcp.pop %v1851
  %v1882 = vrcp.pop %v1853
  %v1883 = vrcp.pop %v1855
  %v1884 = vrcp.pop %v1857
  %v1885 = vrcp.pop %v1859
  %v1886 = vrcp.pop %v1861
  %v1887 = vrcp.pop %v1863
  %v1888 = vrcp.pop %v1865
  %v1889 = vrcp.pop %v1867
  %v1890 = vrcp.pop %v1869
  %v1891 = vrcp.pop %v1871
  %v1892 = vrcp.pop %v1873
  %v1893 = vrcp.pop %v1875
  %v1894 = vrcp.pop %v1877
  %v1895 = vrcp.pop %v1879
  %v1896 = vmul.f32 %v1817, %v1880
  %v1897 = vmul.f32 %v1819, %v1881
  %v1898 = vmul.f32 %v1821, %v1882
  %v1899 = vmul.f32 %v1823, %v1883
  %v1900 = vmul.f32 %v1825, %v1884
  %v1901 = vmul.f32 %v1827, %v1885
  %v1902 = vmul.f32 %v1829, %v1886
  %v1903 = vmul.f32 %v1831, %v1887
  %v1904 = vmul.f32 %v1833, %v1888
  %v1905 = vmul.f32 %v1835, %v1889
  %v1906 = vmul.f32 %v1837, %v1890
  %v1907 = vmul.f32 %v1839, %v1891
  %v1908 = vmul.f32 %v1841, %v1892
  %v1909 = vmul.f32 %v1843, %v1893
  %v1910 = vmul.f32 %v1845, %v1894
  %v1911 = vmul.f32 %v1847, %v1895
  %1912 = vmatprep.subr.mxu0 0.0
  %1913 = vmatpush1.xpose.msra.mxu0 %v1896
  %1914 = vmatprep.subr.mxu0 0.0
  %1915 = vmatpush1.xpose.msra.mxu0 %v1897
  %1916 = vmatprep.subr.mxu0 0.0
  %1917 = vmatpush1.xpose.msra.mxu0 %v1898
  %1918 = vmatprep.subr.mxu0 0.0
  %1919 = vmatpush1.xpose.msra.mxu0 %v1899
  %1920 = vmatprep.subr.mxu0 0.0
  %1921 = vmatpush1.xpose.msra.mxu0 %v1900
  %1922 = vmatprep.subr.mxu0 0.0
  %1923 = vmatpush1.xpose.msra.mxu0 %v1901
  %1924 = vmatprep.subr.mxu0 0.0
  %1925 = vmatpush1.xpose.msra.mxu0 %v1902
  %1926 = vmatprep.subr.mxu0 0.0
  %1927 = vmatpush1.xpose.msra.mxu0 %v1903
  %1928 = vmatprep.subr.mxu0 0.0
  %1929 = vmatpush1.xpose.msra.mxu0 %v1904
  %1930 = vmatprep.subr.mxu0 0.0
  %1931 = vmatpush1.xpose.msra.mxu0 %v1905
  %1932 = vmatprep.subr.mxu0 0.0
  %1933 = vmatpush1.xpose.msra.mxu0 %v1906
  %1934 = vmatprep.subr.mxu0 0.0
  %1935 = vmatpush1.xpose.msra.mxu0 %v1907
  %1936 = vmatprep.subr.mxu0 0.0
  %1937 = vmatpush1.xpose.msra.mxu0 %v1908
  %1938 = vmatprep.subr.mxu0 0.0
  %1939 = vmatpush1.xpose.msra.mxu0 %v1909
  %1940 = vmatprep.subr.mxu0 0.0
  %1941 = vmatpush1.xpose.msra.mxu0 %v1910
  %1942 = vmatprep.subr.mxu0 0.0
  %1943 = vmatpush1.xpose.msra.mxu0 %v1911
  %1944 = vmatprep.subr.mxu0 0.0
  %1945 = vmatpush1.xpose.msra.mxu0 0.0
  %1946 = vmatprep.subr.mxu0 0.0
  %1947 = vmatpush1.xpose.msra.mxu0 0.0
  %1948 = vmatprep.subr.mxu0 0.0
  %1949 = vmatpush1.xpose.msra.mxu0 0.0
  %1950 = vmatprep.subr.mxu0 0.0
  %1951 = vmatpush1.xpose.msra.mxu0 0.0
  %1952 = vmatprep.subr.mxu0 0.0
  %1953 = vmatpush1.xpose.msra.mxu0 0.0
  %1954 = vmatprep.subr.mxu0 0.0
  %1955 = vmatpush1.xpose.msra.mxu0 0.0
  %1956 = vmatprep.subr.mxu0 0.0
  %1957 = vmatpush1.xpose.msra.mxu0 0.0
  %1958 = vmatprep.subr.mxu0 0.0
  %1959 = vmatpush1.xpose.msra.mxu0 0.0
  %1960 = vmatprep.subr.mxu0 0.0
  %1961 = vmatpush1.xpose.msra.mxu0 0.0
  %1962 = vmatprep.subr.mxu0 0.0
  %1963 = vmatpush1.xpose.msra.mxu0 0.0
  %1964 = vmatprep.subr.mxu0 0.0
  %1965 = vmatpush1.xpose.msra.mxu0 0.0
  %1966 = vmatprep.subr.mxu0 0.0
  %1967 = vmatpush1.xpose.msra.mxu0 0.0
  %1968 = vmatprep.subr.mxu0 0.0
  %1969 = vmatpush1.xpose.msra.mxu0 0.0
  %1970 = vmatprep.subr.mxu0 0.0
  %1971 = vmatpush1.xpose.msra.mxu0 0.0
  %1972 = vmatprep.subr.mxu0 0.0
  %1973 = vmatpush1.xpose.msra.mxu0 0.0
  %1974 = vmatprep.subr.mxu0 0.0
  %1975 = vmatpush1.xpose.msra.mxu0 0.0
  %1976 = vmatprep.mubr.f32.mxu0 0.0
  %1977 = vmatmul.mubr.f32.gmra.mrb[0].mxu0 %v1498
  %v1978 = vpop.f32.mrb[0].mxu0
  %v1979 = vadd.f32 0.0, %v1978
  %v1980 = vpop.f32.mrb[0].mxu0
  %1981 = vdwg.mxu0
  %v1983 = vrot.slane %v1478, 4
  %1985 = vxpose.xlu0.b32.start [1/16] %v1983, 128
  %1986 = vxpose.xlu0.b32.cont [2/16] 0.0, 128
  %1987 = vxpose.xlu0.b32.cont [3/16] 0.0, 128
  %1988 = vxpose.xlu0.b32.cont [4/16] 0.0, 128
  %1989 = vxpose.xlu0.b32.cont [5/16] 0.0, 128
  %1990 = vxpose.xlu0.b32.cont [6/16] 0.0, 128
  %1991 = vxpose.xlu0.b32.cont [7/16] 0.0, 128
  %1992 = vxpose.xlu0.b32.cont [8/16] 0.0, 128
  %1993 = vxpose.xlu0.b32.cont [9/16] 0.0, 128
  %1994 = vxpose.xlu0.b32.cont [10/16] 0.0, 128
  %1995 = vxpose.xlu0.b32.cont [11/16] 0.0, 128
  %1996 = vxpose.xlu0.b32.cont [12/16] 0.0, 128
  %1997 = vxpose.xlu0.b32.cont [13/16] 0.0, 128
  %1998 = vxpose.xlu0.b32.cont [14/16] 0.0, 128
  %1999 = vxpose.xlu0.b32.cont [15/16] 0.0, 128
  %2000 = vxpose.xlu0.b32.end [16/16] 0.0, 128
  %v2001 = vpop.trf.xlu0
  %v2002 = vpop.trf.xlu0
  %v2003 = vpop.trf.xlu0
  %v2004 = vpop.trf.xlu0
  %v2005 = vpop.trf.xlu0
  %v2006 = vpop.trf.xlu0
  %v2007 = vpop.trf.xlu0
  %v2008 = vpop.trf.xlu0
  %v2009 = vpop.trf.xlu0
  %v2010 = vpop.trf.xlu0
  %v2011 = vpop.trf.xlu0
  %v2012 = vpop.trf.xlu0
  %v2013 = vpop.trf.xlu0
  %v2014 = vpop.trf.xlu0
  %v2015 = vpop.trf.xlu0
  %v2016 = vpop.trf.xlu0
  %v2017 = vrot.slane %v1488, 4
  %v2019 = vsel %vm138, %v2001, 0
  %v2022 = vsel %vm138, %v2002, 0
  %v2025 = vsel %vm138, %v2003, 0
  %v2028 = vsel %vm138, %v2004, 0
  %v2031 = vsel %vm138, %v2005, 0
  %v2034 = vsel %vm138, %v2006, 0
  %v2037 = vsel %vm138, %v2007, 0
  %v2040 = vsel %vm138, %v2008, 0
  %v2043 = vsel %vm138, %v2009, 0
  %v2046 = vsel %vm138, %v2010, 0
  %v2049 = vsel %vm138, %v2011, 0
  %v2052 = vsel %vm138, %v2012, 0
  %v2055 = vsel %vm138, %v2013, 0
  %v2058 = vsel %vm138, %v2014, 0
  %v2061 = vsel %vm138, %v2015, 0
  %v2064 = vsel %vm138, %v2016, 0
  %v2066 = vsel %vm142, %v2017, 0
  %2068 = vmatprep.subr.mxu0 0.0
  %2069 = vmatpush1.msra.mxu0 %v2066
  %2070 = vmatprep.subr.mxu0 0.0
  %2071 = vmatpush1.msra.mxu0 0.0
  %2072 = vmatprep.subr.mxu0 0.0
  %2073 = vmatpush1.msra.mxu0 0.0
  %2074 = vmatprep.subr.mxu0 0.0
  %2075 = vmatpush1.msra.mxu0 0.0
  %2076 = vmatprep.subr.mxu0 0.0
  %2077 = vmatpush1.msra.mxu0 0.0
  %2078 = vmatprep.subr.mxu0 0.0
  %2079 = vmatpush1.msra.mxu0 0.0
  %2080 = vmatprep.subr.mxu0 0.0
  %2081 = vmatpush1.msra.mxu0 0.0
  %2082 = vmatprep.subr.mxu0 0.0
  %2083 = vmatpush1.msra.mxu0 0.0
  %2084 = vmatprep.subr.mxu0 0.0
  %2085 = vmatpush1.msra.mxu0 0.0
  %2086 = vmatprep.subr.mxu0 0.0
  %2087 = vmatpush1.msra.mxu0 0.0
  %2088 = vmatprep.subr.mxu0 0.0
  %2089 = vmatpush1.msra.mxu0 0.0
  %2090 = vmatprep.subr.mxu0 0.0
  %2091 = vmatpush1.msra.mxu0 0.0
  %2092 = vmatprep.subr.mxu0 0.0
  %2093 = vmatpush1.msra.mxu0 0.0
  %2094 = vmatprep.subr.mxu0 0.0
  %2095 = vmatpush1.msra.mxu0 0.0
  %2096 = vmatprep.subr.mxu0 0.0
  %2097 = vmatpush1.msra.mxu0 0.0
  %2098 = vmatprep.subr.mxu0 0.0
  %2099 = vmatpush1.msra.mxu0 0.0
  %2100 = vmatprep.subr.mxu0 0.0
  %2101 = vmatpush1.msra.mxu0 0.0
  %2102 = vmatprep.subr.mxu0 0.0
  %2103 = vmatpush1.msra.mxu0 0.0
  %2104 = vmatprep.subr.mxu0 0.0
  %2105 = vmatpush1.msra.mxu0 0.0
  %2106 = vmatprep.subr.mxu0 0.0
  %2107 = vmatpush1.msra.mxu0 0.0
  %2108 = vmatprep.subr.mxu0 0.0
  %2109 = vmatpush1.msra.mxu0 0.0
  %2110 = vmatprep.subr.mxu0 0.0
  %2111 = vmatpush1.msra.mxu0 0.0
  %2112 = vmatprep.subr.mxu0 0.0
  %2113 = vmatpush1.msra.mxu0 0.0
  %2114 = vmatprep.subr.mxu0 0.0
  %2115 = vmatpush1.msra.mxu0 0.0
  %2116 = vmatprep.subr.mxu0 0.0
  %2117 = vmatpush1.msra.mxu0 0.0
  %2118 = vmatprep.subr.mxu0 0.0
  %2119 = vmatpush1.msra.mxu0 0.0
  %2120 = vmatprep.subr.mxu0 0.0
  %2121 = vmatpush1.msra.mxu0 0.0
  %2122 = vmatprep.subr.mxu0 0.0
  %2123 = vmatpush1.msra.mxu0 0.0
  %2124 = vmatprep.subr.mxu0 0.0
  %2125 = vmatpush1.msra.mxu0 0.0
  %2126 = vmatprep.subr.mxu0 0.0
  %2127 = vmatpush1.msra.mxu0 0.0
  %2128 = vmatprep.subr.mxu0 0.0
  %2129 = vmatpush1.msra.mxu0 0.0
  %2130 = vmatprep.subr.mxu0 0.0
  %2131 = vmatpush1.msra.mxu0 0.0
  %2132 = vmatprep.mubr.f32.mxu0 0.0
  %2133 = vmatmul.mubr.f32.gmra.mrb[0].mxu0 %v2019
  %v2134 = vpop.f32.mrb[0].mxu0
  %v2135 = vadd.f32 0.0, %v2134
  %v2136 = vpop.f32.mrb[0].mxu0
  %2137 = vmatprep.mubr.f32.mxu0 0.0
  %2138 = vmatmul.mubr.f32.gmra.mrb[0].mxu0 %v2022
  %v2139 = vpop.f32.mrb[0].mxu0
  %v2140 = vadd.f32 0.0, %v2139
  %v2141 = vpop.f32.mrb[0].mxu0
  %2142 = vmatprep.mubr.f32.mxu0 0.0
  %2143 = vmatmul.mubr.f32.gmra.mrb[0].mxu0 %v2025
  %v2144 = vpop.f32.mrb[0].mxu0
  %v2145 = vadd.f32 0.0, %v2144
  %v2146 = vpop.f32.mrb[0].mxu0
  %2147 = vmatprep.mubr.f32.mxu0 0.0
  %2148 = vmatmul.mubr.f32.gmra.mrb[0].mxu0 %v2028
  %v2149 = vpop.f32.mrb[0].mxu0
  %v2150 = vadd.f32 0.0, %v2149
  %v2151 = vpop.f32.mrb[0].mxu0
  %2152 = vmatprep.mubr.f32.mxu0 0.0
  %2153 = vmatmul.mubr.f32.gmra.mrb[0].mxu0 %v2031
  %v2154 = vpop.f32.mrb[0].mxu0
  %v2155 = vadd.f32 0.0, %v2154
  %v2156 = vpop.f32.mrb[0].mxu0
  %2157 = vmatprep.mubr.f32.mxu0 0.0
  %2158 = vmatmul.mubr.f32.gmra.mrb[0].mxu0 %v2034
  %v2159 = vpop.f32.mrb[0].mxu0
  %v2160 = vadd.f32 0.0, %v2159
  %v2161 = vpop.f32.mrb[0].mxu0
  %2162 = vmatprep.mubr.f32.mxu0 0.0
  %2163 = vmatmul.mubr.f32.gmra.mrb[0].mxu0 %v2037
  %v2164 = vpop.f32.mrb[0].mxu0
  %v2165 = vadd.f32 0.0, %v2164
  %v2166 = vpop.f32.mrb[0].mxu0
  %2167 = vmatprep.mubr.f32.mxu0 0.0
  %2168 = vmatmul.mubr.f32.gmra.mrb[0].mxu0 %v2040
  %v2169 = vpop.f32.mrb[0].mxu0
  %v2170 = vadd.f32 0.0, %v2169
  %v2171 = vpop.f32.mrb[0].mxu0
  %2172 = vmatprep.mubr.f32.mxu0 0.0
  %2173 = vmatmul.mubr.f32.gmra.mrb[0].mxu0 %v2043
  %v2174 = vpop.f32.mrb[0].mxu0
  %v2175 = vadd.f32 0.0, %v2174
  %v2176 = vpop.f32.mrb[0].mxu0
  %2177 = vmatprep.mubr.f32.mxu0 0.0
  %2178 = vmatmul.mubr.f32.gmra.mrb[0].mxu0 %v2046
  %v2179 = vpop.f32.mrb[0].mxu0
  %v2180 = vadd.f32 0.0, %v2179
  %v2181 = vpop.f32.mrb[0].mxu0
  %2182 = vmatprep.mubr.f32.mxu0 0.0
  %2183 = vmatmul.mubr.f32.gmra.mrb[0].mxu0 %v2049
  %v2184 = vpop.f32.mrb[0].mxu0
  %v2185 = vadd.f32 0.0, %v2184
  %v2186 = vpop.f32.mrb[0].mxu0
  %2187 = vmatprep.mubr.f32.mxu0 0.0
  %2188 = vmatmul.mubr.f32.gmra.mrb[0].mxu0 %v2052
  %v2189 = vpop.f32.mrb[0].mxu0
  %v2190 = vadd.f32 0.0, %v2189
  %v2191 = vpop.f32.mrb[0].mxu0
  %2192 = vmatprep.mubr.f32.mxu0 0.0
  %2193 = vmatmul.mubr.f32.gmra.mrb[0].mxu0 %v2055
  %v2194 = vpop.f32.mrb[0].mxu0
  %v2195 = vadd.f32 0.0, %v2194
  %v2196 = vpop.f32.mrb[0].mxu0
  %2197 = vmatprep.mubr.f32.mxu0 0.0
  %2198 = vmatmul.mubr.f32.gmra.mrb[0].mxu0 %v2058
  %v2199 = vpop.f32.mrb[0].mxu0
  %v2200 = vadd.f32 0.0, %v2199
  %v2201 = vpop.f32.mrb[0].mxu0
  %2202 = vmatprep.mubr.f32.mxu0 0.0
  %2203 = vmatmul.mubr.f32.gmra.mrb[0].mxu0 %v2061
  %v2204 = vpop.f32.mrb[0].mxu0
  %v2205 = vadd.f32 0.0, %v2204
  %v2206 = vpop.f32.mrb[0].mxu0
  %2207 = vmatprep.mubr.f32.mxu0 0.0
  %2208 = vmatmul.mubr.f32.gmra.mrb[0].mxu0 %v2064
  %v2209 = vpop.f32.mrb[0].mxu0
  %v2210 = vadd.f32 0.0, %v2209
  %v2211 = vpop.f32.mrb[0].mxu0
  %2212 = vdwg.mxu0
  %v2213 = vmul.f32 %v2135, 0.5
  %v2214 = vmul.f32 %v2140, 0.5
  %v2215 = vmul.f32 %v2145, 0.5
  %v2216 = vmul.f32 %v2150, 0.5
  %v2217 = vmul.f32 %v2155, 0.5
  %v2218 = vmul.f32 %v2160, 0.5
  %v2219 = vmul.f32 %v2165, 0.5
  %v2220 = vmul.f32 %v2170, 0.5
  %v2221 = vmul.f32 %v2175, 0.5
  %v2222 = vmul.f32 %v2180, 0.5
  %v2223 = vmul.f32 %v2185, 0.5
  %v2224 = vmul.f32 %v2190, 0.5
  %v2225 = vmul.f32 %v2195, 0.5
  %v2226 = vmul.f32 %v2200, 0.5
  %v2227 = vmul.f32 %v2205, 0.5
  %v2228 = vmul.f32 %v2210, 0.5
  %v2229 = vadd.f32 %v2213, %v1184
  %v2230 = vadd.f32 %v2214, %v1185
  %v2231 = vadd.f32 %v2215, %v1186
  %v2232 = vadd.f32 %v2216, %v1187
  %v2233 = vadd.f32 %v2217, %v1188
  %v2234 = vadd.f32 %v2218, %v1189
  %v2235 = vadd.f32 %v2219, %v1190
  %v2236 = vadd.f32 %v2220, %v1191
  %v2237 = vadd.f32 %v2221, %v1192
  %v2238 = vadd.f32 %v2222, %v1193
  %v2239 = vadd.f32 %v2223, %v1194
  %v2240 = vadd.f32 %v2224, %v1195
  %v2241 = vadd.f32 %v2225, %v1196
  %v2242 = vadd.f32 %v2226, %v1197
  %v2243 = vadd.f32 %v2227, %v1198
  %v2244 = vadd.f32 %v2228, %v1199
  %2245 = vmax.xlane.f32.xlu0 %v2229
  %v2246 = vpop.xlane.xlu0 %2245
  %2247 = vmax.xlane.f32.xlu0 %v2230
  %v2248 = vpop.xlane.xlu0 %2247
  %2249 = vmax.xlane.f32.xlu0 %v2231
  %v2250 = vpop.xlane.xlu0 %2249
  %2251 = vmax.xlane.f32.xlu0 %v2232
  %v2252 = vpop.xlane.xlu0 %2251
  %2253 = vmax.xlane.f32.xlu0 %v2233
  %v2254 = vpop.xlane.xlu0 %2253
  %2255 = vmax.xlane.f32.xlu0 %v2234
  %v2256 = vpop.xlane.xlu0 %2255
  %2257 = vmax.xlane.f32.xlu0 %v2235
  %v2258 = vpop.xlane.xlu0 %2257
  %2259 = vmax.xlane.f32.xlu0 %v2236
  %v2260 = vpop.xlane.xlu0 %2259
  %2261 = vmax.xlane.f32.xlu0 %v2237
  %v2262 = vpop.xlane.xlu0 %2261
  %2263 = vmax.xlane.f32.xlu0 %v2238
  %v2264 = vpop.xlane.xlu0 %2263
  %2265 = vmax.xlane.f32.xlu0 %v2239
  %v2266 = vpop.xlane.xlu0 %2265
  %2267 = vmax.xlane.f32.xlu0 %v2240
  %v2268 = vpop.xlane.xlu0 %2267
  %2269 = vmax.xlane.f32.xlu0 %v2241
  %v2270 = vpop.xlane.xlu0 %2269
  %2271 = vmax.xlane.f32.xlu0 %v2242
  %v2272 = vpop.xlane.xlu0 %2271
  %2273 = vmax.xlane.f32.xlu0 %v2243
  %v2274 = vpop.xlane.xlu0 %2273
  %2275 = vmax.xlane.f32.xlu0 %v2244
  %v2276 = vpop.xlane.xlu0 %2275
  %v2277 = vsub.f32 %v2229, %v2246
  %v2278 = vsub.f32 %v2230, %v2248
  %v2279 = vsub.f32 %v2231, %v2250
  %v2280 = vsub.f32 %v2232, %v2252
  %v2281 = vsub.f32 %v2233, %v2254
  %v2282 = vsub.f32 %v2234, %v2256
  %v2283 = vsub.f32 %v2235, %v2258
  %v2284 = vsub.f32 %v2236, %v2260
  %v2285 = vsub.f32 %v2237, %v2262
  %v2286 = vsub.f32 %v2238, %v2264
  %v2287 = vsub.f32 %v2239, %v2266
  %v2288 = vsub.f32 %v2240, %v2268
  %v2289 = vsub.f32 %v2241, %v2270
  %v2290 = vsub.f32 %v2242, %v2272
  %v2291 = vsub.f32 %v2243, %v2274
  %v2292 = vsub.f32 %v2244, %v2276
  %v2293 = vmul.f32 %v2277, 1.442695
  %v2294 = vpow.pop %v2293
  %v2295 = vmul.f32 %v2278, 1.442695
  %v2296 = vpow.pop %v2295
  %v2297 = vmul.f32 %v2279, 1.442695
  %v2298 = vpow.pop %v2297
  %v2299 = vmul.f32 %v2280, 1.442695
  %v2300 = vpow.pop %v2299
  %v2301 = vmul.f32 %v2281, 1.442695
  %v2302 = vpow.pop %v2301
  %v2303 = vmul.f32 %v2282, 1.442695
  %v2304 = vpow.pop %v2303
  %v2305 = vmul.f32 %v2283, 1.442695
  %v2306 = vpow.pop %v2305
  %v2307 = vmul.f32 %v2284, 1.442695
  %v2308 = vpow.pop %v2307
  %v2309 = vmul.f32 %v2285, 1.442695
  %v2310 = vpow.pop %v2309
  %v2311 = vmul.f32 %v2286, 1.442695
  %v2312 = vpow.pop %v2311
  %v2313 = vmul.f32 %v2287, 1.442695
  %v2314 = vpow.pop %v2313
  %v2315 = vmul.f32 %v2288, 1.442695
  %v2316 = vpow.pop %v2315
  %v2317 = vmul.f32 %v2289, 1.442695
  %v2318 = vpow.pop %v2317
  %v2319 = vmul.f32 %v2290, 1.442695
  %v2320 = vpow.pop %v2319
  %v2321 = vmul.f32 %v2291, 1.442695
  %v2322 = vpow.pop %v2321
  %v2323 = vmul.f32 %v2292, 1.442695
  %v2324 = vpow.pop %v2323
  %2325 = vadd.xlane.f32.xlu0 %v2294
  %v2326 = vpop.xlane.xlu0 %2325
  %2327 = vadd.xlane.f32.xlu0 %v2296
  %v2328 = vpop.xlane.xlu0 %2327
  %2329 = vadd.xlane.f32.xlu0 %v2298
  %v2330 = vpop.xlane.xlu0 %2329
  %2331 = vadd.xlane.f32.xlu0 %v2300
  %v2332 = vpop.xlane.xlu0 %2331
  %2333 = vadd.xlane.f32.xlu0 %v2302
  %v2334 = vpop.xlane.xlu0 %2333
  %2335 = vadd.xlane.f32.xlu0 %v2304
  %v2336 = vpop.xlane.xlu0 %2335
  %2337 = vadd.xlane.f32.xlu0 %v2306
  %v2338 = vpop.xlane.xlu0 %2337
  %2339 = vadd.xlane.f32.xlu0 %v2308
  %v2340 = vpop.xlane.xlu0 %2339
  %2341 = vadd.xlane.f32.xlu0 %v2310
  %v2342 = vpop.xlane.xlu0 %2341
  %2343 = vadd.xlane.f32.xlu0 %v2312
  %v2344 = vpop.xlane.xlu0 %2343
  %2345 = vadd.xlane.f32.xlu0 %v2314
  %v2346 = vpop.xlane.xlu0 %2345
  %2347 = vadd.xlane.f32.xlu0 %v2316
  %v2348 = vpop.xlane.xlu0 %2347
  %2349 = vadd.xlane.f32.xlu0 %v2318
  %v2350 = vpop.xlane.xlu0 %2349
  %2351 = vadd.xlane.f32.xlu0 %v2320
  %v2352 = vpop.xlane.xlu0 %2351
  %2353 = vadd.xlane.f32.xlu0 %v2322
  %v2354 = vpop.xlane.xlu0 %2353
  %2355 = vadd.xlane.f32.xlu0 %v2324
  %v2356 = vpop.xlane.xlu0 %2355
  %v2357 = vrcp.pop %v2326
  %v2358 = vrcp.pop %v2328
  %v2359 = vrcp.pop %v2330
  %v2360 = vrcp.pop %v2332
  %v2361 = vrcp.pop %v2334
  %v2362 = vrcp.pop %v2336
  %v2363 = vrcp.pop %v2338
  %v2364 = vrcp.pop %v2340
  %v2365 = vrcp.pop %v2342
  %v2366 = vrcp.pop %v2344
  %v2367 = vrcp.pop %v2346
  %v2368 = vrcp.pop %v2348
  %v2369 = vrcp.pop %v2350
  %v2370 = vrcp.pop %v2352
  %v2371 = vrcp.pop %v2354
  %v2372 = vrcp.pop %v2356
  %v2373 = vmul.f32 %v2294, %v2357
  %v2374 = vmul.f32 %v2296, %v2358
  %v2375 = vmul.f32 %v2298, %v2359
  %v2376 = vmul.f32 %v2300, %v2360
  %v2377 = vmul.f32 %v2302, %v2361
  %v2378 = vmul.f32 %v2304, %v2362
  %v2379 = vmul.f32 %v2306, %v2363
  %v2380 = vmul.f32 %v2308, %v2364
  %v2381 = vmul.f32 %v2310, %v2365
  %v2382 = vmul.f32 %v2312, %v2366
  %v2383 = vmul.f32 %v2314, %v2367
  %v2384 = vmul.f32 %v2316, %v2368
  %v2385 = vmul.f32 %v2318, %v2369
  %v2386 = vmul.f32 %v2320, %v2370
  %v2387 = vmul.f32 %v2322, %v2371
  %v2388 = vmul.f32 %v2324, %v2372
  %v2390 = vrot.slane %v1498, 4
  %2392 = vmatprep.subr.mxu0 0.0
  %2393 = vmatpush1.xpose.msra.mxu0 %v2373
  %2394 = vmatprep.subr.mxu0 0.0
  %2395 = vmatpush1.xpose.msra.mxu0 %v2374
  %2396 = vmatprep.subr.mxu0 0.0
  %2397 = vmatpush1.xpose.msra.mxu0 %v2375
  %2398 = vmatprep.subr.mxu0 0.0
  %2399 = vmatpush1.xpose.msra.mxu0 %v2376
  %2400 = vmatprep.subr.mxu0 0.0
  %2401 = vmatpush1.xpose.msra.mxu0 %v2377
  %2402 = vmatprep.subr.mxu0 0.0
  %2403 = vmatpush1.xpose.msra.mxu0 %v2378
  %2404 = vmatprep.subr.mxu0 0.0
  %2405 = vmatpush1.xpose.msra.mxu0 %v2379
  %2406 = vmatprep.subr.mxu0 0.0
  %2407 = vmatpush1.xpose.msra.mxu0 %v2380
  %2408 = vmatprep.subr.mxu0 0.0
  %2409 = vmatpush1.xpose.msra.mxu0 %v2381
  %2410 = vmatprep.subr.mxu0 0.0
  %2411 = vmatpush1.xpose.msra.mxu0 %v2382
  %2412 = vmatprep.subr.mxu0 0.0
  %2413 = vmatpush1.xpose.msra.mxu0 %v2383
  %2414 = vmatprep.subr.mxu0 0.0
  %2415 = vmatpush1.xpose.msra.mxu0 %v2384
  %2416 = vmatprep.subr.mxu0 0.0
  %2417 = vmatpush1.xpose.msra.mxu0 %v2385
  %2418 = vmatprep.subr.mxu0 0.0
  %2419 = vmatpush1.xpose.msra.mxu0 %v2386
  %2420 = vmatprep.subr.mxu0 0.0
  %2421 = vmatpush1.xpose.msra.mxu0 %v2387
  %2422 = vmatprep.subr.mxu0 0.0
  %2423 = vmatpush1.xpose.msra.mxu0 %v2388
  %2424 = vmatprep.subr.mxu0 0.0
  %2425 = vmatpush1.xpose.msra.mxu0 0.0
  %2426 = vmatprep.subr.mxu0 0.0
  %2427 = vmatpush1.xpose.msra.mxu0 0.0
  %2428 = vmatprep.subr.mxu0 0.0
  %2429 = vmatpush1.xpose.msra.mxu0 0.0
  %2430 = vmatprep.subr.mxu0 0.0
  %2431 = vmatpush1.xpose.msra.mxu0 0.0
  %2432 = vmatprep.subr.mxu0 0.0
  %2433 = vmatpush1.xpose.msra.mxu0 0.0
  %2434 = vmatprep.subr.mxu0 0.0
  %2435 = vmatpush1.xpose.msra.mxu0 0.0
  %2436 = vmatprep.subr.mxu0 0.0
  %2437 = vmatpush1.xpose.msra.mxu0 0.0
  %2438 = vmatprep.subr.mxu0 0.0
  %2439 = vmatpush1.xpose.msra.mxu0 0.0
  %2440 = vmatprep.subr.mxu0 0.0
  %2441 = vmatpush1.xpose.msra.mxu0 0.0
  %2442 = vmatprep.subr.mxu0 0.0
  %2443 = vmatpush1.xpose.msra.mxu0 0.0
  %2444 = vmatprep.subr.mxu0 0.0
  %2445 = vmatpush1.xpose.msra.mxu0 0.0
  %2446 = vmatprep.subr.mxu0 0.0
  %2447 = vmatpush1.xpose.msra.mxu0 0.0
  %2448 = vmatprep.subr.mxu0 0.0
  %2449 = vmatpush1.xpose.msra.mxu0 0.0
  %2450 = vmatprep.subr.mxu0 0.0
  %2451 = vmatpush1.xpose.msra.mxu0 0.0
  %2452 = vmatprep.subr.mxu0 0.0
  %2453 = vmatpush1.xpose.msra.mxu0 0.0
  %2454 = vmatprep.subr.mxu0 0.0
  %2455 = vmatpush1.xpose.msra.mxu0 0.0
  %2456 = vmatprep.mubr.f32.mxu0 0.0
  %2457 = vmatmul.mubr.f32.gmra.mrb[0].mxu0 %v2390
  %v2458 = vpop.f32.mrb[0].mxu0
  %v2459 = vadd.f32 0.0, %v2458
  %v2460 = vpop.f32.mrb[0].mxu0
  %2461 = vdwg.mxu0
  %2464 = vrot.lane.b32.xlu0 %v1506, 124
  %v2465 = vpop.permute.xlu0 %2464
  %2466 = vrot.lane.b32.xlu0 %v1507, 124
  %v2467 = vpop.permute.xlu0 %2466
  %v2468 = vsel %vm138, %v2465, 0
  %v2470 = vsel %vm138, %v2467, 0
  %v2473 = vsel %vm142, %v2459, 0
  %2475 = vmatprep.subr.mxu0 0.0
  %2476 = vmatpush1.msra.mxu0 %v2473
  %2477 = vmatprep.subr.mxu0 0.0
  %2478 = vmatpush1.msra.mxu0 0.0
  %2479 = vmatprep.subr.mxu0 0.0
  %2480 = vmatpush1.msra.mxu0 0.0
  %2481 = vmatprep.subr.mxu0 0.0
  %2482 = vmatpush1.msra.mxu0 0.0
  %2483 = vmatprep.subr.mxu0 0.0
  %2484 = vmatpush1.msra.mxu0 0.0
  %2485 = vmatprep.subr.mxu0 0.0
  %2486 = vmatpush1.msra.mxu0 0.0
  %2487 = vmatprep.subr.mxu0 0.0
  %2488 = vmatpush1.msra.mxu0 0.0
  %2489 = vmatprep.subr.mxu0 0.0
  %2490 = vmatpush1.msra.mxu0 0.0
  %2491 = vmatprep.subr.mxu0 0.0
  %2492 = vmatpush1.msra.mxu0 0.0
  %2493 = vmatprep.subr.mxu0 0.0
  %2494 = vmatpush1.msra.mxu0 0.0
  %2495 = vmatprep.subr.mxu0 0.0
  %2496 = vmatpush1.msra.mxu0 0.0
  %2497 = vmatprep.subr.mxu0 0.0
  %2498 = vmatpush1.msra.mxu0 0.0
  %2499 = vmatprep.subr.mxu0 0.0
  %2500 = vmatpush1.msra.mxu0 0.0
  %2501 = vmatprep.subr.mxu0 0.0
  %2502 = vmatpush1.msra.mxu0 0.0
  %2503 = vmatprep.subr.mxu0 0.0
  %2504 = vmatpush1.msra.mxu0 0.0
  %2505 = vmatprep.subr.mxu0 0.0
  %2506 = vmatpush1.msra.mxu0 0.0
  %2507 = vmatprep.subr.mxu0 0.0
  %2508 = vmatpush1.msra.mxu0 0.0
  %2509 = vmatprep.subr.mxu0 0.0
  %2510 = vmatpush1.msra.mxu0 0.0
  %2511 = vmatprep.subr.mxu0 0.0
  %2512 = vmatpush1.msra.mxu0 0.0
  %2513 = vmatprep.subr.mxu0 0.0
  %2514 = vmatpush1.msra.mxu0 0.0
  %2515 = vmatprep.subr.mxu0 0.0
  %2516 = vmatpush1.msra.mxu0 0.0
  %2517 = vmatprep.subr.mxu0 0.0
  %2518 = vmatpush1.msra.mxu0 0.0
  %2519 = vmatprep.subr.mxu0 0.0
  %2520 = vmatpush1.msra.mxu0 0.0
  %2521 = vmatprep.subr.mxu0 0.0
  %2522 = vmatpush1.msra.mxu0 0.0
  %2523 = vmatprep.subr.mxu0 0.0
  %2524 = vmatpush1.msra.mxu0 0.0
  %2525 = vmatprep.subr.mxu0 0.0
  %2526 = vmatpush1.msra.mxu0 0.0
  %2527 = vmatprep.subr.mxu0 0.0
  %2528 = vmatpush1.msra.mxu0 0.0
  %2529 = vmatprep.subr.mxu0 0.0
  %2530 = vmatpush1.msra.mxu0 0.0
  %2531 = vmatprep.subr.mxu0 0.0
  %2532 = vmatpush1.msra.mxu0 0.0
  %2533 = vmatprep.subr.mxu0 0.0
  %2534 = vmatpush1.msra.mxu0 0.0
  %2535 = vmatprep.subr.mxu0 0.0
  %2536 = vmatpush1.msra.mxu0 0.0
  %2537 = vmatprep.subr.mxu0 0.0
  %2538 = vmatpush1.msra.mxu0 0.0
  %2539 = vmatprep.mubr.f32.mxu0 0.0
  %2540 = vmatmul.mubr.f32.gmra.mrb[0].mxu0 %v2468
  %v2541 = vpop.f32.mrb[0].mxu0
  %v2542 = vadd.f32 0.0, %v2541
  %v2543 = vpop.f32.mrb[0].mxu0
  %2544 = vmatprep.mubr.f32.mxu0 0.0
  %2545 = vmatmul.mubr.f32.gmra.mrb[0].mxu0 %v2470
  %v2546 = vpop.f32.mrb[0].mxu0
  %v2547 = vadd.f32 0.0, %v2546
  %v2548 = vpop.f32.mrb[0].mxu0
  %2549 = vdwg.mxu0
  %v2550 = vsel %vm138, %v1506, 0
  %v2552 = vsel %vm138, %v1507, 0
  %v2555 = vsel %vm142, %v1979, 0
  %2557 = vmatprep.subr.mxu0 0.0
  %2558 = vmatpush1.msra.mxu0 %v2555
  %2559 = vmatprep.subr.mxu0 0.0
  %2560 = vmatpush1.msra.mxu0 0.0
  %2561 = vmatprep.subr.mxu0 0.0
  %2562 = vmatpush1.msra.mxu0 0.0
  %2563 = vmatprep.subr.mxu0 0.0
  %2564 = vmatpush1.msra.mxu0 0.0
  %2565 = vmatprep.subr.mxu0 0.0
  %2566 = vmatpush1.msra.mxu0 0.0
  %2567 = vmatprep.subr.mxu0 0.0
  %2568 = vmatpush1.msra.mxu0 0.0
  %2569 = vmatprep.subr.mxu0 0.0
  %2570 = vmatpush1.msra.mxu0 0.0
  %2571 = vmatprep.subr.mxu0 0.0
  %2572 = vmatpush1.msra.mxu0 0.0
  %2573 = vmatprep.subr.mxu0 0.0
  %2574 = vmatpush1.msra.mxu0 0.0
  %2575 = vmatprep.subr.mxu0 0.0
  %2576 = vmatpush1.msra.mxu0 0.0
  %2577 = vmatprep.subr.mxu0 0.0
  %2578 = vmatpush1.msra.mxu0 0.0
  %2579 = vmatprep.subr.mxu0 0.0
  %2580 = vmatpush1.msra.mxu0 0.0
  %2581 = vmatprep.subr.mxu0 0.0
  %2582 = vmatpush1.msra.mxu0 0.0
  %2583 = vmatprep.subr.mxu0 0.0
  %2584 = vmatpush1.msra.mxu0 0.0
  %2585 = vmatprep.subr.mxu0 0.0
  %2586 = vmatpush1.msra.mxu0 0.0
  %2587 = vmatprep.subr.mxu0 0.0
  %2588 = vmatpush1.msra.mxu0 0.0
  %2589 = vmatprep.subr.mxu0 0.0
  %2590 = vmatpush1.msra.mxu0 0.0
  %2591 = vmatprep.subr.mxu0 0.0
  %2592 = vmatpush1.msra.mxu0 0.0
  %2593 = vmatprep.subr.mxu0 0.0
  %2594 = vmatpush1.msra.mxu0 0.0
  %2595 = vmatprep.subr.mxu0 0.0
  %2596 = vmatpush1.msra.mxu0 0.0
  %2597 = vmatprep.subr.mxu0 0.0
  %2598 = vmatpush1.msra.mxu0 0.0
  %2599 = vmatprep.subr.mxu0 0.0
  %2600 = vmatpush1.msra.mxu0 0.0
  %2601 = vmatprep.subr.mxu0 0.0
  %2602 = vmatpush1.msra.mxu0 0.0
  %2603 = vmatprep.subr.mxu0 0.0
  %2604 = vmatpush1.msra.mxu0 0.0
  %2605 = vmatprep.subr.mxu0 0.0
  %2606 = vmatpush1.msra.mxu0 0.0
  %2607 = vmatprep.subr.mxu0 0.0
  %2608 = vmatpush1.msra.mxu0 0.0
  %2609 = vmatprep.subr.mxu0 0.0
  %2610 = vmatpush1.msra.mxu0 0.0
  %2611 = vmatprep.subr.mxu0 0.0
  %2612 = vmatpush1.msra.mxu0 0.0
  %2613 = vmatprep.subr.mxu0 0.0
  %2614 = vmatpush1.msra.mxu0 0.0
  %2615 = vmatprep.subr.mxu0 0.0
  %2616 = vmatpush1.msra.mxu0 0.0
  %2617 = vmatprep.subr.mxu0 0.0
  %2618 = vmatpush1.msra.mxu0 0.0
  %2619 = vmatprep.subr.mxu0 0.0
  %2620 = vmatpush1.msra.mxu0 0.0
  %2621 = vmatprep.mubr.f32.mxu0 0.0
  %2622 = vmatmul.mubr.f32.gmra.mrb[0].mxu0 %v2550
  %v2623 = vpop.f32.mrb[0].mxu0
  %v2624 = vadd.f32 %v2542, %v2623
  %v2625 = vpop.f32.mrb[0].mxu0
  %2626 = vmatprep.mubr.f32.mxu0 0.0
  %2627 = vmatmul.mubr.f32.gmra.mrb[0].mxu0 %v2552
  %v2628 = vpop.f32.mrb[0].mxu0
  %v2629 = vadd.f32 %v2547, %v2628
  %v2630 = vpop.f32.mrb[0].mxu0
  %2631 = vdwg.mxu0
  %2632 = vxpose.xlu0.b32.start [1/16] %v1483, 128
  %2633 = vxpose.xlu0.b32.cont [2/16] 0.0, 128
  %2634 = vxpose.xlu0.b32.cont [3/16] 0.0, 128
  %2635 = vxpose.xlu0.b32.cont [4/16] 0.0, 128
  %2636 = vxpose.xlu0.b32.cont [5/16] 0.0, 128
  %2637 = vxpose.xlu0.b32.cont [6/16] 0.0, 128
  %2638 = vxpose.xlu0.b32.cont [7/16] 0.0, 128
  %2639 = vxpose.xlu0.b32.cont [8/16] 0.0, 128
  %2640 = vxpose.xlu0.b32.cont [9/16] 0.0, 128
  %2641 = vxpose.xlu0.b32.cont [10/16] 0.0, 128
  %2642 = vxpose.xlu0.b32.cont [11/16] 0.0, 128
  %2643 = vxpose.xlu0.b32.cont [12/16] 0.0, 128
  %2644 = vxpose.xlu0.b32.cont [13/16] 0.0, 128
  %2645 = vxpose.xlu0.b32.cont [14/16] 0.0, 128
  %2646 = vxpose.xlu0.b32.cont [15/16] 0.0, 128
  %2647 = vxpose.xlu0.b32.end [16/16] 0.0, 128
  %v2648 = vpop.trf.xlu0
  %v2649 = vpop.trf.xlu0
  %v2650 = vpop.trf.xlu0
  %v2651 = vpop.trf.xlu0
  %v2652 = vpop.trf.xlu0
  %v2653 = vpop.trf.xlu0
  %v2654 = vpop.trf.xlu0
  %v2655 = vpop.trf.xlu0
  %v2656 = vpop.trf.xlu0
  %v2657 = vpop.trf.xlu0
  %v2658 = vpop.trf.xlu0
  %v2659 = vpop.trf.xlu0
  %v2660 = vpop.trf.xlu0
  %v2661 = vpop.trf.xlu0
  %v2662 = vpop.trf.xlu0
  %v2663 = vpop.trf.xlu0
  %v2665 = vsel %vm138, %v2648, 0
  %v2668 = vsel %vm138, %v2649, 0
  %v2671 = vsel %vm138, %v2650, 0
  %v2674 = vsel %vm138, %v2651, 0
  %v2677 = vsel %vm138, %v2652, 0
  %v2680 = vsel %vm138, %v2653, 0
  %v2683 = vsel %vm138, %v2654, 0
  %v2686 = vsel %vm138, %v2655, 0
  %v2689 = vsel %vm138, %v2656, 0
  %v2692 = vsel %vm138, %v2657, 0
  %v2695 = vsel %vm138, %v2658, 0
  %v2698 = vsel %vm138, %v2659, 0
  %v2701 = vsel %vm138, %v2660, 0
  %v2704 = vsel %vm138, %v2661, 0
  %v2707 = vsel %vm138, %v2662, 0
  %v2710 = vsel %vm138, %v2663, 0
  %v2713 = vsel %vm142, %v1493, 0
  %2715 = vmatprep.subr.mxu0 0.0
  %2716 = vmatpush1.msra.mxu0 %v2713
  %2717 = vmatprep.subr.mxu0 0.0
  %2718 = vmatpush1.msra.mxu0 0.0
  %2719 = vmatprep.subr.mxu0 0.0
  %2720 = vmatpush1.msra.mxu0 0.0
  %2721 = vmatprep.subr.mxu0 0.0
  %2722 = vmatpush1.msra.mxu0 0.0
  %2723 = vmatprep.subr.mxu0 0.0
  %2724 = vmatpush1.msra.mxu0 0.0
  %2725 = vmatprep.subr.mxu0 0.0
  %2726 = vmatpush1.msra.mxu0 0.0
  %2727 = vmatprep.subr.mxu0 0.0
  %2728 = vmatpush1.msra.mxu0 0.0
  %2729 = vmatprep.subr.mxu0 0.0
  %2730 = vmatpush1.msra.mxu0 0.0
  %2731 = vmatprep.subr.mxu0 0.0
  %2732 = vmatpush1.msra.mxu0 0.0
  %2733 = vmatprep.subr.mxu0 0.0
  %2734 = vmatpush1.msra.mxu0 0.0
  %2735 = vmatprep.subr.mxu0 0.0
  %2736 = vmatpush1.msra.mxu0 0.0
  %2737 = vmatprep.subr.mxu0 0.0
  %2738 = vmatpush1.msra.mxu0 0.0
  %2739 = vmatprep.subr.mxu0 0.0
  %2740 = vmatpush1.msra.mxu0 0.0
  %2741 = vmatprep.subr.mxu0 0.0
  %2742 = vmatpush1.msra.mxu0 0.0
  %2743 = vmatprep.subr.mxu0 0.0
  %2744 = vmatpush1.msra.mxu0 0.0
  %2745 = vmatprep.subr.mxu0 0.0
  %2746 = vmatpush1.msra.mxu0 0.0
  %2747 = vmatprep.subr.mxu0 0.0
  %2748 = vmatpush1.msra.mxu0 0.0
  %2749 = vmatprep.subr.mxu0 0.0
  %2750 = vmatpush1.msra.mxu0 0.0
  %2751 = vmatprep.subr.mxu0 0.0
  %2752 = vmatpush1.msra.mxu0 0.0
  %2753 = vmatprep.subr.mxu0 0.0
  %2754 = vmatpush1.msra.mxu0 0.0
  %2755 = vmatprep.subr.mxu0 0.0
  %2756 = vmatpush1.msra.mxu0 0.0
  %2757 = vmatprep.subr.mxu0 0.0
  %2758 = vmatpush1.msra.mxu0 0.0
  %2759 = vmatprep.subr.mxu0 0.0
  %2760 = vmatpush1.msra.mxu0 0.0
  %2761 = vmatprep.subr.mxu0 0.0
  %2762 = vmatpush1.msra.mxu0 0.0
  %2763 = vmatprep.subr.mxu0 0.0
  %2764 = vmatpush1.msra.mxu0 0.0
  %2765 = vmatprep.subr.mxu0 0.0
  %2766 = vmatpush1.msra.mxu0 0.0
  %2767 = vmatprep.subr.mxu0 0.0
  %2768 = vmatpush1.msra.mxu0 0.0
  %2769 = vmatprep.subr.mxu0 0.0
  %2770 = vmatpush1.msra.mxu0 0.0
  %2771 = vmatprep.subr.mxu0 0.0
  %2772 = vmatpush1.msra.mxu0 0.0
  %2773 = vmatprep.subr.mxu0 0.0
  %2774 = vmatpush1.msra.mxu0 0.0
  %2775 = vmatprep.subr.mxu0 0.0
  %2776 = vmatpush1.msra.mxu0 0.0
  %2777 = vmatprep.subr.mxu0 0.0
  %2778 = vmatpush1.msra.mxu0 0.0
  %2779 = vmatprep.mubr.f32.mxu0 0.0
  %2780 = vmatmul.mubr.f32.gmra.mrb[0].mxu0 %v2665
  %v2781 = vpop.f32.mrb[0].mxu0
  %v2782 = vadd.f32 0.0, %v2781
  %v2783 = vpop.f32.mrb[0].mxu0
  %2784 = vmatprep.mubr.f32.mxu0 0.0
  %2785 = vmatmul.mubr.f32.gmra.mrb[0].mxu0 %v2668
  %v2786 = vpop.f32.mrb[0].mxu0
  %v2787 = vadd.f32 0.0, %v2786
  %v2788 = vpop.f32.mrb[0].mxu0
  %2789 = vmatprep.mubr.f32.mxu0 0.0
  %2790 = vmatmul.mubr.f32.gmra.mrb[0].mxu0 %v2671
  %v2791 = vpop.f32.mrb[0].mxu0
  %v2792 = vadd.f32 0.0, %v2791
  %v2793 = vpop.f32.mrb[0].mxu0
  %2794 = vmatprep.mubr.f32.mxu0 0.0
  %2795 = vmatmul.mubr.f32.gmra.mrb[0].mxu0 %v2674
  %v2796 = vpop.f32.mrb[0].mxu0
  %v2797 = vadd.f32 0.0, %v2796
  %v2798 = vpop.f32.mrb[0].mxu0
  %2799 = vmatprep.mubr.f32.mxu0 0.0
  %2800 = vmatmul.mubr.f32.gmra.mrb[0].mxu0 %v2677
  %v2801 = vpop.f32.mrb[0].mxu0
  %v2802 = vadd.f32 0.0, %v2801
  %v2803 = vpop.f32.mrb[0].mxu0
  %2804 = vmatprep.mubr.f32.mxu0 0.0
  %2805 = vmatmul.mubr.f32.gmra.mrb[0].mxu0 %v2680
  %v2806 = vpop.f32.mrb[0].mxu0
  %v2807 = vadd.f32 0.0, %v2806
  %v2808 = vpop.f32.mrb[0].mxu0
  %2809 = vmatprep.mubr.f32.mxu0 0.0
  %2810 = vmatmul.mubr.f32.gmra.mrb[0].mxu0 %v2683
  %v2811 = vpop.f32.mrb[0].mxu0
  %v2812 = vadd.f32 0.0, %v2811
  %v2813 = vpop.f32.mrb[0].mxu0
  %2814 = vmatprep.mubr.f32.mxu0 0.0
  %2815 = vmatmul.mubr.f32.gmra.mrb[0].mxu0 %v2686
  %v2816 = vpop.f32.mrb[0].mxu0
  %v2817 = vadd.f32 0.0, %v2816
  %v2818 = vpop.f32.mrb[0].mxu0
  %2819 = vmatprep.mubr.f32.mxu0 0.0
  %2820 = vmatmul.mubr.f32.gmra.mrb[0].mxu0 %v2689
  %v2821 = vpop.f32.mrb[0].mxu0
  %v2822 = vadd.f32 0.0, %v2821
  %v2823 = vpop.f32.mrb[0].mxu0
  %2824 = vmatprep.mubr.f32.mxu0 0.0
  %2825 = vmatmul.mubr.f32.gmra.mrb[0].mxu0 %v2692
  %v2826 = vpop.f32.mrb[0].mxu0
  %v2827 = vadd.f32 0.0, %v2826
  %v2828 = vpop.f32.mrb[0].mxu0
  %2829 = vmatprep.mubr.f32.mxu0 0.0
  %2830 = vmatmul.mubr.f32.gmra.mrb[0].mxu0 %v2695
  %v2831 = vpop.f32.mrb[0].mxu0
  %v2832 = vadd.f32 0.0, %v2831
  %v2833 = vpop.f32.mrb[0].mxu0
  %2834 = vmatprep.mubr.f32.mxu0 0.0
  %2835 = vmatmul.mubr.f32.gmra.mrb[0].mxu0 %v2698
  %v2836 = vpop.f32.mrb[0].mxu0
  %v2837 = vadd.f32 0.0, %v2836
  %v2838 = vpop.f32.mrb[0].mxu0
  %2839 = vmatprep.mubr.f32.mxu0 0.0
  %2840 = vmatmul.mubr.f32.gmra.mrb[0].mxu0 %v2701
  %v2841 = vpop.f32.mrb[0].mxu0
  %v2842 = vadd.f32 0.0, %v2841
  %v2843 = vpop.f32.mrb[0].mxu0
  %2844 = vmatprep.mubr.f32.mxu0 0.0
  %2845 = vmatmul.mubr.f32.gmra.mrb[0].mxu0 %v2704
  %v2846 = vpop.f32.mrb[0].mxu0
  %v2847 = vadd.f32 0.0, %v2846
  %v2848 = vpop.f32.mrb[0].mxu0
  %2849 = vmatprep.mubr.f32.mxu0 0.0
  %2850 = vmatmul.mubr.f32.gmra.mrb[0].mxu0 %v2707
  %v2851 = vpop.f32.mrb[0].mxu0
  %v2852 = vadd.f32 0.0, %v2851
  %v2853 = vpop.f32.mrb[0].mxu0
  %2854 = vmatprep.mubr.f32.mxu0 0.0
  %2855 = vmatmul.mubr.f32.gmra.mrb[0].mxu0 %v2710
  %v2856 = vpop.f32.mrb[0].mxu0
  %v2857 = vadd.f32 0.0, %v2856
  %v2858 = vpop.f32.mrb[0].mxu0
  %2859 = vdwg.mxu0
  %v2860 = vmul.f32 %v2782, 0.5
  %v2861 = vmul.f32 %v2787, 0.5
  %v2862 = vmul.f32 %v2792, 0.5
  %v2863 = vmul.f32 %v2797, 0.5
  %v2864 = vmul.f32 %v2802, 0.5
  %v2865 = vmul.f32 %v2807, 0.5
  %v2866 = vmul.f32 %v2812, 0.5
  %v2867 = vmul.f32 %v2817, 0.5
  %v2868 = vmul.f32 %v2822, 0.5
  %v2869 = vmul.f32 %v2827, 0.5
  %v2870 = vmul.f32 %v2832, 0.5
  %v2871 = vmul.f32 %v2837, 0.5
  %v2872 = vmul.f32 %v2842, 0.5
  %v2873 = vmul.f32 %v2847, 0.5
  %v2874 = vmul.f32 %v2852, 0.5
  %v2875 = vmul.f32 %v2857, 0.5
  %v2876 = vadd.f32 %v2860, %v1184
  %v2877 = vadd.f32 %v2861, %v1185
  %v2878 = vadd.f32 %v2862, %v1186
  %v2879 = vadd.f32 %v2863, %v1187
  %v2880 = vadd.f32 %v2864, %v1188
  %v2881 = vadd.f32 %v2865, %v1189
  %v2882 = vadd.f32 %v2866, %v1190
  %v2883 = vadd.f32 %v2867, %v1191
  %v2884 = vadd.f32 %v2868, %v1192
  %v2885 = vadd.f32 %v2869, %v1193
  %v2886 = vadd.f32 %v2870, %v1194
  %v2887 = vadd.f32 %v2871, %v1195
  %v2888 = vadd.f32 %v2872, %v1196
  %v2889 = vadd.f32 %v2873, %v1197
  %v2890 = vadd.f32 %v2874, %v1198
  %v2891 = vadd.f32 %v2875, %v1199
  %2892 = vmax.xlane.f32.xlu0 %v2876
  %v2893 = vpop.xlane.xlu0 %2892
  %2894 = vmax.xlane.f32.xlu0 %v2877
  %v2895 = vpop.xlane.xlu0 %2894
  %2896 = vmax.xlane.f32.xlu0 %v2878
  %v2897 = vpop.xlane.xlu0 %2896
  %2898 = vmax.xlane.f32.xlu0 %v2879
  %v2899 = vpop.xlane.xlu0 %2898
  %2900 = vmax.xlane.f32.xlu0 %v2880
  %v2901 = vpop.xlane.xlu0 %2900
  %2902 = vmax.xlane.f32.xlu0 %v2881
  %v2903 = vpop.xlane.xlu0 %2902
  %2904 = vmax.xlane.f32.xlu0 %v2882
  %v2905 = vpop.xlane.xlu0 %2904
  %2906 = vmax.xlane.f32.xlu0 %v2883
  %v2907 = vpop.xlane.xlu0 %2906
  %2908 = vmax.xlane.f32.xlu0 %v2884
  %v2909 = vpop.xlane.xlu0 %2908
  %2910 = vmax.xlane.f32.xlu0 %v2885
  %v2911 = vpop.xlane.xlu0 %2910
  %2912 = vmax.xlane.f32.xlu0 %v2886
  %v2913 = vpop.xlane.xlu0 %2912
  %2914 = vmax.xlane.f32.xlu0 %v2887
  %v2915 = vpop.xlane.xlu0 %2914
  %2916 = vmax.xlane.f32.xlu0 %v2888
  %v2917 = vpop.xlane.xlu0 %2916
  %2918 = vmax.xlane.f32.xlu0 %v2889
  %v2919 = vpop.xlane.xlu0 %2918
  %2920 = vmax.xlane.f32.xlu0 %v2890
  %v2921 = vpop.xlane.xlu0 %2920
  %2922 = vmax.xlane.f32.xlu0 %v2891
  %v2923 = vpop.xlane.xlu0 %2922
  %v2924 = vsub.f32 %v2876, %v2893
  %v2925 = vsub.f32 %v2877, %v2895
  %v2926 = vsub.f32 %v2878, %v2897
  %v2927 = vsub.f32 %v2879, %v2899
  %v2928 = vsub.f32 %v2880, %v2901
  %v2929 = vsub.f32 %v2881, %v2903
  %v2930 = vsub.f32 %v2882, %v2905
  %v2931 = vsub.f32 %v2883, %v2907
  %v2932 = vsub.f32 %v2884, %v2909
  %v2933 = vsub.f32 %v2885, %v2911
  %v2934 = vsub.f32 %v2886, %v2913
  %v2935 = vsub.f32 %v2887, %v2915
  %v2936 = vsub.f32 %v2888, %v2917
  %v2937 = vsub.f32 %v2889, %v2919
  %v2938 = vsub.f32 %v2890, %v2921
  %v2939 = vsub.f32 %v2891, %v2923
  %v2940 = vmul.f32 %v2924, 1.442695
  %v2941 = vpow.pop %v2940
  %v2942 = vmul.f32 %v2925, 1.442695
  %v2943 = vpow.pop %v2942
  %v2944 = vmul.f32 %v2926, 1.442695
  %v2945 = vpow.pop %v2944
  %v2946 = vmul.f32 %v2927, 1.442695
  %v2947 = vpow.pop %v2946
  %v2948 = vmul.f32 %v2928, 1.442695
  %v2949 = vpow.pop %v2948
  %v2950 = vmul.f32 %v2929, 1.442695
  %v2951 = vpow.pop %v2950
  %v2952 = vmul.f32 %v2930, 1.442695
  %v2953 = vpow.pop %v2952
  %v2954 = vmul.f32 %v2931, 1.442695
  %v2955 = vpow.pop %v2954
  %v2956 = vmul.f32 %v2932, 1.442695
  %v2957 = vpow.pop %v2956
  %v2958 = vmul.f32 %v2933, 1.442695
  %v2959 = vpow.pop %v2958
  %v2960 = vmul.f32 %v2934, 1.442695
  %v2961 = vpow.pop %v2960
  %v2962 = vmul.f32 %v2935, 1.442695
  %v2963 = vpow.pop %v2962
  %v2964 = vmul.f32 %v2936, 1.442695
  %v2965 = vpow.pop %v2964
  %v2966 = vmul.f32 %v2937, 1.442695
  %v2967 = vpow.pop %v2966
  %v2968 = vmul.f32 %v2938, 1.442695
  %v2969 = vpow.pop %v2968
  %v2970 = vmul.f32 %v2939, 1.442695
  %v2971 = vpow.pop %v2970
  %2972 = vadd.xlane.f32.xlu0 %v2941
  %v2973 = vpop.xlane.xlu0 %2972
  %2974 = vadd.xlane.f32.xlu0 %v2943
  %v2975 = vpop.xlane.xlu0 %2974
  %2976 = vadd.xlane.f32.xlu0 %v2945
  %v2977 = vpop.xlane.xlu0 %2976
  %2978 = vadd.xlane.f32.xlu0 %v2947
  %v2979 = vpop.xlane.xlu0 %2978
  %2980 = vadd.xlane.f32.xlu0 %v2949
  %v2981 = vpop.xlane.xlu0 %2980
  %2982 = vadd.xlane.f32.xlu0 %v2951
  %v2983 = vpop.xlane.xlu0 %2982
  %2984 = vadd.xlane.f32.xlu0 %v2953
  %v2985 = vpop.xlane.xlu0 %2984
  %2986 = vadd.xlane.f32.xlu0 %v2955
  %v2987 = vpop.xlane.xlu0 %2986
  %2988 = vadd.xlane.f32.xlu0 %v2957
  %v2989 = vpop.xlane.xlu0 %2988
  %2990 = vadd.xlane.f32.xlu0 %v2959
  %v2991 = vpop.xlane.xlu0 %2990
  %2992 = vadd.xlane.f32.xlu0 %v2961
  %v2993 = vpop.xlane.xlu0 %2992
  %2994 = vadd.xlane.f32.xlu0 %v2963
  %v2995 = vpop.xlane.xlu0 %2994
  %2996 = vadd.xlane.f32.xlu0 %v2965
  %v2997 = vpop.xlane.xlu0 %2996
  %2998 = vadd.xlane.f32.xlu0 %v2967
  %v2999 = vpop.xlane.xlu0 %2998
  %3000 = vadd.xlane.f32.xlu0 %v2969
  %v3001 = vpop.xlane.xlu0 %3000
  %3002 = vadd.xlane.f32.xlu0 %v2971
  %v3003 = vpop.xlane.xlu0 %3002
  %v3004 = vrcp.pop %v2973
  %v3005 = vrcp.pop %v2975
  %v3006 = vrcp.pop %v2977
  %v3007 = vrcp.pop %v2979
  %v3008 = vrcp.pop %v2981
  %v3009 = vrcp.pop %v2983
  %v3010 = vrcp.pop %v2985
  %v3011 = vrcp.pop %v2987
  %v3012 = vrcp.pop %v2989
  %v3013 = vrcp.pop %v2991
  %v3014 = vrcp.pop %v2993
  %v3015 = vrcp.pop %v2995
  %v3016 = vrcp.pop %v2997
  %v3017 = vrcp.pop %v2999
  %v3018 = vrcp.pop %v3001
  %v3019 = vrcp.pop %v3003
  %v3020 = vmul.f32 %v2941, %v3004
  %v3021 = vmul.f32 %v2943, %v3005
  %v3022 = vmul.f32 %v2945, %v3006
  %v3023 = vmul.f32 %v2947, %v3007
  %v3024 = vmul.f32 %v2949, %v3008
  %v3025 = vmul.f32 %v2951, %v3009
  %v3026 = vmul.f32 %v2953, %v3010
  %v3027 = vmul.f32 %v2955, %v3011
  %v3028 = vmul.f32 %v2957, %v3012
  %v3029 = vmul.f32 %v2959, %v3013
  %v3030 = vmul.f32 %v2961, %v3014
  %v3031 = vmul.f32 %v2963, %v3015
  %v3032 = vmul.f32 %v2965, %v3016
  %v3033 = vmul.f32 %v2967, %v3017
  %v3034 = vmul.f32 %v2969, %v3018
  %v3035 = vmul.f32 %v2971, %v3019
  %3036 = vmatprep.subr.mxu0 0.0
  %3037 = vmatpush1.xpose.msra.mxu0 %v3020
  %3038 = vmatprep.subr.mxu0 0.0
  %3039 = vmatpush1.xpose.msra.mxu0 %v3021
  %3040 = vmatprep.subr.mxu0 0.0
  %3041 = vmatpush1.xpose.msra.mxu0 %v3022
  %3042 = vmatprep.subr.mxu0 0.0
  %3043 = vmatpush1.xpose.msra.mxu0 %v3023
  %3044 = vmatprep.subr.mxu0 0.0
  %3045 = vmatpush1.xpose.msra.mxu0 %v3024
  %3046 = vmatprep.subr.mxu0 0.0
  %3047 = vmatpush1.xpose.msra.mxu0 %v3025
  %3048 = vmatprep.subr.mxu0 0.0
  %3049 = vmatpush1.xpose.msra.mxu0 %v3026
  %3050 = vmatprep.subr.mxu0 0.0
  %3051 = vmatpush1.xpose.msra.mxu0 %v3027
  %3052 = vmatprep.subr.mxu0 0.0
  %3053 = vmatpush1.xpose.msra.mxu0 %v3028
  %3054 = vmatprep.subr.mxu0 0.0
  %3055 = vmatpush1.xpose.msra.mxu0 %v3029
  %3056 = vmatprep.subr.mxu0 0.0
  %3057 = vmatpush1.xpose.msra.mxu0 %v3030
  %3058 = vmatprep.subr.mxu0 0.0
  %3059 = vmatpush1.xpose.msra.mxu0 %v3031
  %3060 = vmatprep.subr.mxu0 0.0
  %3061 = vmatpush1.xpose.msra.mxu0 %v3032
  %3062 = vmatprep.subr.mxu0 0.0
  %3063 = vmatpush1.xpose.msra.mxu0 %v3033
  %3064 = vmatprep.subr.mxu0 0.0
  %3065 = vmatpush1.xpose.msra.mxu0 %v3034
  %3066 = vmatprep.subr.mxu0 0.0
  %3067 = vmatpush1.xpose.msra.mxu0 %v3035
  %3068 = vmatprep.subr.mxu0 0.0
  %3069 = vmatpush1.xpose.msra.mxu0 0.0
  %3070 = vmatprep.subr.mxu0 0.0
  %3071 = vmatpush1.xpose.msra.mxu0 0.0
  %3072 = vmatprep.subr.mxu0 0.0
  %3073 = vmatpush1.xpose.msra.mxu0 0.0
  %3074 = vmatprep.subr.mxu0 0.0
  %3075 = vmatpush1.xpose.msra.mxu0 0.0
  %3076 = vmatprep.subr.mxu0 0.0
  %3077 = vmatpush1.xpose.msra.mxu0 0.0
  %3078 = vmatprep.subr.mxu0 0.0
  %3079 = vmatpush1.xpose.msra.mxu0 0.0
  %3080 = vmatprep.subr.mxu0 0.0
  %3081 = vmatpush1.xpose.msra.mxu0 0.0
  %3082 = vmatprep.subr.mxu0 0.0
  %3083 = vmatpush1.xpose.msra.mxu0 0.0
  %3084 = vmatprep.subr.mxu0 0.0
  %3085 = vmatpush1.xpose.msra.mxu0 0.0
  %3086 = vmatprep.subr.mxu0 0.0
  %3087 = vmatpush1.xpose.msra.mxu0 0.0
  %3088 = vmatprep.subr.mxu0 0.0
  %3089 = vmatpush1.xpose.msra.mxu0 0.0
  %3090 = vmatprep.subr.mxu0 0.0
  %3091 = vmatpush1.xpose.msra.mxu0 0.0
  %3092 = vmatprep.subr.mxu0 0.0
  %3093 = vmatpush1.xpose.msra.mxu0 0.0
  %3094 = vmatprep.subr.mxu0 0.0
  %3095 = vmatpush1.xpose.msra.mxu0 0.0
  %3096 = vmatprep.subr.mxu0 0.0
  %3097 = vmatpush1.xpose.msra.mxu0 0.0
  %3098 = vmatprep.subr.mxu0 0.0
  %3099 = vmatpush1.xpose.msra.mxu0 0.0
  %3100 = vmatprep.mubr.f32.mxu0 0.0
  %3101 = vmatmul.mubr.f32.gmra.mrb[0].mxu0 %v1503
  %v3102 = vpop.f32.mrb[0].mxu0
  %v3103 = vadd.f32 0.0, %v3102
  %v3104 = vpop.f32.mrb[0].mxu0
  %3105 = vdwg.mxu0
  %3106 = vrot.lane.b32.xlu0 %v1506, 120
  %v3107 = vpop.permute.xlu0 %3106
  %3108 = vrot.lane.b32.xlu0 %v1507, 120
  %v3109 = vpop.permute.xlu0 %3108
  %v3110 = vsel %vm138, %v3107, 0
  %v3112 = vsel %vm138, %v3109, 0
  %v3115 = vsel %vm142, %v3103, 0
  %3117 = vmatprep.subr.mxu0 0.0
  %3118 = vmatpush1.msra.mxu0 %v3115
  %3119 = vmatprep.subr.mxu0 0.0
  %3120 = vmatpush1.msra.mxu0 0.0
  %3121 = vmatprep.subr.mxu0 0.0
  %3122 = vmatpush1.msra.mxu0 0.0
  %3123 = vmatprep.subr.mxu0 0.0
  %3124 = vmatpush1.msra.mxu0 0.0
  %3125 = vmatprep.subr.mxu0 0.0
  %3126 = vmatpush1.msra.mxu0 0.0
  %3127 = vmatprep.subr.mxu0 0.0
  %3128 = vmatpush1.msra.mxu0 0.0
  %3129 = vmatprep.subr.mxu0 0.0
  %3130 = vmatpush1.msra.mxu0 0.0
  %3131 = vmatprep.subr.mxu0 0.0
  %3132 = vmatpush1.msra.mxu0 0.0
  %3133 = vmatprep.subr.mxu0 0.0
  %3134 = vmatpush1.msra.mxu0 0.0
  %3135 = vmatprep.subr.mxu0 0.0
  %3136 = vmatpush1.msra.mxu0 0.0
  %3137 = vmatprep.subr.mxu0 0.0
  %3138 = vmatpush1.msra.mxu0 0.0
  %3139 = vmatprep.subr.mxu0 0.0
  %3140 = vmatpush1.msra.mxu0 0.0
  %3141 = vmatprep.subr.mxu0 0.0
  %3142 = vmatpush1.msra.mxu0 0.0
  %3143 = vmatprep.subr.mxu0 0.0
  %3144 = vmatpush1.msra.mxu0 0.0
  %3145 = vmatprep.subr.mxu0 0.0
  %3146 = vmatpush1.msra.mxu0 0.0
  %3147 = vmatprep.subr.mxu0 0.0
  %3148 = vmatpush1.msra.mxu0 0.0
  %3149 = vmatprep.subr.mxu0 0.0
  %3150 = vmatpush1.msra.mxu0 0.0
  %3151 = vmatprep.subr.mxu0 0.0
  %3152 = vmatpush1.msra.mxu0 0.0
  %3153 = vmatprep.subr.mxu0 0.0
  %3154 = vmatpush1.msra.mxu0 0.0
  %3155 = vmatprep.subr.mxu0 0.0
  %3156 = vmatpush1.msra.mxu0 0.0
  %3157 = vmatprep.subr.mxu0 0.0
  %3158 = vmatpush1.msra.mxu0 0.0
  %3159 = vmatprep.subr.mxu0 0.0
  %3160 = vmatpush1.msra.mxu0 0.0
  %3161 = vmatprep.subr.mxu0 0.0
  %3162 = vmatpush1.msra.mxu0 0.0
  %3163 = vmatprep.subr.mxu0 0.0
  %3164 = vmatpush1.msra.mxu0 0.0
  %3165 = vmatprep.subr.mxu0 0.0
  %3166 = vmatpush1.msra.mxu0 0.0
  %3167 = vmatprep.subr.mxu0 0.0
  %3168 = vmatpush1.msra.mxu0 0.0
  %3169 = vmatprep.subr.mxu0 0.0
  %3170 = vmatpush1.msra.mxu0 0.0
  %3171 = vmatprep.subr.mxu0 0.0
  %3172 = vmatpush1.msra.mxu0 0.0
  %3173 = vmatprep.subr.mxu0 0.0
  %3174 = vmatpush1.msra.mxu0 0.0
  %3175 = vmatprep.subr.mxu0 0.0
  %3176 = vmatpush1.msra.mxu0 0.0
  %3177 = vmatprep.subr.mxu0 0.0
  %3178 = vmatpush1.msra.mxu0 0.0
  %3179 = vmatprep.subr.mxu0 0.0
  %3180 = vmatpush1.msra.mxu0 0.0
  %3181 = vmatprep.mubr.f32.mxu0 0.0
  %3182 = vmatmul.mubr.f32.gmra.mrb[0].mxu0 %v3110
  %v3183 = vpop.f32.mrb[0].mxu0
  %v3184 = vadd.f32 0.0, %v3183
  %v3185 = vpop.f32.mrb[0].mxu0
  %3186 = vmatprep.mubr.f32.mxu0 0.0
  %3187 = vmatmul.mubr.f32.gmra.mrb[0].mxu0 %v3112
  %v3188 = vpop.f32.mrb[0].mxu0
  %v3189 = vadd.f32 0.0, %v3188
  %v3190 = vpop.f32.mrb[0].mxu0
  %3191 = vdwg.mxu0
  %v3192 = vadd.f32 %v2624, %v3184
  %v3193 = vadd.f32 %v2629, %v3189
  %v3195 = vrot.slane %v1483, 4
  %3197 = vxpose.xlu0.b32.start [1/16] %v3195, 128
  %3198 = vxpose.xlu0.b32.cont [2/16] 0.0, 128
  %3199 = vxpose.xlu0.b32.cont [3/16] 0.0, 128
  %3200 = vxpose.xlu0.b32.cont [4/16] 0.0, 128
  %3201 = vxpose.xlu0.b32.cont [5/16] 0.0, 128
  %3202 = vxpose.xlu0.b32.cont [6/16] 0.0, 128
  %3203 = vxpose.xlu0.b32.cont [7/16] 0.0, 128
  %3204 = vxpose.xlu0.b32.cont [8/16] 0.0, 128
  %3205 = vxpose.xlu0.b32.cont [9/16] 0.0, 128
  %3206 = vxpose.xlu0.b32.cont [10/16] 0.0, 128
  %3207 = vxpose.xlu0.b32.cont [11/16] 0.0, 128
  %3208 = vxpose.xlu0.b32.cont [12/16] 0.0, 128
  %3209 = vxpose.xlu0.b32.cont [13/16] 0.0, 128
  %3210 = vxpose.xlu0.b32.cont [14/16] 0.0, 128
  %3211 = vxpose.xlu0.b32.cont [15/16] 0.0, 128
  %3212 = vxpose.xlu0.b32.end [16/16] 0.0, 128
  %v3213 = vpop.trf.xlu0
  %v3214 = vpop.trf.xlu0
  %v3215 = vpop.trf.xlu0
  %v3216 = vpop.trf.xlu0
  %v3217 = vpop.trf.xlu0
  %v3218 = vpop.trf.xlu0
  %v3219 = vpop.trf.xlu0
  %v3220 = vpop.trf.xlu0
  %v3221 = vpop.trf.xlu0
  %v3222 = vpop.trf.xlu0
  %v3223 = vpop.trf.xlu0
  %v3224 = vpop.trf.xlu0
  %v3225 = vpop.trf.xlu0
  %v3226 = vpop.trf.xlu0
  %v3227 = vpop.trf.xlu0
  %v3228 = vpop.trf.xlu0
  %v3229 = vrot.slane %v1493, 4
  %v3231 = vsel %vm138, %v3213, 0
  %v3234 = vsel %vm138, %v3214, 0
  %v3237 = vsel %vm138, %v3215, 0
  %v3240 = vsel %vm138, %v3216, 0
  %v3243 = vsel %vm138, %v3217, 0
  %v3246 = vsel %vm138, %v3218, 0
  %v3249 = vsel %vm138, %v3219, 0
  %v3252 = vsel %vm138, %v3220, 0
  %v3255 = vsel %vm138, %v3221, 0
  %v3258 = vsel %vm138, %v3222, 0
  %v3261 = vsel %vm138, %v3223, 0
  %v3264 = vsel %vm138, %v3224, 0
  %v3267 = vsel %vm138, %v3225, 0
  %v3270 = vsel %vm138, %v3226, 0
  %v3273 = vsel %vm138, %v3227, 0
  %v3276 = vsel %vm138, %v3228, 0
  %v3278 = vsel %vm142, %v3229, 0
  %3280 = vmatprep.subr.mxu0 0.0
  %3281 = vmatpush1.msra.mxu0 %v3278
  %3282 = vmatprep.subr.mxu0 0.0
  %3283 = vmatpush1.msra.mxu0 0.0
  %3284 = vmatprep.subr.mxu0 0.0
  %3285 = vmatpush1.msra.mxu0 0.0
  %3286 = vmatprep.subr.mxu0 0.0
  %3287 = vmatpush1.msra.mxu0 0.0
  %3288 = vmatprep.subr.mxu0 0.0
  %3289 = vmatpush1.msra.mxu0 0.0
  %3290 = vmatprep.subr.mxu0 0.0
  %3291 = vmatpush1.msra.mxu0 0.0
  %3292 = vmatprep.subr.mxu0 0.0
  %3293 = vmatpush1.msra.mxu0 0.0
  %3294 = vmatprep.subr.mxu0 0.0
  %3295 = vmatpush1.msra.mxu0 0.0
  %3296 = vmatprep.subr.mxu0 0.0
  %3297 = vmatpush1.msra.mxu0 0.0
  %3298 = vmatprep.subr.mxu0 0.0
  %3299 = vmatpush1.msra.mxu0 0.0
  %3300 = vmatprep.subr.mxu0 0.0
  %3301 = vmatpush1.msra.mxu0 0.0
  %3302 = vmatprep.subr.mxu0 0.0
  %3303 = vmatpush1.msra.mxu0 0.0
  %3304 = vmatprep.subr.mxu0 0.0
  %3305 = vmatpush1.msra.mxu0 0.0
  %3306 = vmatprep.subr.mxu0 0.0
  %3307 = vmatpush1.msra.mxu0 0.0
  %3308 = vmatprep.subr.mxu0 0.0
  %3309 = vmatpush1.msra.mxu0 0.0
  %3310 = vmatprep.subr.mxu0 0.0
  %3311 = vmatpush1.msra.mxu0 0.0
  %3312 = vmatprep.subr.mxu0 0.0
  %3313 = vmatpush1.msra.mxu0 0.0
  %3314 = vmatprep.subr.mxu0 0.0
  %3315 = vmatpush1.msra.mxu0 0.0
  %3316 = vmatprep.subr.mxu0 0.0
  %3317 = vmatpush1.msra.mxu0 0.0
  %3318 = vmatprep.subr.mxu0 0.0
  %3319 = vmatpush1.msra.mxu0 0.0
  %3320 = vmatprep.subr.mxu0 0.0
  %3321 = vmatpush1.msra.mxu0 0.0
  %3322 = vmatprep.subr.mxu0 0.0
  %3323 = vmatpush1.msra.mxu0 0.0
  %3324 = vmatprep.subr.mxu0 0.0
  %3325 = vmatpush1.msra.mxu0 0.0
  %3326 = vmatprep.subr.mxu0 0.0
  %3327 = vmatpush1.msra.mxu0 0.0
  %3328 = vmatprep.subr.mxu0 0.0
  %3329 = vmatpush1.msra.mxu0 0.0
  %3330 = vmatprep.subr.mxu0 0.0
  %3331 = vmatpush1.msra.mxu0 0.0
  %3332 = vmatprep.subr.mxu0 0.0
  %3333 = vmatpush1.msra.mxu0 0.0
  %3334 = vmatprep.subr.mxu0 0.0
  %3335 = vmatpush1.msra.mxu0 0.0
  %3336 = vmatprep.subr.mxu0 0.0
  %3337 = vmatpush1.msra.mxu0 0.0
  %3338 = vmatprep.subr.mxu0 0.0
  %3339 = vmatpush1.msra.mxu0 0.0
  %3340 = vmatprep.subr.mxu0 0.0
  %3341 = vmatpush1.msra.mxu0 0.0
  %3342 = vmatprep.subr.mxu0 0.0
  %3343 = vmatpush1.msra.mxu0 0.0
  %3344 = vmatprep.mubr.f32.mxu0 0.0
  %3345 = vmatmul.mubr.f32.gmra.mrb[0].mxu0 %v3231
  %v3346 = vpop.f32.mrb[0].mxu0
  %v3347 = vadd.f32 0.0, %v3346
  %v3348 = vpop.f32.mrb[0].mxu0
  %3349 = vmatprep.mubr.f32.mxu0 0.0
  %3350 = vmatmul.mubr.f32.gmra.mrb[0].mxu0 %v3234
  %v3351 = vpop.f32.mrb[0].mxu0
  %v3352 = vadd.f32 0.0, %v3351
  %v3353 = vpop.f32.mrb[0].mxu0
  %3354 = vmatprep.mubr.f32.mxu0 0.0
  %3355 = vmatmul.mubr.f32.gmra.mrb[0].mxu0 %v3237
  %v3356 = vpop.f32.mrb[0].mxu0
  %v3357 = vadd.f32 0.0, %v3356
  %v3358 = vpop.f32.mrb[0].mxu0
  %3359 = vmatprep.mubr.f32.mxu0 0.0
  %3360 = vmatmul.mubr.f32.gmra.mrb[0].mxu0 %v3240
  %v3361 = vpop.f32.mrb[0].mxu0
  %v3362 = vadd.f32 0.0, %v3361
  %v3363 = vpop.f32.mrb[0].mxu0
  %3364 = vmatprep.mubr.f32.mxu0 0.0
  %3365 = vmatmul.mubr.f32.gmra.mrb[0].mxu0 %v3243
  %v3366 = vpop.f32.mrb[0].mxu0
  %v3367 = vadd.f32 0.0, %v3366
  %v3368 = vpop.f32.mrb[0].mxu0
  %3369 = vmatprep.mubr.f32.mxu0 0.0
  %3370 = vmatmul.mubr.f32.gmra.mrb[0].mxu0 %v3246
  %v3371 = vpop.f32.mrb[0].mxu0
  %v3372 = vadd.f32 0.0, %v3371
  %v3373 = vpop.f32.mrb[0].mxu0
  %3374 = vmatprep.mubr.f32.mxu0 0.0
  %3375 = vmatmul.mubr.f32.gmra.mrb[0].mxu0 %v3249
  %v3376 = vpop.f32.mrb[0].mxu0
  %v3377 = vadd.f32 0.0, %v3376
  %v3378 = vpop.f32.mrb[0].mxu0
  %3379 = vmatprep.mubr.f32.mxu0 0.0
  %3380 = vmatmul.mubr.f32.gmra.mrb[0].mxu0 %v3252
  %v3381 = vpop.f32.mrb[0].mxu0
  %v3382 = vadd.f32 0.0, %v3381
  %v3383 = vpop.f32.mrb[0].mxu0
  %3384 = vmatprep.mubr.f32.mxu0 0.0
  %3385 = vmatmul.mubr.f32.gmra.mrb[0].mxu0 %v3255
  %v3386 = vpop.f32.mrb[0].mxu0
  %v3387 = vadd.f32 0.0, %v3386
  %v3388 = vpop.f32.mrb[0].mxu0
  %3389 = vmatprep.mubr.f32.mxu0 0.0
  %3390 = vmatmul.mubr.f32.gmra.mrb[0].mxu0 %v3258
  %v3391 = vpop.f32.mrb[0].mxu0
  %v3392 = vadd.f32 0.0, %v3391
  %v3393 = vpop.f32.mrb[0].mxu0
  %3394 = vmatprep.mubr.f32.mxu0 0.0
  %3395 = vmatmul.mubr.f32.gmra.mrb[0].mxu0 %v3261
  %v3396 = vpop.f32.mrb[0].mxu0
  %v3397 = vadd.f32 0.0, %v3396
  %v3398 = vpop.f32.mrb[0].mxu0
  %3399 = vmatprep.mubr.f32.mxu0 0.0
  %3400 = vmatmul.mubr.f32.gmra.mrb[0].mxu0 %v3264
  %v3401 = vpop.f32.mrb[0].mxu0
  %v3402 = vadd.f32 0.0, %v3401
  %v3403 = vpop.f32.mrb[0].mxu0
  %3404 = vmatprep.mubr.f32.mxu0 0.0
  %3405 = vmatmul.mubr.f32.gmra.mrb[0].mxu0 %v3267
  %v3406 = vpop.f32.mrb[0].mxu0
  %v3407 = vadd.f32 0.0, %v3406
  %v3408 = vpop.f32.mrb[0].mxu0
  %3409 = vmatprep.mubr.f32.mxu0 0.0
  %3410 = vmatmul.mubr.f32.gmra.mrb[0].mxu0 %v3270
  %v3411 = vpop.f32.mrb[0].mxu0
  %v3412 = vadd.f32 0.0, %v3411
  %v3413 = vpop.f32.mrb[0].mxu0
  %3414 = vmatprep.mubr.f32.mxu0 0.0
  %3415 = vmatmul.mubr.f32.gmra.mrb[0].mxu0 %v3273
  %v3416 = vpop.f32.mrb[0].mxu0
  %v3417 = vadd.f32 0.0, %v3416
  %v3418 = vpop.f32.mrb[0].mxu0
  %3419 = vmatprep.mubr.f32.mxu0 0.0
  %3420 = vmatmul.mubr.f32.gmra.mrb[0].mxu0 %v3276
  %v3421 = vpop.f32.mrb[0].mxu0
  %v3422 = vadd.f32 0.0, %v3421
  %v3423 = vpop.f32.mrb[0].mxu0
  %3424 = vdwg.mxu0
  %v3425 = vmul.f32 %v3347, 0.5
  %v3426 = vmul.f32 %v3352, 0.5
  %v3427 = vmul.f32 %v3357, 0.5
  %v3428 = vmul.f32 %v3362, 0.5
  %v3429 = vmul.f32 %v3367, 0.5
  %v3430 = vmul.f32 %v3372, 0.5
  %v3431 = vmul.f32 %v3377, 0.5
  %v3432 = vmul.f32 %v3382, 0.5
  %v3433 = vmul.f32 %v3387, 0.5
  %v3434 = vmul.f32 %v3392, 0.5
  %v3435 = vmul.f32 %v3397, 0.5
  %v3436 = vmul.f32 %v3402, 0.5
  %v3437 = vmul.f32 %v3407, 0.5
  %v3438 = vmul.f32 %v3412, 0.5
  %v3439 = vmul.f32 %v3417, 0.5
  %v3440 = vmul.f32 %v3422, 0.5
  %v3441 = vadd.f32 %v3425, %v1184
  %v3442 = vadd.f32 %v3426, %v1185
  %v3443 = vadd.f32 %v3427, %v1186
  %v3444 = vadd.f32 %v3428, %v1187
  %v3445 = vadd.f32 %v3429, %v1188
  %v3446 = vadd.f32 %v3430, %v1189
  %v3447 = vadd.f32 %v3431, %v1190
  %v3448 = vadd.f32 %v3432, %v1191
  %v3449 = vadd.f32 %v3433, %v1192
  %v3450 = vadd.f32 %v3434, %v1193
  %v3451 = vadd.f32 %v3435, %v1194
  %v3452 = vadd.f32 %v3436, %v1195
  %v3453 = vadd.f32 %v3437, %v1196
  %v3454 = vadd.f32 %v3438, %v1197
  %v3455 = vadd.f32 %v3439, %v1198
  %v3456 = vadd.f32 %v3440, %v1199
  %3457 = vmax.xlane.f32.xlu0 %v3441
  %v3458 = vpop.xlane.xlu0 %3457
  %3459 = vmax.xlane.f32.xlu0 %v3442
  %v3460 = vpop.xlane.xlu0 %3459
  %3461 = vmax.xlane.f32.xlu0 %v3443
  %v3462 = vpop.xlane.xlu0 %3461
  %3463 = vmax.xlane.f32.xlu0 %v3444
  %v3464 = vpop.xlane.xlu0 %3463
  %3465 = vmax.xlane.f32.xlu0 %v3445
  %v3466 = vpop.xlane.xlu0 %3465
  %3467 = vmax.xlane.f32.xlu0 %v3446
  %v3468 = vpop.xlane.xlu0 %3467
  %3469 = vmax.xlane.f32.xlu0 %v3447
  %v3470 = vpop.xlane.xlu0 %3469
  %3471 = vmax.xlane.f32.xlu0 %v3448
  %v3472 = vpop.xlane.xlu0 %3471
  %3473 = vmax.xlane.f32.xlu0 %v3449
  %v3474 = vpop.xlane.xlu0 %3473
  %3475 = vmax.xlane.f32.xlu0 %v3450
  %v3476 = vpop.xlane.xlu0 %3475
  %3477 = vmax.xlane.f32.xlu0 %v3451
  %v3478 = vpop.xlane.xlu0 %3477
  %3479 = vmax.xlane.f32.xlu0 %v3452
  %v3480 = vpop.xlane.xlu0 %3479
  %3481 = vmax.xlane.f32.xlu0 %v3453
  %v3482 = vpop.xlane.xlu0 %3481
  %3483 = vmax.xlane.f32.xlu0 %v3454
  %v3484 = vpop.xlane.xlu0 %3483
  %3485 = vmax.xlane.f32.xlu0 %v3455
  %v3486 = vpop.xlane.xlu0 %3485
  %3487 = vmax.xlane.f32.xlu0 %v3456
  %v3488 = vpop.xlane.xlu0 %3487
  %v3489 = vsub.f32 %v3441, %v3458
  %v3490 = vsub.f32 %v3442, %v3460
  %v3491 = vsub.f32 %v3443, %v3462
  %v3492 = vsub.f32 %v3444, %v3464
  %v3493 = vsub.f32 %v3445, %v3466
  %v3494 = vsub.f32 %v3446, %v3468
  %v3495 = vsub.f32 %v3447, %v3470
  %v3496 = vsub.f32 %v3448, %v3472
  %v3497 = vsub.f32 %v3449, %v3474
  %v3498 = vsub.f32 %v3450, %v3476
  %v3499 = vsub.f32 %v3451, %v3478
  %v3500 = vsub.f32 %v3452, %v3480
  %v3501 = vsub.f32 %v3453, %v3482
  %v3502 = vsub.f32 %v3454, %v3484
  %v3503 = vsub.f32 %v3455, %v3486
  %v3504 = vsub.f32 %v3456, %v3488
  %v3505 = vmul.f32 %v3489, 1.442695
  %v3506 = vpow.pop %v3505
  %v3507 = vmul.f32 %v3490, 1.442695
  %v3508 = vpow.pop %v3507
  %v3509 = vmul.f32 %v3491, 1.442695
  %v3510 = vpow.pop %v3509
  %v3511 = vmul.f32 %v3492, 1.442695
  %v3512 = vpow.pop %v3511
  %v3513 = vmul.f32 %v3493, 1.442695
  %v3514 = vpow.pop %v3513
  %v3515 = vmul.f32 %v3494, 1.442695
  %v3516 = vpow.pop %v3515
  %v3517 = vmul.f32 %v3495, 1.442695
  %v3518 = vpow.pop %v3517
  %v3519 = vmul.f32 %v3496, 1.442695
  %v3520 = vpow.pop %v3519
  %v3521 = vmul.f32 %v3497, 1.442695
  %v3522 = vpow.pop %v3521
  %v3523 = vmul.f32 %v3498, 1.442695
  %v3524 = vpow.pop %v3523
  %v3525 = vmul.f32 %v3499, 1.442695
  %v3526 = vpow.pop %v3525
  %v3527 = vmul.f32 %v3500, 1.442695
  %v3528 = vpow.pop %v3527
  %v3529 = vmul.f32 %v3501, 1.442695
  %v3530 = vpow.pop %v3529
  %v3531 = vmul.f32 %v3502, 1.442695
  %v3532 = vpow.pop %v3531
  %v3533 = vmul.f32 %v3503, 1.442695
  %v3534 = vpow.pop %v3533
  %v3535 = vmul.f32 %v3504, 1.442695
  %v3536 = vpow.pop %v3535
  %3537 = vadd.xlane.f32.xlu0 %v3506
  %v3538 = vpop.xlane.xlu0 %3537
  %3539 = vadd.xlane.f32.xlu0 %v3508
  %v3540 = vpop.xlane.xlu0 %3539
  %3541 = vadd.xlane.f32.xlu0 %v3510
  %v3542 = vpop.xlane.xlu0 %3541
  %3543 = vadd.xlane.f32.xlu0 %v3512
  %v3544 = vpop.xlane.xlu0 %3543
  %3545 = vadd.xlane.f32.xlu0 %v3514
  %v3546 = vpop.xlane.xlu0 %3545
  %3547 = vadd.xlane.f32.xlu0 %v3516
  %v3548 = vpop.xlane.xlu0 %3547
  %3549 = vadd.xlane.f32.xlu0 %v3518
  %v3550 = vpop.xlane.xlu0 %3549
  %3551 = vadd.xlane.f32.xlu0 %v3520
  %v3552 = vpop.xlane.xlu0 %3551
  %3553 = vadd.xlane.f32.xlu0 %v3522
  %v3554 = vpop.xlane.xlu0 %3553
  %3555 = vadd.xlane.f32.xlu0 %v3524
  %v3556 = vpop.xlane.xlu0 %3555
  %3557 = vadd.xlane.f32.xlu0 %v3526
  %v3558 = vpop.xlane.xlu0 %3557
  %3559 = vadd.xlane.f32.xlu0 %v3528
  %v3560 = vpop.xlane.xlu0 %3559
  %3561 = vadd.xlane.f32.xlu0 %v3530
  %v3562 = vpop.xlane.xlu0 %3561
  %3563 = vadd.xlane.f32.xlu0 %v3532
  %v3564 = vpop.xlane.xlu0 %3563
  %3565 = vadd.xlane.f32.xlu0 %v3534
  %v3566 = vpop.xlane.xlu0 %3565
  %3567 = vadd.xlane.f32.xlu0 %v3536
  %v3568 = vpop.xlane.xlu0 %3567
  %v3569 = vrcp.pop %v3538
  %v3570 = vrcp.pop %v3540
  %v3571 = vrcp.pop %v3542
  %v3572 = vrcp.pop %v3544
  %v3573 = vrcp.pop %v3546
  %v3574 = vrcp.pop %v3548
  %v3575 = vrcp.pop %v3550
  %v3576 = vrcp.pop %v3552
  %v3577 = vrcp.pop %v3554
  %v3578 = vrcp.pop %v3556
  %v3579 = vrcp.pop %v3558
  %v3580 = vrcp.pop %v3560
  %v3581 = vrcp.pop %v3562
  %v3582 = vrcp.pop %v3564
  %v3583 = vrcp.pop %v3566
  %v3584 = vrcp.pop %v3568
  %v3585 = vmul.f32 %v3506, %v3569
  %v3586 = vmul.f32 %v3508, %v3570
  %v3587 = vmul.f32 %v3510, %v3571
  %v3588 = vmul.f32 %v3512, %v3572
  %v3589 = vmul.f32 %v3514, %v3573
  %v3590 = vmul.f32 %v3516, %v3574
  %v3591 = vmul.f32 %v3518, %v3575
  %v3592 = vmul.f32 %v3520, %v3576
  %v3593 = vmul.f32 %v3522, %v3577
  %v3594 = vmul.f32 %v3524, %v3578
  %v3595 = vmul.f32 %v3526, %v3579
  %v3596 = vmul.f32 %v3528, %v3580
  %v3597 = vmul.f32 %v3530, %v3581
  %v3598 = vmul.f32 %v3532, %v3582
  %v3599 = vmul.f32 %v3534, %v3583
  %v3600 = vmul.f32 %v3536, %v3584
  %v3602 = vrot.slane %v1503, 4
  %3604 = vmatprep.subr.mxu0 0.0
  %3605 = vmatpush1.xpose.msra.mxu0 %v3585
  %3606 = vmatprep.subr.mxu0 0.0
  %3607 = vmatpush1.xpose.msra.mxu0 %v3586
  %3608 = vmatprep.subr.mxu0 0.0
  %3609 = vmatpush1.xpose.msra.mxu0 %v3587
  %3610 = vmatprep.subr.mxu0 0.0
  %3611 = vmatpush1.xpose.msra.mxu0 %v3588
  %3612 = vmatprep.subr.mxu0 0.0
  %3613 = vmatpush1.xpose.msra.mxu0 %v3589
  %3614 = vmatprep.subr.mxu0 0.0
  %3615 = vmatpush1.xpose.msra.mxu0 %v3590
  %3616 = vmatprep.subr.mxu0 0.0
  %3617 = vmatpush1.xpose.msra.mxu0 %v3591
  %3618 = vmatprep.subr.mxu0 0.0
  %3619 = vmatpush1.xpose.msra.mxu0 %v3592
  %3620 = vmatprep.subr.mxu0 0.0
  %3621 = vmatpush1.xpose.msra.mxu0 %v3593
  %3622 = vmatprep.subr.mxu0 0.0
  %3623 = vmatpush1.xpose.msra.mxu0 %v3594
  %3624 = vmatprep.subr.mxu0 0.0
  %3625 = vmatpush1.xpose.msra.mxu0 %v3595
  %3626 = vmatprep.subr.mxu0 0.0
  %3627 = vmatpush1.xpose.msra.mxu0 %v3596
  %3628 = vmatprep.subr.mxu0 0.0
  %3629 = vmatpush1.xpose.msra.mxu0 %v3597
  %3630 = vmatprep.subr.mxu0 0.0
  %3631 = vmatpush1.xpose.msra.mxu0 %v3598
  %3632 = vmatprep.subr.mxu0 0.0
  %3633 = vmatpush1.xpose.msra.mxu0 %v3599
  %3634 = vmatprep.subr.mxu0 0.0
  %3635 = vmatpush1.xpose.msra.mxu0 %v3600
  %3636 = vmatprep.subr.mxu0 0.0
  %3637 = vmatpush1.xpose.msra.mxu0 0.0
  %3638 = vmatprep.subr.mxu0 0.0
  %3639 = vmatpush1.xpose.msra.mxu0 0.0
  %3640 = vmatprep.subr.mxu0 0.0
  %3641 = vmatpush1.xpose.msra.mxu0 0.0
  %3642 = vmatprep.subr.mxu0 0.0
  %3643 = vmatpush1.xpose.msra.mxu0 0.0
  %3644 = vmatprep.subr.mxu0 0.0
  %3645 = vmatpush1.xpose.msra.mxu0 0.0
  %3646 = vmatprep.subr.mxu0 0.0
  %3647 = vmatpush1.xpose.msra.mxu0 0.0
  %3648 = vmatprep.subr.mxu0 0.0
  %3649 = vmatpush1.xpose.msra.mxu0 0.0
  %3650 = vmatprep.subr.mxu0 0.0
  %3651 = vmatpush1.xpose.msra.mxu0 0.0
  %3652 = vmatprep.subr.mxu0 0.0
  %3653 = vmatpush1.xpose.msra.mxu0 0.0
  %3654 = vmatprep.subr.mxu0 0.0
  %3655 = vmatpush1.xpose.msra.mxu0 0.0
  %3656 = vmatprep.subr.mxu0 0.0
  %3657 = vmatpush1.xpose.msra.mxu0 0.0
  %3658 = vmatprep.subr.mxu0 0.0
  %3659 = vmatpush1.xpose.msra.mxu0 0.0
  %3660 = vmatprep.subr.mxu0 0.0
  %3661 = vmatpush1.xpose.msra.mxu0 0.0
  %3662 = vmatprep.subr.mxu0 0.0
  %3663 = vmatpush1.xpose.msra.mxu0 0.0
  %3664 = vmatprep.subr.mxu0 0.0
  %3665 = vmatpush1.xpose.msra.mxu0 0.0
  %3666 = vmatprep.subr.mxu0 0.0
  %3667 = vmatpush1.xpose.msra.mxu0 0.0
  %3668 = vmatprep.mubr.f32.mxu0 0.0
  %3669 = vmatmul.mubr.f32.gmra.mrb[0].mxu0 %v3602
  %v3670 = vpop.f32.mrb[0].mxu0
  %v3671 = vadd.f32 0.0, %v3670
  %v3672 = vpop.f32.mrb[0].mxu0
  %3673 = vdwg.mxu0
  %3674 = vrot.lane.b32.xlu0 %v1506, 116
  %v3675 = vpop.permute.xlu0 %3674
  %3676 = vrot.lane.b32.xlu0 %v1507, 116
  %v3677 = vpop.permute.xlu0 %3676
  %v3678 = vsel %vm138, %v3675, 0
  %v3680 = vsel %vm138, %v3677, 0
  %v3683 = vsel %vm142, %v3671, 0
  %3685 = vmatprep.subr.mxu0 0.0
  %3686 = vmatpush1.msra.mxu0 %v3683
  %3687 = vmatprep.subr.mxu0 0.0
  %3688 = vmatpush1.msra.mxu0 0.0
  %3689 = vmatprep.subr.mxu0 0.0
  %3690 = vmatpush1.msra.mxu0 0.0
  %3691 = vmatprep.subr.mxu0 0.0
  %3692 = vmatpush1.msra.mxu0 0.0
  %3693 = vmatprep.subr.mxu0 0.0
  %3694 = vmatpush1.msra.mxu0 0.0
  %3695 = vmatprep.subr.mxu0 0.0
  %3696 = vmatpush1.msra.mxu0 0.0
  %3697 = vmatprep.subr.mxu0 0.0
  %3698 = vmatpush1.msra.mxu0 0.0
  %3699 = vmatprep.subr.mxu0 0.0
  %3700 = vmatpush1.msra.mxu0 0.0
  %3701 = vmatprep.subr.mxu0 0.0
  %3702 = vmatpush1.msra.mxu0 0.0
  %3703 = vmatprep.subr.mxu0 0.0
  %3704 = vmatpush1.msra.mxu0 0.0
  %3705 = vmatprep.subr.mxu0 0.0
  %3706 = vmatpush1.msra.mxu0 0.0
  %3707 = vmatprep.subr.mxu0 0.0
  %3708 = vmatpush1.msra.mxu0 0.0
  %3709 = vmatprep.subr.mxu0 0.0
  %3710 = vmatpush1.msra.mxu0 0.0
  %3711 = vmatprep.subr.mxu0 0.0
  %3712 = vmatpush1.msra.mxu0 0.0
  %3713 = vmatprep.subr.mxu0 0.0
  %3714 = vmatpush1.msra.mxu0 0.0
  %3715 = vmatprep.subr.mxu0 0.0
  %3716 = vmatpush1.msra.mxu0 0.0
  %3717 = vmatprep.subr.mxu0 0.0
  %3718 = vmatpush1.msra.mxu0 0.0
  %3719 = vmatprep.subr.mxu0 0.0
  %3720 = vmatpush1.msra.mxu0 0.0
  %3721 = vmatprep.subr.mxu0 0.0
  %3722 = vmatpush1.msra.mxu0 0.0
  %3723 = vmatprep.subr.mxu0 0.0
  %3724 = vmatpush1.msra.mxu0 0.0
  %3725 = vmatprep.subr.mxu0 0.0
  %3726 = vmatpush1.msra.mxu0 0.0
  %3727 = vmatprep.subr.mxu0 0.0
  %3728 = vmatpush1.msra.mxu0 0.0
  %3729 = vmatprep.subr.mxu0 0.0
  %3730 = vmatpush1.msra.mxu0 0.0
  %3731 = vmatprep.subr.mxu0 0.0
  %3732 = vmatpush1.msra.mxu0 0.0
  %3733 = vmatprep.subr.mxu0 0.0
  %3734 = vmatpush1.msra.mxu0 0.0
  %3735 = vmatprep.subr.mxu0 0.0
  %3736 = vmatpush1.msra.mxu0 0.0
  %3737 = vmatprep.subr.mxu0 0.0
  %3738 = vmatpush1.msra.mxu0 0.0
  %3739 = vmatprep.subr.mxu0 0.0
  %3740 = vmatpush1.msra.mxu0 0.0
  %3741 = vmatprep.subr.mxu0 0.0
  %3742 = vmatpush1.msra.mxu0 0.0
  %3743 = vmatprep.subr.mxu0 0.0
  %3744 = vmatpush1.msra.mxu0 0.0
  %3745 = vmatprep.subr.mxu0 0.0
  %3746 = vmatpush1.msra.mxu0 0.0
  %3747 = vmatprep.subr.mxu0 0.0
  %3748 = vmatpush1.msra.mxu0 0.0
  %3749 = vmatprep.mubr.f32.mxu0 0.0
  %3750 = vmatmul.mubr.f32.gmra.mrb[0].mxu0 %v3678
  %v3751 = vpop.f32.mrb[0].mxu0
  %v3752 = vadd.f32 0.0, %v3751
  %v3753 = vpop.f32.mrb[0].mxu0
  %3754 = vmatprep.mubr.f32.mxu0 0.0
  %3755 = vmatmul.mubr.f32.gmra.mrb[0].mxu0 %v3680
  %v3756 = vpop.f32.mrb[0].mxu0
  %v3757 = vadd.f32 0.0, %v3756
  %v3758 = vpop.f32.mrb[0].mxu0
  %3759 = vdwg.mxu0
  %v3760 = vadd.f32 %v3192, %v3752
  %v3761 = vadd.f32 %v3193, %v3757
  %v3762 = vadd.f32 %v1182, %v3760
  %v3763 = vadd.f32 %v1183, %v3761
  %v3764 = vld [vmem:[%s33] sm:$0xff]
  %v3765 = vld [vmem:[%s33 + $0x8] sm:$0xff]
  %3767 = vset.pattern.permute.xlu0 0
  %3768 = vperm.xlu0 %3767, %v3764
  %v3769 = vpop.permute.xlu0 %3768
  %3772 = vset.pattern.permute.xlu0 0
  %3773 = vperm.xlu0 %3772, %v3765
  %v3774 = vpop.permute.xlu0 %3773
  %v3776 = vadd.f32 %v3762, %v3769
  %v3777 = vadd.f32 %v3763, %v3774
  %v3778 = vld [vmem:[%s35] sm:$0xff]
  %v3779 = vld [vmem:[%s35 + $0x8] sm:$0xff]
  %v3780 = vld [vmem:[%s37] sm:$0xff]
  %v3781 = vld [vmem:[%s37 + $0x8] sm:$0xff]
  %3782 = vmatprep.subr.mxu0 0.0
  %3783 = vmatpush1.msra.mxu0 %v3776
  %3784 = vmatprep.subr.mxu0 0.0
  %3785 = vmatpush1.msra.mxu0 %v3777
  %3786 = vmatprep.subr.mxu0 0.0
  %3787 = vmatpush1.msra.mxu0 0.0
  %3788 = vmatprep.subr.mxu0 0.0
  %3789 = vmatpush1.msra.mxu0 0.0
  %3790 = vmatprep.subr.mxu0 0.0
  %3791 = vmatpush1.msra.mxu0 0.0
  %3792 = vmatprep.subr.mxu0 0.0
  %3793 = vmatpush1.msra.mxu0 0.0
  %3794 = vmatprep.subr.mxu0 0.0
  %3795 = vmatpush1.msra.mxu0 0.0
  %3796 = vmatprep.subr.mxu0 0.0
  %3797 = vmatpush1.msra.mxu0 0.0
  %3798 = vmatprep.subr.mxu0 0.0
  %3799 = vmatpush1.msra.mxu0 0.0
  %3800 = vmatprep.subr.mxu0 0.0
  %3801 = vmatpush1.msra.mxu0 0.0
  %3802 = vmatprep.subr.mxu0 0.0
  %3803 = vmatpush1.msra.mxu0 0.0
  %3804 = vmatprep.subr.mxu0 0.0
  %3805 = vmatpush1.msra.mxu0 0.0
  %3806 = vmatprep.subr.mxu0 0.0
  %3807 = vmatpush1.msra.mxu0 0.0
  %3808 = vmatprep.subr.mxu0 0.0
  %3809 = vmatpush1.msra.mxu0 0.0
  %3810 = vmatprep.subr.mxu0 0.0
  %3811 = vmatpush1.msra.mxu0 0.0
  %3812 = vmatprep.subr.mxu0 0.0
  %3813 = vmatpush1.msra.mxu0 0.0
  %3814 = vmatprep.subr.mxu0 0.0
  %3815 = vmatpush1.msra.mxu0 0.0
  %3816 = vmatprep.subr.mxu0 0.0
  %3817 = vmatpush1.msra.mxu0 0.0
  %3818 = vmatprep.subr.mxu0 0.0
  %3819 = vmatpush1.msra.mxu0 0.0
  %3820 = vmatprep.subr.mxu0 0.0
  %3821 = vmatpush1.msra.mxu0 0.0
  %3822 = vmatprep.subr.mxu0 0.0
  %3823 = vmatpush1.msra.mxu0 0.0
  %3824 = vmatprep.subr.mxu0 0.0
  %3825 = vmatpush1.msra.mxu0 0.0
  %3826 = vmatprep.subr.mxu0 0.0
  %3827 = vmatpush1.msra.mxu0 0.0
  %3828 = vmatprep.subr.mxu0 0.0
  %3829 = vmatpush1.msra.mxu0 0.0
  %3830 = vmatprep.subr.mxu0 0.0
  %3831 = vmatpush1.msra.mxu0 0.0
  %3832 = vmatprep.subr.mxu0 0.0
  %3833 = vmatpush1.msra.mxu0 0.0
  %3834 = vmatprep.subr.mxu0 0.0
  %3835 = vmatpush1.msra.mxu0 0.0
  %3836 = vmatprep.subr.mxu0 0.0
  %3837 = vmatpush1.msra.mxu0 0.0
  %3838 = vmatprep.subr.mxu0 0.0
  %3839 = vmatpush1.msra.mxu0 0.0
  %3840 = vmatprep.subr.mxu0 0.0
  %3841 = vmatpush1.msra.mxu0 0.0
  %3842 = vmatprep.subr.mxu0 0.0
  %3843 = vmatpush1.msra.mxu0 0.0
  %3844 = vmatprep.subr.mxu0 0.0
  %3845 = vmatpush1.msra.mxu0 0.0
  %3846 = vmatprep.mubr.f32.mxu0 0.0
  %3847 = vmatmul.mubr.f32.gmra.mrb[0].mxu0 %v1212
  %v3848 = vpop.f32.mrb[0].mxu0
  %v3849 = vadd.f32 0.0, %v3848
  %v3850 = vpop.f32.mrb[0].mxu0
  %3851 = vdwg.mxu0
  %v3852 = vlaneseq
  %v3853 = vshrl.u32 %v3852, 7
  %v3854 = vsub.s32 0, %v3853
  %v3855 = vrot.slane %v3849, %v3854
  %v3856 = vsub.f32 %v3776, %v3855
  %v3857 = vsub.f32 %v3777, %v3855
  %v3858 = vmul.f32 %v3856, %v3856
  %v3859 = vmul.f32 %v3857, %v3857
  %3860 = vmatprep.subr.mxu0 0.0
  %3861 = vmatpush1.msra.mxu0 %v3858
  %3862 = vmatprep.subr.mxu0 0.0
  %3863 = vmatpush1.msra.mxu0 %v3859
  %3864 = vmatprep.subr.mxu0 0.0
  %3865 = vmatpush1.msra.mxu0 0.0
  %3866 = vmatprep.subr.mxu0 0.0
  %3867 = vmatpush1.msra.mxu0 0.0
  %3868 = vmatprep.subr.mxu0 0.0
  %3869 = vmatpush1.msra.mxu0 0.0
  %3870 = vmatprep.subr.mxu0 0.0
  %3871 = vmatpush1.msra.mxu0 0.0
  %3872 = vmatprep.subr.mxu0 0.0
  %3873 = vmatpush1.msra.mxu0 0.0
  %3874 = vmatprep.subr.mxu0 0.0
  %3875 = vmatpush1.msra.mxu0 0.0
  %3876 = vmatprep.subr.mxu0 0.0
  %3877 = vmatpush1.msra.mxu0 0.0
  %3878 = vmatprep.subr.mxu0 0.0
  %3879 = vmatpush1.msra.mxu0 0.0
  %3880 = vmatprep.subr.mxu0 0.0
  %3881 = vmatpush1.msra.mxu0 0.0
  %3882 = vmatprep.subr.mxu0 0.0
  %3883 = vmatpush1.msra.mxu0 0.0
  %3884 = vmatprep.subr.mxu0 0.0
  %3885 = vmatpush1.msra.mxu0 0.0
  %3886 = vmatprep.subr.mxu0 0.0
  %3887 = vmatpush1.msra.mxu0 0.0
  %3888 = vmatprep.subr.mxu0 0.0
  %3889 = vmatpush1.msra.mxu0 0.0
  %3890 = vmatprep.subr.mxu0 0.0
  %3891 = vmatpush1.msra.mxu0 0.0
  %3892 = vmatprep.subr.mxu0 0.0
  %3893 = vmatpush1.msra.mxu0 0.0
  %3894 = vmatprep.subr.mxu0 0.0
  %3895 = vmatpush1.msra.mxu0 0.0
  %3896 = vmatprep.subr.mxu0 0.0
  %3897 = vmatpush1.msra.mxu0 0.0
  %3898 = vmatprep.subr.mxu0 0.0
  %3899 = vmatpush1.msra.mxu0 0.0
  %3900 = vmatprep.subr.mxu0 0.0
  %3901 = vmatpush1.msra.mxu0 0.0
  %3902 = vmatprep.subr.mxu0 0.0
  %3903 = vmatpush1.msra.mxu0 0.0
  %3904 = vmatprep.subr.mxu0 0.0
  %3905 = vmatpush1.msra.mxu0 0.0
  %3906 = vmatprep.subr.mxu0 0.0
  %3907 = vmatpush1.msra.mxu0 0.0
  %3908 = vmatprep.subr.mxu0 0.0
  %3909 = vmatpush1.msra.mxu0 0.0
  %3910 = vmatprep.subr.mxu0 0.0
  %3911 = vmatpush1.msra.mxu0 0.0
  %3912 = vmatprep.subr.mxu0 0.0
  %3913 = vmatpush1.msra.mxu0 0.0
  %3914 = vmatprep.subr.mxu0 0.0
  %3915 = vmatpush1.msra.mxu0 0.0
  %3916 = vmatprep.subr.mxu0 0.0
  %3917 = vmatpush1.msra.mxu0 0.0
  %3918 = vmatprep.subr.mxu0 0.0
  %3919 = vmatpush1.msra.mxu0 0.0
  %3920 = vmatprep.subr.mxu0 0.0
  %3921 = vmatpush1.msra.mxu0 0.0
  %3922 = vmatprep.subr.mxu0 0.0
  %3923 = vmatpush1.msra.mxu0 0.0
  %3924 = vmatprep.mubr.f32.mxu0 0.0
  %3925 = vmatmul.mubr.f32.gmra.mrb[0].mxu0 %v1212
  %v3926 = vpop.f32.mrb[0].mxu0
  %v3927 = vadd.f32 1e-05, %v3926
  %v3928 = vpop.f32.mrb[0].mxu0
  %3929 = vdwg.mxu0
  %v3930 = vrsqrt.pop %v3927
  %v3931 = vlaneseq
  %v3932 = vshrl.u32 %v3931, 7
  %v3933 = vsub.s32 0, %v3932
  %v3934 = vrot.slane %v3930, %v3933
  %v3935 = vmul.f32 %v3856, %v3934
  %v3936 = vmul.f32 %v3857, %v3934
  %3938 = vset.pattern.permute.xlu0 0
  %3939 = vperm.xlu0 %3938, %v3778
  %v3940 = vpop.permute.xlu0 %3939
  %3943 = vset.pattern.permute.xlu0 0
  %3944 = vperm.xlu0 %3943, %v3779
  %v3945 = vpop.permute.xlu0 %3944
  %v3947 = vmul.f32 %v3935, %v3940
  %v3948 = vmul.f32 %v3936, %v3945
  %3950 = vset.pattern.permute.xlu0 0
  %3951 = vperm.xlu0 %3950, %v3780
  %v3952 = vpop.permute.xlu0 %3951
  %3955 = vset.pattern.permute.xlu0 0
  %3956 = vperm.xlu0 %3955, %v3781
  %v3957 = vpop.permute.xlu0 %3956
  %v3959 = vadd.f32 %v3947, %v3952
  %v3960 = vadd.f32 %v3948, %v3957
  %v3961 = vld [vmem:[%s39] sm:$0xff]
  %v3962 = vld [vmem:[%s39 + $0x8] sm:$0xff]
  %v3963 = vld [vmem:[%s39 + $0x10] sm:$0xff]
  %v3964 = vld [vmem:[%s39 + $0x18] sm:$0xff]
  %v3965 = vld [vmem:[%s39 + $0x20] sm:$0xff]
  %v3966 = vld [vmem:[%s39 + $0x28] sm:$0xff]
  %v3967 = vld [vmem:[%s39 + $0x30] sm:$0xff]
  %v3968 = vld [vmem:[%s39 + $0x38] sm:$0xff]
  %v3969 = vld [vmem:[%s41] sm:$0xff]
  %v3970 = vld [vmem:[%s41 + $0x8] sm:$0xff]
  %v3971 = vld [vmem:[%s41 + $0x10] sm:$0xff]
  %v3972 = vld [vmem:[%s41 + $0x18] sm:$0xff]
  %v3973 = vld [vmem:[%s41 + $0x20] sm:$0xff]
  %v3974 = vld [vmem:[%s41 + $0x28] sm:$0xff]
  %v3975 = vld [vmem:[%s41 + $0x30] sm:$0xff]
  %v3976 = vld [vmem:[%s41 + $0x38] sm:$0xff]
  %3978 = vset.pattern.permute.xlu0 0
  %3979 = vperm.xlu0 %3978, %v3969
  %v3980 = vpop.permute.xlu0 %3979
  %3983 = vset.pattern.permute.xlu0 0
  %3984 = vperm.xlu0 %3983, %v3970
  %v3985 = vpop.permute.xlu0 %3984
  %3988 = vset.pattern.permute.xlu0 0
  %3989 = vperm.xlu0 %3988, %v3971
  %v3990 = vpop.permute.xlu0 %3989
  %3993 = vset.pattern.permute.xlu0 0
  %3994 = vperm.xlu0 %3993, %v3972
  %v3995 = vpop.permute.xlu0 %3994
  %3998 = vset.pattern.permute.xlu0 0
  %3999 = vperm.xlu0 %3998, %v3973
  %v4000 = vpop.permute.xlu0 %3999
  %4003 = vset.pattern.permute.xlu0 0
  %4004 = vperm.xlu0 %4003, %v3974
  %v4005 = vpop.permute.xlu0 %4004
  %4008 = vset.pattern.permute.xlu0 0
  %4009 = vperm.xlu0 %4008, %v3975
  %v4010 = vpop.permute.xlu0 %4009
  %4013 = vset.pattern.permute.xlu0 0
  %4014 = vperm.xlu0 %4013, %v3976
  %v4015 = vpop.permute.xlu0 %4014
  %v4018 = vsel %vm1210, %v3961, 0
  %v4021 = vsel %vm1210, %v3962, 0
  %v4024 = vsel %vm1210, %v3963, 0
  %v4027 = vsel %vm1210, %v3964, 0
  %v4030 = vsel %vm1210, %v3965, 0
  %v4033 = vsel %vm1210, %v3966, 0
  %v4036 = vsel %vm1210, %v3967, 0
  %v4039 = vsel %vm1210, %v3968, 0
  %4041 = vmatprep.subr.mxu0 0.0
  %4042 = vmatpush1.msra.mxu0 %v3959
  %4043 = vmatprep.subr.mxu0 0.0
  %4044 = vmatpush1.msra.mxu0 %v3960
  %4045 = vmatprep.subr.mxu0 0.0
  %4046 = vmatpush1.msra.mxu0 0.0
  %4047 = vmatprep.subr.mxu0 0.0
  %4048 = vmatpush1.msra.mxu0 0.0
  %4049 = vmatprep.subr.mxu0 0.0
  %4050 = vmatpush1.msra.mxu0 0.0
  %4051 = vmatprep.subr.mxu0 0.0
  %4052 = vmatpush1.msra.mxu0 0.0
  %4053 = vmatprep.subr.mxu0 0.0
  %4054 = vmatpush1.msra.mxu0 0.0
  %4055 = vmatprep.subr.mxu0 0.0
  %4056 = vmatpush1.msra.mxu0 0.0
  %4057 = vmatprep.subr.mxu0 0.0
  %4058 = vmatpush1.msra.mxu0 0.0
  %4059 = vmatprep.subr.mxu0 0.0
  %4060 = vmatpush1.msra.mxu0 0.0
  %4061 = vmatprep.subr.mxu0 0.0
  %4062 = vmatpush1.msra.mxu0 0.0
  %4063 = vmatprep.subr.mxu0 0.0
  %4064 = vmatpush1.msra.mxu0 0.0
  %4065 = vmatprep.subr.mxu0 0.0
  %4066 = vmatpush1.msra.mxu0 0.0
  %4067 = vmatprep.subr.mxu0 0.0
  %4068 = vmatpush1.msra.mxu0 0.0
  %4069 = vmatprep.subr.mxu0 0.0
  %4070 = vmatpush1.msra.mxu0 0.0
  %4071 = vmatprep.subr.mxu0 0.0
  %4072 = vmatpush1.msra.mxu0 0.0
  %4073 = vmatprep.subr.mxu0 0.0
  %4074 = vmatpush1.msra.mxu0 0.0
  %4075 = vmatprep.subr.mxu0 0.0
  %4076 = vmatpush1.msra.mxu0 0.0
  %4077 = vmatprep.subr.mxu0 0.0
  %4078 = vmatpush1.msra.mxu0 0.0
  %4079 = vmatprep.subr.mxu0 0.0
  %4080 = vmatpush1.msra.mxu0 0.0
  %4081 = vmatprep.subr.mxu0 0.0
  %4082 = vmatpush1.msra.mxu0 0.0
  %4083 = vmatprep.subr.mxu0 0.0
  %4084 = vmatpush1.msra.mxu0 0.0
  %4085 = vmatprep.subr.mxu0 0.0
  %4086 = vmatpush1.msra.mxu0 0.0
  %4087 = vmatprep.subr.mxu0 0.0
  %4088 = vmatpush1.msra.mxu0 0.0
  %4089 = vmatprep.subr.mxu0 0.0
  %4090 = vmatpush1.msra.mxu0 0.0
  %4091 = vmatprep.subr.mxu0 0.0
  %4092 = vmatpush1.msra.mxu0 0.0
  %4093 = vmatprep.subr.mxu0 0.0
  %4094 = vmatpush1.msra.mxu0 0.0
  %4095 = vmatprep.subr.mxu0 0.0
  %4096 = vmatpush1.msra.mxu0 0.0
  %4097 = vmatprep.subr.mxu0 0.0
  %4098 = vmatpush1.msra.mxu0 0.0
  %4099 = vmatprep.subr.mxu0 0.0
  %4100 = vmatpush1.msra.mxu0 0.0
  %4101 = vmatprep.subr.mxu0 0.0
  %4102 = vmatpush1.msra.mxu0 0.0
  %4103 = vmatprep.subr.mxu0 0.0
  %4104 = vmatpush1.msra.mxu0 0.0
  %4105 = vmatprep.mubr.f32.mxu0 0.0
  %4106 = vmatmul.mubr.f32.gmra.mrb[0].mxu0 %v4018
  %v4107 = vpop.f32.mrb[0].mxu0
  %v4108 = vadd.f32 %v3980, %v4107
  %v4109 = vpop.f32.mrb[0].mxu0
  %4110 = vmatprep.mubr.f32.mxu0 0.0
  %4111 = vmatmul.mubr.f32.gmra.mrb[0].mxu0 %v4021
  %v4112 = vpop.f32.mrb[0].mxu0
  %v4113 = vadd.f32 %v3985, %v4112
  %v4114 = vpop.f32.mrb[0].mxu0
  %4115 = vmatprep.mubr.f32.mxu0 0.0
  %4116 = vmatmul.mubr.f32.gmra.mrb[0].mxu0 %v4024
  %v4117 = vpop.f32.mrb[0].mxu0
  %v4118 = vadd.f32 %v3990, %v4117
  %v4119 = vpop.f32.mrb[0].mxu0
  %4120 = vmatprep.mubr.f32.mxu0 0.0
  %4121 = vmatmul.mubr.f32.gmra.mrb[0].mxu0 %v4027
  %v4122 = vpop.f32.mrb[0].mxu0
  %v4123 = vadd.f32 %v3995, %v4122
  %v4124 = vpop.f32.mrb[0].mxu0
  %4125 = vmatprep.mubr.f32.mxu0 0.0
  %4126 = vmatmul.mubr.f32.gmra.mrb[0].mxu0 %v4030
  %v4127 = vpop.f32.mrb[0].mxu0
  %v4128 = vadd.f32 %v4000, %v4127
  %v4129 = vpop.f32.mrb[0].mxu0
  %4130 = vmatprep.mubr.f32.mxu0 0.0
  %4131 = vmatmul.mubr.f32.gmra.mrb[0].mxu0 %v4033
  %v4132 = vpop.f32.mrb[0].mxu0
  %v4133 = vadd.f32 %v4005, %v4132
  %v4134 = vpop.f32.mrb[0].mxu0
  %4135 = vmatprep.mubr.f32.mxu0 0.0
  %4136 = vmatmul.mubr.f32.gmra.mrb[0].mxu0 %v4036
  %v4137 = vpop.f32.mrb[0].mxu0
  %v4138 = vadd.f32 %v4010, %v4137
  %v4139 = vpop.f32.mrb[0].mxu0
  %4140 = vmatprep.mubr.f32.mxu0 0.0
  %4141 = vmatmul.mubr.f32.gmra.mrb[0].mxu0 %v4039
  %v4142 = vpop.f32.mrb[0].mxu0
  %v4143 = vadd.f32 %v4015, %v4142
  %v4144 = vpop.f32.mrb[0].mxu0
  %4145 = vdwg.mxu0
  %v4146 = vmul.f32 %v4108, %v4108
  %v4147 = vmul.f32 %v4113, %v4113
  %v4148 = vmul.f32 %v4118, %v4118
  %v4149 = vmul.f32 %v4123, %v4123
  %v4150 = vmul.f32 %v4128, %v4128
  %v4151 = vmul.f32 %v4133, %v4133
  %v4152 = vmul.f32 %v4138, %v4138
  %v4153 = vmul.f32 %v4143, %v4143
  %v4154 = vmul.f32 %v4108, %v4146
  %v4155 = vmul.f32 %v4113, %v4147
  %v4156 = vmul.f32 %v4118, %v4148
  %v4157 = vmul.f32 %v4123, %v4149
  %v4158 = vmul.f32 %v4128, %v4150
  %v4159 = vmul.f32 %v4133, %v4151
  %v4160 = vmul.f32 %v4138, %v4152
  %v4161 = vmul.f32 %v4143, %v4153
  %v4162 = vmul.f32 %v4154, 0.044715
  %v4163 = vmul.f32 %v4155, 0.044715
  %v4164 = vmul.f32 %v4156, 0.044715
  %v4165 = vmul.f32 %v4157, 0.044715
  %v4166 = vmul.f32 %v4158, 0.044715
  %v4167 = vmul.f32 %v4159, 0.044715
  %v4168 = vmul.f32 %v4160, 0.044715
  %v4169 = vmul.f32 %v4161, 0.044715
  %v4170 = vadd.f32 %v4108, %v4162
  %v4171 = vadd.f32 %v4113, %v4163
  %v4172 = vadd.f32 %v4118, %v4164
  %v4173 = vadd.f32 %v4123, %v4165
  %v4174 = vadd.f32 %v4128, %v4166
  %v4175 = vadd.f32 %v4133, %v4167
  %v4176 = vadd.f32 %v4138, %v4168
  %v4177 = vadd.f32 %v4143, %v4169
  %v4178 = vmul.f32 %v4170, 0.7978846
  %v4179 = vmul.f32 %v4171, 0.7978846
  %v4180 = vmul.f32 %v4172, 0.7978846
  %v4181 = vmul.f32 %v4173, 0.7978846
  %v4182 = vmul.f32 %v4174, 0.7978846
  %v4183 = vmul.f32 %v4175, 0.7978846
  %v4184 = vmul.f32 %v4176, 0.7978846
  %v4185 = vmul.f32 %v4177, 0.7978846
  %v4186 = vtanh.pop %v4178
  %v4187 = vtanh.pop %v4179
  %v4188 = vtanh.pop %v4180
  %v4189 = vtanh.pop %v4181
  %v4190 = vtanh.pop %v4182
  %v4191 = vtanh.pop %v4183
  %v4192 = vtanh.pop %v4184
  %v4193 = vtanh.pop %v4185
  %v4194 = vadd.f32 %v4186, 1.0
  %v4195 = vadd.f32 %v4187, 1.0
  %v4196 = vadd.f32 %v4188, 1.0
  %v4197 = vadd.f32 %v4189, 1.0
  %v4198 = vadd.f32 %v4190, 1.0
  %v4199 = vadd.f32 %v4191, 1.0
  %v4200 = vadd.f32 %v4192, 1.0
  %v4201 = vadd.f32 %v4193, 1.0
  %v4202 = vmul.f32 %v4194, 0.5
  %v4203 = vmul.f32 %v4195, 0.5
  %v4204 = vmul.f32 %v4196, 0.5
  %v4205 = vmul.f32 %v4197, 0.5
  %v4206 = vmul.f32 %v4198, 0.5
  %v4207 = vmul.f32 %v4199, 0.5
  %v4208 = vmul.f32 %v4200, 0.5
  %v4209 = vmul.f32 %v4201, 0.5
  %v4210 = vmul.f32 %v4108, %v4202
  %v4211 = vmul.f32 %v4113, %v4203
  %v4212 = vmul.f32 %v4118, %v4204
  %v4213 = vmul.f32 %v4123, %v4205
  %v4214 = vmul.f32 %v4128, %v4206
  %v4215 = vmul.f32 %v4133, %v4207
  %v4216 = vmul.f32 %v4138, %v4208
  %v4217 = vmul.f32 %v4143, %v4209
  %v4218 = vld [vmem:[%s43] sm:$0xff]
  %v4219 = vld [vmem:[%s43 + $0x8] sm:$0xff]
  %v4220 = vld [vmem:[%s45] sm:$0xff]
  %v4221 = vld [vmem:[%s45 + $0x8] sm:$0xff]
  %4223 = vset.pattern.permute.xlu0 0
  %4224 = vperm.xlu0 %4223, %v4220
  %v4225 = vpop.permute.xlu0 %4224
  %4228 = vset.pattern.permute.xlu0 0
  %4229 = vperm.xlu0 %4228, %v4221
  %v4230 = vpop.permute.xlu0 %4229
  %vm4232 = vcmask 523264
  %v4234 = vsel %vm4232, %v4218, 0
  %v4237 = vsel %vm4232, %v4219, 0
  %4239 = vmatprep.subr.mxu0 0.0
  %4240 = vmatpush1.msra.mxu0 %v4210
  %4241 = vmatprep.subr.mxu0 0.0
  %4242 = vmatpush1.msra.mxu0 %v4211
  %4243 = vmatprep.subr.mxu0 0.0
  %4244 = vmatpush1.msra.mxu0 %v4212
  %4245 = vmatprep.subr.mxu0 0.0
  %4246 = vmatpush1.msra.mxu0 %v4213
  %4247 = vmatprep.subr.mxu0 0.0
  %4248 = vmatpush1.msra.mxu0 %v4214
  %4249 = vmatprep.subr.mxu0 0.0
  %4250 = vmatpush1.msra.mxu0 %v4215
  %4251 = vmatprep.subr.mxu0 0.0
  %4252 = vmatpush1.msra.mxu0 %v4216
  %4253 = vmatprep.subr.mxu0 0.0
  %4254 = vmatpush1.msra.mxu0 %v4217
  %4255 = vmatprep.subr.mxu0 0.0
  %4256 = vmatpush1.msra.mxu0 0.0
  %4257 = vmatprep.subr.mxu0 0.0
  %4258 = vmatpush1.msra.mxu0 0.0
  %4259 = vmatprep.subr.mxu0 0.0
  %4260 = vmatpush1.msra.mxu0 0.0
  %4261 = vmatprep.subr.mxu0 0.0
  %4262 = vmatpush1.msra.mxu0 0.0
  %4263 = vmatprep.subr.mxu0 0.0
  %4264 = vmatpush1.msra.mxu0 0.0
  %4265 = vmatprep.subr.mxu0 0.0
  %4266 = vmatpush1.msra.mxu0 0.0
  %4267 = vmatprep.subr.mxu0 0.0
  %4268 = vmatpush1.msra.mxu0 0.0
  %4269 = vmatprep.subr.mxu0 0.0
  %4270 = vmatpush1.msra.mxu0 0.0
  %4271 = vmatprep.subr.mxu0 0.0
  %4272 = vmatpush1.msra.mxu0 0.0
  %4273 = vmatprep.subr.mxu0 0.0
  %4274 = vmatpush1.msra.mxu0 0.0
  %4275 = vmatprep.subr.mxu0 0.0
  %4276 = vmatpush1.msra.mxu0 0.0
  %4277 = vmatprep.subr.mxu0 0.0
  %4278 = vmatpush1.msra.mxu0 0.0
  %4279 = vmatprep.subr.mxu0 0.0
  %4280 = vmatpush1.msra.mxu0 0.0
  %4281 = vmatprep.subr.mxu0 0.0
  %4282 = vmatpush1.msra.mxu0 0.0
  %4283 = vmatprep.subr.mxu0 0.0
  %4284 = vmatpush1.msra.mxu0 0.0
  %4285 = vmatprep.subr.mxu0 0.0
  %4286 = vmatpush1.msra.mxu0 0.0
  %4287 = vmatprep.subr.mxu0 0.0
  %4288 = vmatpush1.msra.mxu0 0.0
  %4289 = vmatprep.subr.mxu0 0.0
  %4290 = vmatpush1.msra.mxu0 0.0
  %4291 = vmatprep.subr.mxu0 0.0
  %4292 = vmatpush1.msra.mxu0 0.0
  %4293 = vmatprep.subr.mxu0 0.0
  %4294 = vmatpush1.msra.mxu0 0.0
  %4295 = vmatprep.subr.mxu0 0.0
  %4296 = vmatpush1.msra.mxu0 0.0
  %4297 = vmatprep.subr.mxu0 0.0
  %4298 = vmatpush1.msra.mxu0 0.0
  %4299 = vmatprep.subr.mxu0 0.0
  %4300 = vmatpush1.msra.mxu0 0.0
  %4301 = vmatprep.subr.mxu0 0.0
  %4302 = vmatpush1.msra.mxu0 0.0
  %4303 = vmatprep.mubr.f32.mxu0 0.0
  %4304 = vmatmul.mubr.f32.gmra.mrb[0].mxu0 %v4234
  %v4305 = vpop.f32.mrb[0].mxu0
  %v4306 = vadd.f32 %v4225, %v4305
  %v4307 = vpop.f32.mrb[0].mxu0
  %4308 = vmatprep.mubr.f32.mxu0 0.0
  %4309 = vmatmul.mubr.f32.gmra.mrb[0].mxu0 %v4237
  %v4310 = vpop.f32.mrb[0].mxu0
  %v4311 = vadd.f32 %v4230, %v4310
  %v4312 = vpop.f32.mrb[0].mxu0
  %4313 = vdwg.mxu0
  %v4314 = vadd.f32 %v3776, %v4306
  %v4315 = vadd.f32 %v3777, %v4311
  %v4316 = vld [vmem:[%s47] sm:$0xff]
  %v4317 = vld [vmem:[%s49] sm:$0xff]
  %4319 = vset.pattern.permute.xlu0 0
  %4320 = vperm.xlu0 %4319, %v4317
  %v4321 = vpop.permute.xlu0 %4320
  %v4324 = vsel %vm1210, %v4316, 0
  %4326 = vmatprep.subr.mxu0 0.0
  %4327 = vmatpush1.msra.mxu0 %v4314
  %4328 = vmatprep.subr.mxu0 0.0
  %4329 = vmatpush1.msra.mxu0 %v4315
  %4330 = vmatprep.subr.mxu0 0.0
  %4331 = vmatpush1.msra.mxu0 0.0
  %4332 = vmatprep.subr.mxu0 0.0
  %4333 = vmatpush1.msra.mxu0 0.0
  %4334 = vmatprep.subr.mxu0 0.0
  %4335 = vmatpush1.msra.mxu0 0.0
  %4336 = vmatprep.subr.mxu0 0.0
  %4337 = vmatpush1.msra.mxu0 0.0
  %4338 = vmatprep.subr.mxu0 0.0
  %4339 = vmatpush1.msra.mxu0 0.0
  %4340 = vmatprep.subr.mxu0 0.0
  %4341 = vmatpush1.msra.mxu0 0.0
  %4342 = vmatprep.subr.mxu0 0.0
  %4343 = vmatpush1.msra.mxu0 0.0
  %4344 = vmatprep.subr.mxu0 0.0
  %4345 = vmatpush1.msra.mxu0 0.0
  %4346 = vmatprep.subr.mxu0 0.0
  %4347 = vmatpush1.msra.mxu0 0.0
  %4348 = vmatprep.subr.mxu0 0.0
  %4349 = vmatpush1.msra.mxu0 0.0
  %4350 = vmatprep.subr.mxu0 0.0
  %4351 = vmatpush1.msra.mxu0 0.0
  %4352 = vmatprep.subr.mxu0 0.0
  %4353 = vmatpush1.msra.mxu0 0.0
  %4354 = vmatprep.subr.mxu0 0.0
  %4355 = vmatpush1.msra.mxu0 0.0
  %4356 = vmatprep.subr.mxu0 0.0
  %4357 = vmatpush1.msra.mxu0 0.0
  %4358 = vmatprep.subr.mxu0 0.0
  %4359 = vmatpush1.msra.mxu0 0.0
  %4360 = vmatprep.subr.mxu0 0.0
  %4361 = vmatpush1.msra.mxu0 0.0
  %4362 = vmatprep.subr.mxu0 0.0
  %4363 = vmatpush1.msra.mxu0 0.0
  %4364 = vmatprep.subr.mxu0 0.0
  %4365 = vmatpush1.msra.mxu0 0.0
  %4366 = vmatprep.subr.mxu0 0.0
  %4367 = vmatpush1.msra.mxu0 0.0
  %4368 = vmatprep.subr.mxu0 0.0
  %4369 = vmatpush1.msra.mxu0 0.0
  %4370 = vmatprep.subr.mxu0 0.0
  %4371 = vmatpush1.msra.mxu0 0.0
  %4372 = vmatprep.subr.mxu0 0.0
  %4373 = vmatpush1.msra.mxu0 0.0
  %4374 = vmatprep.subr.mxu0 0.0
  %4375 = vmatpush1.msra.mxu0 0.0
  %4376 = vmatprep.subr.mxu0 0.0
  %4377 = vmatpush1.msra.mxu0 0.0
  %4378 = vmatprep.subr.mxu0 0.0
  %4379 = vmatpush1.msra.mxu0 0.0
  %4380 = vmatprep.subr.mxu0 0.0
  %4381 = vmatpush1.msra.mxu0 0.0
  %4382 = vmatprep.subr.mxu0 0.0
  %4383 = vmatpush1.msra.mxu0 0.0
  %4384 = vmatprep.subr.mxu0 0.0
  %4385 = vmatpush1.msra.mxu0 0.0
  %4386 = vmatprep.subr.mxu0 0.0
  %4387 = vmatpush1.msra.mxu0 0.0
  %4388 = vmatprep.subr.mxu0 0.0
  %4389 = vmatpush1.msra.mxu0 0.0
  %4390 = vmatprep.mubr.f32.mxu0 0.0
  %4391 = vmatmul.mubr.f32.gmra.mrb[0].mxu0 %v4324
  %v4392 = vpop.f32.mrb[0].mxu0
  %v4393 = vadd.f32 %v4321, %v4392
  %v4394 = vpop.f32.mrb[0].mxu0
  %4395 = vdwg.mxu0
  %4396 = vrot.lane.b32.xlu0 %v4393, 9
  %v4397 = vpop.permute.xlu0 %4396
  %v4398 = vmul.f32 %v4397, %v916
  %4399 = vrot.lane.b32.xlu0 %v4393, 8
  %v4400 = vpop.permute.xlu0 %4399
  %v4401 = vmul.f32 %v4400, %v927
  %4402 = vrot.lane.b32.xlu0 %v4393, 7
  %v4403 = vpop.permute.xlu0 %4402
  %v4404 = vmul.f32 %v4403, %v938
  %4405 = vrot.lane.b32.xlu0 %v4393, 1
  %v4406 = vpop.permute.xlu0 %4405
  %v4407 = vmul.f32 %v4406, %v949
  %v4408 = vmul.f32 %v4393, %v958
  %4409 = vrot.lane.b32.xlu0 %v4393, 127
  %v4410 = vpop.permute.xlu0 %4409
  %v4411 = vmul.f32 %v4410, %v969
  %4412 = vrot.lane.b32.xlu0 %v4393, 121
  %v4413 = vpop.permute.xlu0 %4412
  %v4414 = vmul.f32 %v4413, %v980
  %4415 = vrot.lane.b32.xlu0 %v4393, 120
  %v4416 = vpop.permute.xlu0 %4415
  %v4417 = vmul.f32 %v4416, %v991
  %4418 = vrot.lane.b32.xlu0 %v4393, 119
  %v4419 = vpop.permute.xlu0 %4418
  %v4420 = vmul.f32 %v4419, %v1002
  %v4421 = vld [vmem:[%s51] sm:$0xff]
  %v4422 = vld [vmem:[%s51 + $0x8] sm:$0xff]
  %v4423 = vld [vmem:[%s53] sm:$0xff]
  %4425 = vset.pattern.permute.xlu0 0
  %4426 = vperm.xlu0 %4425, %v4423
  %v4427 = vpop.permute.xlu0 %4426
  %v4430 = vsel %vm1210, %v4422, 0
  %4432 = vmatprep.subr.mxu0 0.0
  %4433 = vmatpush1.msra.mxu0 %v918
  %4434 = vmatprep.subr.mxu0 0.0
  %4435 = vmatpush1.msra.mxu0 %v929
  %4436 = vmatprep.subr.mxu0 0.0
  %4437 = vmatpush1.msra.mxu0 %v940
  %4438 = vmatprep.subr.mxu0 0.0
  %4439 = vmatpush1.msra.mxu0 %v951
  %4440 = vmatprep.subr.mxu0 0.0
  %4441 = vmatpush1.msra.mxu0 %v960
  %4442 = vmatprep.subr.mxu0 0.0
  %4443 = vmatpush1.msra.mxu0 %v971
  %4444 = vmatprep.subr.mxu0 0.0
  %4445 = vmatpush1.msra.mxu0 %v982
  %4446 = vmatprep.subr.mxu0 0.0
  %4447 = vmatpush1.msra.mxu0 %v993
  %4448 = vmatprep.subr.mxu0 0.0
  %4449 = vmatpush1.msra.mxu0 %v1004
  %4450 = vmatprep.subr.mxu0 0.0
  %4451 = vmatpush1.msra.mxu0 %v4398
  %4452 = vmatprep.subr.mxu0 0.0
  %4453 = vmatpush1.msra.mxu0 %v4401
  %4454 = vmatprep.subr.mxu0 0.0
  %4455 = vmatpush1.msra.mxu0 %v4404
  %4456 = vmatprep.subr.mxu0 0.0
  %4457 = vmatpush1.msra.mxu0 %v4407
  %4458 = vmatprep.subr.mxu0 0.0
  %4459 = vmatpush1.msra.mxu0 %v4408
  %4460 = vmatprep.subr.mxu0 0.0
  %4461 = vmatpush1.msra.mxu0 %v4411
  %4462 = vmatprep.subr.mxu0 0.0
  %4463 = vmatpush1.msra.mxu0 %v4414
  %4464 = vmatprep.subr.mxu0 0.0
  %4465 = vmatpush1.msra.mxu0 %v4417
  %4466 = vmatprep.subr.mxu0 0.0
  %4467 = vmatpush1.msra.mxu0 %v4420
  %4468 = vmatprep.subr.mxu0 0.0
  %4469 = vmatpush1.msra.mxu0 0.0
  %4470 = vmatprep.subr.mxu0 0.0
  %4471 = vmatpush1.msra.mxu0 0.0
  %4472 = vmatprep.subr.mxu0 0.0
  %4473 = vmatpush1.msra.mxu0 0.0
  %4474 = vmatprep.subr.mxu0 0.0
  %4475 = vmatpush1.msra.mxu0 0.0
  %4476 = vmatprep.subr.mxu0 0.0
  %4477 = vmatpush1.msra.mxu0 0.0
  %4478 = vmatprep.subr.mxu0 0.0
  %4479 = vmatpush1.msra.mxu0 0.0
  %4480 = vmatprep.subr.mxu0 0.0
  %4481 = vmatpush1.msra.mxu0 0.0
  %4482 = vmatprep.subr.mxu0 0.0
  %4483 = vmatpush1.msra.mxu0 0.0
  %4484 = vmatprep.subr.mxu0 0.0
  %4485 = vmatpush1.msra.mxu0 0.0
  %4486 = vmatprep.subr.mxu0 0.0
  %4487 = vmatpush1.msra.mxu0 0.0
  %4488 = vmatprep.subr.mxu0 0.0
  %4489 = vmatpush1.msra.mxu0 0.0
  %4490 = vmatprep.subr.mxu0 0.0
  %4491 = vmatpush1.msra.mxu0 0.0
  %4492 = vmatprep.subr.mxu0 0.0
  %4493 = vmatpush1.msra.mxu0 0.0
  %4494 = vmatprep.subr.mxu0 0.0
  %4495 = vmatpush1.msra.mxu0 0.0
  %4496 = vmatprep.mubr.f32.mxu0 %v4430
  %4497 = vmatmul.mubr.f32.gmra.mrb[0].mxu0 %v4421
  %v4498 = vpop.f32.mrb[0].mxu0
  %v4499 = vadd.f32 %v4427, %v4498
  %v4500 = vpop.f32.mrb[0].mxu0
  %4501 = vdwg.mxu0
  %v4502 = vld [vmem:[%s55] sm:$0xff]
  %v4503 = vld [vmem:[%s57] sm:$0xff]
  %4505 = vset.pattern.permute.xlu0 0
  %4506 = vperm.xlu0 %4505, %v4503
  %v4507 = vpop.permute.xlu0 %4506
  %v4510 = vsel %vm680, %v4502, 0
  %4512 = vmatprep.subr.mxu0 0.0
  %4513 = vmatpush1.msra.mxu0 %v4499
  %4514 = vmatprep.subr.mxu0 0.0
  %4515 = vmatpush1.msra.mxu0 0.0
  %4516 = vmatprep.subr.mxu0 0.0
  %4517 = vmatpush1.msra.mxu0 0.0
  %4518 = vmatprep.subr.mxu0 0.0
  %4519 = vmatpush1.msra.mxu0 0.0
  %4520 = vmatprep.subr.mxu0 0.0
  %4521 = vmatpush1.msra.mxu0 0.0
  %4522 = vmatprep.subr.mxu0 0.0
  %4523 = vmatpush1.msra.mxu0 0.0
  %4524 = vmatprep.subr.mxu0 0.0
  %4525 = vmatpush1.msra.mxu0 0.0
  %4526 = vmatprep.subr.mxu0 0.0
  %4527 = vmatpush1.msra.mxu0 0.0
  %4528 = vmatprep.subr.mxu0 0.0
  %4529 = vmatpush1.msra.mxu0 0.0
  %4530 = vmatprep.subr.mxu0 0.0
  %4531 = vmatpush1.msra.mxu0 0.0
  %4532 = vmatprep.subr.mxu0 0.0
  %4533 = vmatpush1.msra.mxu0 0.0
  %4534 = vmatprep.subr.mxu0 0.0
  %4535 = vmatpush1.msra.mxu0 0.0
  %4536 = vmatprep.subr.mxu0 0.0
  %4537 = vmatpush1.msra.mxu0 0.0
  %4538 = vmatprep.subr.mxu0 0.0
  %4539 = vmatpush1.msra.mxu0 0.0
  %4540 = vmatprep.subr.mxu0 0.0
  %4541 = vmatpush1.msra.mxu0 0.0
  %4542 = vmatprep.subr.mxu0 0.0
  %4543 = vmatpush1.msra.mxu0 0.0
  %4544 = vmatprep.subr.mxu0 0.0
  %4545 = vmatpush1.msra.mxu0 0.0
  %4546 = vmatprep.subr.mxu0 0.0
  %4547 = vmatpush1.msra.mxu0 0.0
  %4548 = vmatprep.subr.mxu0 0.0
  %4549 = vmatpush1.msra.mxu0 0.0
  %4550 = vmatprep.subr.mxu0 0.0
  %4551 = vmatpush1.msra.mxu0 0.0
  %4552 = vmatprep.subr.mxu0 0.0
  %4553 = vmatpush1.msra.mxu0 0.0
  %4554 = vmatprep.subr.mxu0 0.0
  %4555 = vmatpush1.msra.mxu0 0.0
  %4556 = vmatprep.subr.mxu0 0.0
  %4557 = vmatpush1.msra.mxu0 0.0
  %4558 = vmatprep.subr.mxu0 0.0
  %4559 = vmatpush1.msra.mxu0 0.0
  %4560 = vmatprep.subr.mxu0 0.0
  %4561 = vmatpush1.msra.mxu0 0.0
  %4562 = vmatprep.subr.mxu0 0.0
  %4563 = vmatpush1.msra.mxu0 0.0
  %4564 = vmatprep.subr.mxu0 0.0
  %4565 = vmatpush1.msra.mxu0 0.0
  %4566 = vmatprep.subr.mxu0 0.0
  %4567 = vmatpush1.msra.mxu0 0.0
  %4568 = vmatprep.subr.mxu0 0.0
  %4569 = vmatpush1.msra.mxu0 0.0
  %4570 = vmatprep.subr.mxu0 0.0
  %4571 = vmatpush1.msra.mxu0 0.0
  %4572 = vmatprep.subr.mxu0 0.0
  %4573 = vmatpush1.msra.mxu0 0.0
  %4574 = vmatprep.subr.mxu0 0.0
  %4575 = vmatpush1.msra.mxu0 0.0
  %4576 = vmatprep.mubr.f32.mxu0 0.0
  %4577 = vmatmul.mubr.f32.gmra.mrb[0].mxu0 %v4510
  %v4578 = vpop.f32.mrb[0].mxu0
  %v4579 = vadd.f32 %v4507, %v4578
  %v4580 = vpop.f32.mrb[0].mxu0
  %4581 = vdwg.mxu0
  %4582 = vst [vmem:[%s59] sm:$0xff] %v4579
  // Predicated region
  $region118: #{stage4_forward.1} parent=0 // pred_check
    _
  $region119: #{stage4_forward.1} parent=0 // pred_check_branch
    %4584 = sbr.rel (0) target = $region121
  $region120: #{stage4_forward.1} parent=0 // pred_region
    _
  $region121: #{stage4_forward.1} parent=0 // pred_fallthru
    _
  // Predicated region
  $region122: #{stage4_forward.1} parent=0 // pred_check
    _
  $region123: #{stage4_forward.1} parent=0 // pred_check_branch
    %4586 = sbr.rel (0) target = $region125
  $region124: #{stage4_forward.1} parent=0 // pred_region
    _
  $region125: #{stage4_forward.1} parent=0 // pred_fallthru
    _

</llo_original>
